<compile_context>
chip_gen: v7x
topology: tpu7x:2x2x1
jax: 0.10.0
libtpu: 0.0.40
codegen_flags: <defaults>
</compile_context>

<pallas_src>
import functools

import jax
import jax.numpy as jnp
import numpy as np
from jax import lax
from jax.experimental import pallas as pl
from jax.experimental.pallas import tpu as pltpu


# ----------------------------- Pallas kernel --------------------------------
def _ltc_block_kernel(x_ref, wt_ref, par_ref, o_ref, conv_ref, *, row_shift):
    """Ts reverse-time LTC steps on one (F, TN) state block.

    x_ref   : (Ts, 2, TN) bf16  raw 2-ch input; each image zero-padded to
                                (H+2, W+2), flattened, lane-padded to a
                                multiple of 128, images contiguous on lanes.
    wt_ref  : (9*F, 4)    bf16  BN-scaled conv weights; row = tap*F + feature
                                (tap = dy*3+dx), col = channel of
                                [relu(x0), relu(x1), min(x0,0), min(x1,0)].
    par_ref : (F, 4)      f32   [cm, leak', den0', E_revin] with
                                leak' = cm/tau_m*vleak + bn_bias*E_revin
                                den0' = cm + cm/tau_m + bn_bias + 1e-8
    o_ref   : (F, TN)     f32   recurrent state v (same block for every time
                                block -> resident accumulator in VMEM).
    conv_ref: (Ts, F, TN) f32   VMEM scratch with the per-step conv outputs.
    row_shift: static lane stride of one padded image row (= W + 2).
    """
    j = pl.program_id(1)

    @pl.when(j == 0)
    def _():
        o_ref[...] = jnp.zeros_like(o_ref)

    F, TN = o_ref.shape
    Ts = x_ref.shape[0]
    wt = wt_ref[...]

    # Lane offset of each 3x3 tap's source pixel.  Rolls are circular within
    # the tile, which is safe because every padded image lies inside one tile
    # and out-of-image taps read partials computed from physical zeros.
    shifts = [(-((dy - 1) * row_shift + (dx - 1))) % TN
              for dy in range(3) for dx in range(3)]

    # -- phase A: conv outputs for all Ts steps (MXU/XLU only, independent of
    #    the recurrence, so the scheduler can pipeline it freely). -----------
    def conv_step(s, carry):
        xt = x_ref[s]                                              # (2, TN) bf16
        x4 = jnp.concatenate([jnp.maximum(xt, 0), jnp.minimum(xt, 0)], axis=0)
        # one fused matmul per step: partials for all 9 taps x F features
        y = jnp.dot(wt, x4, preferred_element_type=jnp.float32)    # (9F, TN) f32
        acc = pltpu.roll(y[0:F], shifts[0], 1)
        for k in range(1, 9):
            acc = acc + pltpu.roll(y[k * F:(k + 1) * F], shifts[k], 1)
        conv_ref[s] = acc
        return carry

    lax.fori_loop(0, Ts, conv_step, 0, unroll=True)

    # -- phase B: the LTC recurrence (pure VPU/EUP critical path). -----------
    # Constants stay (F, 1); the lane broadcast happens inside the arithmetic.
    cm = par_ref[:, 0:1]
    leak = par_ref[:, 1:2]
    den0 = par_ref[:, 2:3]
    erev = par_ref[:, 3:4]

    def step(s, v):
        conv = conv_ref[Ts - 1 - s]                                # (F, TN) f32
        num = cm * v + (leak + conv * erev)
        den = den0 + conv                                          # eps folded in
        inv = pl.reciprocal(den, approx=True)
        inv = inv * (2.0 - den * inv)          # one Newton step -> ~f32 accuracy
        return 0.5 * jnp.tanh(0.5 * (num * inv)) + 0.5             # sigmoid (1 EUP)

    o_ref[...] = lax.fori_loop(0, Ts, step, o_ref[...], unroll=True)


# ------------------------------ tiling helpers -------------------------------
def _pick_lane_tile(np_lanes, p_img, cap=4096):
    """TN must be a multiple of the per-image lane count (rolled taps must stay
    inside one tile).  Take the largest such tile up to `cap`; prefer an even
    number of >=2048-lane tiles so v7x's two TensorCores both get work."""
    b = np_lanes // p_img
    fitting = [m for m in range(1, b + 1) if b % m == 0 and m * p_img <= cap]
    if not fitting:
        fitting = [1]                       # huge images: one image per tile
    best = max(fitting)
    even = [m for m in fitting if (b // m) % 2 == 0 and m * p_img >= 2048]
    if even:
        best = max(even)
    return best * p_img


def _pick_time_block(s, tn, f, cap=16, vmem_budget=24 << 20):
    # per local timestep: f32 conv scratch + double-buffered bf16 raw input
    per_step = tn * (4 * f + 8)
    cap = max(1, min(cap, vmem_budget // max(per_step, 1)))
    for t in range(min(s, cap), 0, -1):
        if s % t == 0:
            return t
    return 1


# ------------------------------ JAX wrapper ----------------------------------
def continuous_fully_connected_forward(events_fifo, params):
    """events_fifo: (B, 2, S, H, W) float32 -> (B, F, H, W) float32."""
    events_fifo = events_fifo.astype(jnp.float32)
    B, _, S, H, W = events_fifo.shape
    F = params["conv_w"].shape[0]
    Hp, Wp = H + 2, W + 2                       # conv zero-padding made physical
    p_img = Hp * Wp
    P = -(-p_img // 128) * 128                  # lanes per image (128-aligned)
    NP = B * P

    # ---- raw (no im2col) 2-channel stream, bf16, image-contiguous lanes -----
    x = jnp.transpose(events_fifo, (2, 1, 0, 3, 4))        # (S, 2, B, H, W)
    x = jnp.pad(x, ((0, 0), (0, 0), (0, 0), (1, 1), (1, 1)))
    x = x.reshape(S, 2, B, p_img)
    x = jnp.pad(x, ((0, 0), (0, 0), (0, 0), (0, P - p_img)))
    x = x.reshape(S, 2, NP).astype(jnp.bfloat16)

    # ---- fold BatchNorm (inference) into conv weights / LTC constants -------
    bn_scale = params["bn_gamma"] * lax.rsqrt(params["bn_var"] + 1e-5)
    bn_bias = params["bn_beta"] - params["bn_mean"] * bn_scale
    w = params["conv_w"] * bn_scale[:, None, None, None]   # (F, 4, 3, 3)
    # tap-major fused weight matrix: row = (dy*3+dx)*F + f, col = in-channel
    wt = jnp.transpose(w, (2, 3, 0, 1)).reshape(9 * F, 4).astype(jnp.bfloat16)

    cm = params["cm"]
    cm_tau = cm / params["tau_m"]
    erev = params["E_revin"]
    leak = cm_tau * params["vleak"] + bn_bias * erev        # BN bias folded in
    den0 = cm + cm_tau + bn_bias + 1e-8                     # epsilon folded in
    par = jnp.stack([cm, leak, den0, erev], axis=1).astype(jnp.float32)  # (F, 4)

    # ---- tiling / grid -------------------------------------------------------
    TN = _pick_lane_tile(NP, P)
    Ts = _pick_time_block(S, TN, F)
    n_tiles, t_blocks = NP // TN, S // Ts

    kernel = functools.partial(_ltc_block_kernel, row_shift=Wp)
    out_fn = pl.pallas_call(
        kernel,
        out_shape=jax.ShapeDtypeStruct((F, NP), jnp.float32),
        grid=(n_tiles, t_blocks),
        in_specs=[
            # time reversal in the index_map: grid step j=0 -> last time block
            pl.BlockSpec((Ts, 2, TN), lambda n, j: (t_blocks - 1 - j, 0, n)),
            pl.BlockSpec((9 * F, 4), lambda n, j: (0, 0)),
            pl.BlockSpec((F, 4), lambda n, j: (0, 0)),
        ],
        out_specs=pl.BlockSpec((F, TN), lambda n, j: (0, n)),
        scratch_shapes=[pltpu.VMEM((Ts, F, TN), jnp.float32)],
        compiler_params=pltpu.CompilerParams(
            # N tiles are independent (shardable across v7x's 2 TensorCores);
            # the time axis carries the recurrence -> sequential.
            dimension_semantics=("parallel", "arbitrary"),
            vmem_limit_bytes=64 * 1024 * 1024),
    )(x, wt, par)

    # (F, NP) -> drop lane padding + conv halo -> NCHW (B, F, H, W)
    out = out_fn.reshape(F, B, P)[:, :, :p_img].reshape(F, B, Hp, Wp)
    return jnp.transpose(out[:, :, 1:H + 1, 1:W + 1], (1, 0, 2, 3))


# --------------------------- pure-JAX reference ------------------------------
def reference_forward(events_fifo, params):
    """Mirrors ConvLTC (tau_input=True, usetaum=True, stream_opt=False) with the
    same precision policy as the kernel: bf16 conv inputs/weights (BN scale
    folded), f32 accumulation and f32 LTC/sigmoid math."""
    B, _, S, H, W = events_fifo.shape
    neg_plane = jnp.where(events_fifo < 0, 0.0, events_fifo)
    pos_plane = jnp.where(events_fifo > 0, 0.0, events_fifo)
    x = jnp.concatenate([neg_plane, pos_plane], axis=1)       # (B, 4, S, H, W)
    F = params["conv_w"].shape[0]

    bn_scale = params["bn_gamma"] / jnp.sqrt(params["bn_var"] + 1e-5)
    bn_bias = (params["bn_beta"] - params["bn_mean"] * bn_scale)[None, :, None, None]
    w = (params["conv_w"] * bn_scale[:, None, None, None]).astype(jnp.bfloat16)

    cm = params["cm"][None, :, None, None]
    cm_tau = (params["cm"] / params["tau_m"])[None, :, None, None]
    vleak = params["vleak"][None, :, None, None]
    erev = params["E_revin"][None, :, None, None]

    v = jnp.zeros((B, F, H, W), jnp.float32)
    for t in range(S - 1, -1, -1):
        xt = x[:, :, t].astype(jnp.bfloat16)                  # (B, 4, H, W)
        conv = lax.conv_general_dilated(
            xt, w, window_strides=(1, 1), padding=((1, 1), (1, 1)),
            dimension_numbers=("NCHW", "OIHW", "NCHW"),
            preferred_element_type=jnp.float32)
        wih = conv + bn_bias
        num = cm * v + cm_tau * vleak + wih * erev
        den = cm + cm_tau + wih
        v = jax.nn.sigmoid(num / (den + 1e-8))
    return v


# ------------------------------- parameters ----------------------------------
def make_params(key, c_in, num_features, taum_ini=(5.0, 10.0)):
    ks = jax.random.split(key, 9)
    fan_in, fan_out = c_in * 9, num_features * 9
    xavier_std = float(np.sqrt(2.0 / (fan_in + fan_out)))
    return {
        "conv_w": xavier_std * jax.random.normal(
            ks[0], (num_features, c_in, 3, 3), jnp.float32),
        "bn_gamma": 1.0 + 0.05 * jax.random.normal(ks[1], (num_features,), jnp.float32),
        "bn_beta": 0.05 * jax.random.normal(ks[2], (num_features,), jnp.float32),
        "bn_mean": 0.05 * jax.random.normal(ks[3], (num_features,), jnp.float32),
        "bn_var": 1.0 + 0.1 * jax.random.uniform(ks[4], (num_features,), jnp.float32),
        "cm": jax.random.uniform(ks[5], (num_features,), jnp.float32,
                                 minval=0.4, maxval=0.6),
        "vleak": jax.random.uniform(ks[6], (num_features,), jnp.float32,
                                    minval=-0.2, maxval=0.2),
        "tau_m": jax.random.uniform(ks[7], (num_features,), jnp.float32,
                                    minval=taum_ini[0], maxval=taum_ini[1]),
        "E_revin": 1.0 + 0.1 * jax.random.normal(ks[8], (num_features,), jnp.float32),
    }


# ---------------------------------- main --------------------------------------
if __name__ == "__main__":
    B, S, H, W = 2, 8, 16, 16
    NUM_FEATURES = 8          # hparams['nltc']
    C_IN = 4                  # hparams['num_plane'] (pos/neg split of 2-ch input)

    key = jax.random.PRNGKey(0)
    k_inp, k_par = jax.random.split(key)
    events_fifo = jax.random.normal(k_inp, (B, 2, S, H, W), jnp.float32)
    params = make_params(k_par, C_IN, NUM_FEATURES)

    fwd = jax.jit(functools.partial(continuous_fully_connected_forward, params=params))
    out = fwd(events_fifo)
    jax.block_until_ready(out)

    ref = reference_forward(events_fifo, params)
    np.testing.assert_allclose(np.asarray(out), np.asarray(ref),
                               rtol=2e-3, atol=2e-3)
    assert out.shape == (B, NUM_FEATURES, H, W)
    print("KERNEL_OK")
</pallas_src>

<mosaic_0001>
module attributes {stable_mosaic.version = 11 : i64} {
  func.func @_ltc_block_kernel(%arg0: i32, %arg1: i32, %arg2: memref<8x2x768xbf16, #tpu.memory_space<vmem>>, %arg3: memref<72x4xbf16, #tpu.memory_space<vmem>>, %arg4: memref<8x4xf32, #tpu.memory_space<vmem>>, %arg5: memref<8x768xf32, #tpu.memory_space<vmem>>, %arg6: memref<8x8x768xf32, #tpu.memory_space<vmem>>) attributes {dimension_semantics = [#tpu.dimension_semantics<parallel>, #tpu.dimension_semantics<arbitrary>], iteration_bounds = array<i64: 1, 1>, scalar_prefetch = 0 : i64, scratch_operands = 1 : i64, tpu.core_type = #tpu.core_type<tc>, window_params = [{transform_indices = @transform_0, window_bounds = array<i64: 8, 2, 768>}, {pipeline_mode = #tpu.pipeline_mode<synchronous>, transform_indices = @transform_1, window_bounds = array<i64: 72, 4>}, {pipeline_mode = #tpu.pipeline_mode<synchronous>, transform_indices = @transform_2, window_bounds = array<i64: 8, 4>}, {transform_indices = @transform_3, window_bounds = array<i64: 8, 768>}]} {
    %c0_i32 = arith.constant 0 : i32
    %0 = arith.cmpi eq, %arg1, %c0_i32 : i32
    %1 = arith.extui %0 : i1 to i32
    %c0_i32_0 = arith.constant 0 : i32
    %2 = arith.cmpi ne, %1, %c0_i32_0 : i32
    scf.if %2 {
      %cst_197 = arith.constant 0.000000e+00 : f32
      %530 = vector.broadcast %cst_197 : f32 to vector<8x768xf32>
      %c0_198 = arith.constant 0 : index
      %c0_199 = arith.constant 0 : index
      %531 = vector.load %arg5[%c0_198, %c0_199] : memref<8x768xf32, #tpu.memory_space<vmem>>, vector<8x768xf32>
      tpu.vector_store %arg5[%c0_198, %c0_199], %530 {strides = array<i32>} : memref<8x768xf32, #tpu.memory_space<vmem>>, vector<8x768xf32>,
    } else {
    }
    %c0 = arith.constant 0 : index
    %c0_1 = arith.constant 0 : index
    %3 = vector.load %arg3[%c0, %c0_1] : memref<72x4xbf16, #tpu.memory_space<vmem>>, vector<72x4xbf16>
    %c0_i32_2 = arith.constant 0 : i32
    %4 = arith.index_cast %c0_i32_2 : i32 to index
    %c0_3 = arith.constant 0 : index
    %c0_4 = arith.constant 0 : index
    %5 = vector.load %arg2[%4, %c0_3, %c0_4] : memref<8x2x768xbf16, #tpu.memory_space<vmem>>, vector<1x2x768xbf16>
    %6 = vector.shape_cast %5 : vector<1x2x768xbf16> to vector<2x768xbf16>
    %cst = arith.constant 0.000000e+00 : bf16
    %7 = vector.broadcast %cst : bf16 to vector<2x768xbf16>
    %8 = arith.maximumf %6, %7 : vector<2x768xbf16>
    %cst_5 = arith.constant 0.000000e+00 : bf16
    %9 = vector.broadcast %cst_5 : bf16 to vector<2x768xbf16>
    %10 = arith.minimumf %6, %9 : vector<2x768xbf16>
    %11 = tpu.concatenate %8, %10 in 0 : vector<2x768xbf16>, vector<2x768xbf16> -> vector<4x768xbf16>
    %cst_6 = arith.constant dense<0.000000e+00> : vector<72x768xf32>
    %12 = tpu.matmul %3, %11, %cst_6 {dimension_numbers = #tpu.dot_dimension_numbers<[1], [0], [0], [1], [0, 0, 1, 1], [], []>} : vector<72x4xbf16>, vector<4x768xbf16>, vector<72x768xf32> -> vector<72x768xf32>
    %13 = vector.extract_strided_slice %12 {offsets = [0, 0], sizes = [8, 768], strides = [1, 1]} : vector<72x768xf32> to vector<8x768xf32>
    %c19_i32 = arith.constant 19 : i32
    %14 = tpu.dynamic_rotate %13 by %c19_i32 dim 1 : vector<8x768xf32>, i32 -> vector<8x768xf32>
    %15 = vector.extract_strided_slice %12 {offsets = [8, 0], sizes = [8, 768], strides = [1, 1]} : vector<72x768xf32> to vector<8x768xf32>
    %c18_i32 = arith.constant 18 : i32
    %16 = tpu.dynamic_rotate %15 by %c18_i32 dim 1 : vector<8x768xf32>, i32 -> vector<8x768xf32>
    %17 = arith.addf %14, %16 : vector<8x768xf32>
    %18 = vector.extract_strided_slice %12 {offsets = [16, 0], sizes = [8, 768], strides = [1, 1]} : vector<72x768xf32> to vector<8x768xf32>
    %c17_i32 = arith.constant 17 : i32
    %19 = tpu.dynamic_rotate %18 by %c17_i32 dim 1 : vector<8x768xf32>, i32 -> vector<8x768xf32>
    %20 = arith.addf %17, %19 : vector<8x768xf32>
    %21 = vector.extract_strided_slice %12 {offsets = [24, 0], sizes = [8, 768], strides = [1, 1]} : vector<72x768xf32> to vector<8x768xf32>
    %c1_i32 = arith.constant 1 : i32
    %22 = tpu.dynamic_rotate %21 by %c1_i32 dim 1 : vector<8x768xf32>, i32 -> vector<8x768xf32>
    %23 = arith.addf %20, %22 : vector<8x768xf32>
    %24 = vector.extract_strided_slice %12 {offsets = [32, 0], sizes = [8, 768], strides = [1, 1]} : vector<72x768xf32> to vector<8x768xf32>
    %c0_i32_7 = arith.constant 0 : i32
    %25 = tpu.dynamic_rotate %24 by %c0_i32_7 dim 1 : vector<8x768xf32>, i32 -> vector<8x768xf32>
    %26 = arith.addf %23, %25 : vector<8x768xf32>
    %27 = vector.extract_strided_slice %12 {offsets = [40, 0], sizes = [8, 768], strides = [1, 1]} : vector<72x768xf32> to vector<8x768xf32>
    %c767_i32 = arith.constant 767 : i32
    %28 = tpu.dynamic_rotate %27 by %c767_i32 dim 1 : vector<8x768xf32>, i32 -> vector<8x768xf32>
    %29 = arith.addf %26, %28 : vector<8x768xf32>
    %30 = vector.extract_strided_slice %12 {offsets = [48, 0], sizes = [8, 768], strides = [1, 1]} : vector<72x768xf32> to vector<8x768xf32>
    %c751_i32 = arith.constant 751 : i32
    %31 = tpu.dynamic_rotate %30 by %c751_i32 dim 1 : vector<8x768xf32>, i32 -> vector<8x768xf32>
    %32 = arith.addf %29, %31 : vector<8x768xf32>
    %33 = vector.extract_strided_slice %12 {offsets = [56, 0], sizes = [8, 768], strides = [1, 1]} : vector<72x768xf32> to vector<8x768xf32>
    %c750_i32 = arith.constant 750 : i32
    %34 = tpu.dynamic_rotate %33 by %c750_i32 dim 1 : vector<8x768xf32>, i32 -> vector<8x768xf32>
    %35 = arith.addf %32, %34 : vector<8x768xf32>
    %36 = vector.extract_strided_slice %12 {offsets = [64, 0], sizes = [8, 768], strides = [1, 1]} : vector<72x768xf32> to vector<8x768xf32>
    %c749_i32 = arith.constant 749 : i32
    %37 = tpu.dynamic_rotate %36 by %c749_i32 dim 1 : vector<8x768xf32>, i32 -> vector<8x768xf32>
    %38 = arith.addf %35, %37 : vector<8x768xf32>
    %39 = arith.index_cast %c0_i32_2 : i32 to index
    %c0_8 = arith.constant 0 : index
    %c0_9 = arith.constant 0 : index
    %40 = vector.load %arg6[%39, %c0_8, %c0_9] : memref<8x8x768xf32, #tpu.memory_space<vmem>>, vector<1x8x768xf32>
    %41 = vector.shape_cast %40 : vector<1x8x768xf32> to vector<8x768xf32>
    %42 = vector.shape_cast %38 : vector<8x768xf32> to vector<1x8x768xf32>
    tpu.vector_store %arg6[%39, %c0_8, %c0_9], %42 {strides = array<i32>} : memref<8x8x768xf32, #tpu.memory_space<vmem>>, vector<1x8x768xf32>,
    %c1_i32_10 = arith.constant 1 : i32
    %43 = arith.index_cast %c1_i32_10 : i32 to index
    %c0_11 = arith.constant 0 : index
    %c0_12 = arith.constant 0 : index
    %44 = vector.load %arg2[%43, %c0_11, %c0_12] : memref<8x2x768xbf16, #tpu.memory_space<vmem>>, vector<1x2x768xbf16>
    %45 = vector.shape_cast %44 : vector<1x2x768xbf16> to vector<2x768xbf16>
    %cst_13 = arith.constant 0.000000e+00 : bf16
    %46 = vector.broadcast %cst_13 : bf16 to vector<2x768xbf16>
    %47 = arith.maximumf %45, %46 : vector<2x768xbf16>
    %cst_14 = arith.constant 0.000000e+00 : bf16
    %48 = vector.broadcast %cst_14 : bf16 to vector<2x768xbf16>
    %49 = arith.minimumf %45, %48 : vector<2x768xbf16>
    %50 = tpu.concatenate %47, %49 in 0 : vector<2x768xbf16>, vector<2x768xbf16> -> vector<4x768xbf16>
    %cst_15 = arith.constant dense<0.000000e+00> : vector<72x768xf32>
    %51 = tpu.matmul %3, %50, %cst_15 {dimension_numbers = #tpu.dot_dimension_numbers<[1], [0], [0], [1], [0, 0, 1, 1], [], []>} : vector<72x4xbf16>, vector<4x768xbf16>, vector<72x768xf32> -> vector<72x768xf32>
    %52 = vector.extract_strided_slice %51 {offsets = [0, 0], sizes = [8, 768], strides = [1, 1]} : vector<72x768xf32> to vector<8x768xf32>
    %c19_i32_16 = arith.constant 19 : i32
    %53 = tpu.dynamic_rotate %52 by %c19_i32_16 dim 1 : vector<8x768xf32>, i32 -> vector<8x768xf32>
    %54 = vector.extract_strided_slice %51 {offsets = [8, 0], sizes = [8, 768], strides = [1, 1]} : vector<72x768xf32> to vector<8x768xf32>
    %c18_i32_17 = arith.constant 18 : i32
    %55 = tpu.dynamic_rotate %54 by %c18_i32_17 dim 1 : vector<8x768xf32>, i32 -> vector<8x768xf32>
    %56 = arith.addf %53, %55 : vector<8x768xf32>
    %57 = vector.extract_strided_slice %51 {offsets = [16, 0], sizes = [8, 768], strides = [1, 1]} : vector<72x768xf32> to vector<8x768xf32>
    %c17_i32_18 = arith.constant 17 : i32
    %58 = tpu.dynamic_rotate %57 by %c17_i32_18 dim 1 : vector<8x768xf32>, i32 -> vector<8x768xf32>
    %59 = arith.addf %56, %58 : vector<8x768xf32>
    %60 = vector.extract_strided_slice %51 {offsets = [24, 0], sizes = [8, 768], strides = [1, 1]} : vector<72x768xf32> to vector<8x768xf32>
    %c1_i32_19 = arith.constant 1 : i32
    %61 = tpu.dynamic_rotate %60 by %c1_i32_19 dim 1 : vector<8x768xf32>, i32 -> vector<8x768xf32>
    %62 = arith.addf %59, %61 : vector<8x768xf32>
    %63 = vector.extract_strided_slice %51 {offsets = [32, 0], sizes = [8, 768], strides = [1, 1]} : vector<72x768xf32> to vector<8x768xf32>
    %c0_i32_20 = arith.constant 0 : i32
    %64 = tpu.dynamic_rotate %63 by %c0_i32_20 dim 1 : vector<8x768xf32>, i32 -> vector<8x768xf32>
    %65 = arith.addf %62, %64 : vector<8x768xf32>
    %66 = vector.extract_strided_slice %51 {offsets = [40, 0], sizes = [8, 768], strides = [1, 1]} : vector<72x768xf32> to vector<8x768xf32>
    %c767_i32_21 = arith.constant 767 : i32
    %67 = tpu.dynamic_rotate %66 by %c767_i32_21 dim 1 : vector<8x768xf32>, i32 -> vector<8x768xf32>
    %68 = arith.addf %65, %67 : vector<8x768xf32>
    %69 = vector.extract_strided_slice %51 {offsets = [48, 0], sizes = [8, 768], strides = [1, 1]} : vector<72x768xf32> to vector<8x768xf32>
    %c751_i32_22 = arith.constant 751 : i32
    %70 = tpu.dynamic_rotate %69 by %c751_i32_22 dim 1 : vector<8x768xf32>, i32 -> vector<8x768xf32>
    %71 = arith.addf %68, %70 : vector<8x768xf32>
    %72 = vector.extract_strided_slice %51 {offsets = [56, 0], sizes = [8, 768], strides = [1, 1]} : vector<72x768xf32> to vector<8x768xf32>
    %c750_i32_23 = arith.constant 750 : i32
    %73 = tpu.dynamic_rotate %72 by %c750_i32_23 dim 1 : vector<8x768xf32>, i32 -> vector<8x768xf32>
    %74 = arith.addf %71, %73 : vector<8x768xf32>
    %75 = vector.extract_strided_slice %51 {offsets = [64, 0], sizes = [8, 768], strides = [1, 1]} : vector<72x768xf32> to vector<8x768xf32>
    %c749_i32_24 = arith.constant 749 : i32
    %76 = tpu.dynamic_rotate %75 by %c749_i32_24 dim 1 : vector<8x768xf32>, i32 -> vector<8x768xf32>
    %77 = arith.addf %74, %76 : vector<8x768xf32>
    %78 = arith.index_cast %c1_i32_10 : i32 to index
    %c0_25 = arith.constant 0 : index
    %c0_26 = arith.constant 0 : index
    %79 = vector.load %arg6[%78, %c0_25, %c0_26] : memref<8x8x768xf32, #tpu.memory_space<vmem>>, vector<1x8x768xf32>
    %80 = vector.shape_cast %79 : vector<1x8x768xf32> to vector<8x768xf32>
    %81 = vector.shape_cast %77 : vector<8x768xf32> to vector<1x8x768xf32>
    tpu.vector_store %arg6[%78, %c0_25, %c0_26], %81 {strides = array<i32>} : memref<8x8x768xf32, #tpu.memory_space<vmem>>, vector<1x8x768xf32>,
    %c2_i32 = arith.constant 2 : i32
    %82 = arith.index_cast %c2_i32 : i32 to index
    %c0_27 = arith.constant 0 : index
    %c0_28 = arith.constant 0 : index
    %83 = vector.load %arg2[%82, %c0_27, %c0_28] : memref<8x2x768xbf16, #tpu.memory_space<vmem>>, vector<1x2x768xbf16>
    %84 = vector.shape_cast %83 : vector<1x2x768xbf16> to vector<2x768xbf16>
    %cst_29 = arith.constant 0.000000e+00 : bf16
    %85 = vector.broadcast %cst_29 : bf16 to vector<2x768xbf16>
    %86 = arith.maximumf %84, %85 : vector<2x768xbf16>
    %cst_30 = arith.constant 0.000000e+00 : bf16
    %87 = vector.broadcast %cst_30 : bf16 to vector<2x768xbf16>
    %88 = arith.minimumf %84, %87 : vector<2x768xbf16>
    %89 = tpu.concatenate %86, %88 in 0 : vector<2x768xbf16>, vector<2x768xbf16> -> vector<4x768xbf16>
    %cst_31 = arith.constant dense<0.000000e+00> : vector<72x768xf32>
    %90 = tpu.matmul %3, %89, %cst_31 {dimension_numbers = #tpu.dot_dimension_numbers<[1], [0], [0], [1], [0, 0, 1, 1], [], []>} : vector<72x4xbf16>, vector<4x768xbf16>, vector<72x768xf32> -> vector<72x768xf32>
    %91 = vector.extract_strided_slice %90 {offsets = [0, 0], sizes = [8, 768], strides = [1, 1]} : vector<72x768xf32> to vector<8x768xf32>
    %c19_i32_32 = arith.constant 19 : i32
    %92 = tpu.dynamic_rotate %91 by %c19_i32_32 dim 1 : vector<8x768xf32>, i32 -> vector<8x768xf32>
    %93 = vector.extract_strided_slice %90 {offsets = [8, 0], sizes = [8, 768], strides = [1, 1]} : vector<72x768xf32> to vector<8x768xf32>
    %c18_i32_33 = arith.constant 18 : i32
    %94 = tpu.dynamic_rotate %93 by %c18_i32_33 dim 1 : vector<8x768xf32>, i32 -> vector<8x768xf32>
    %95 = arith.addf %92, %94 : vector<8x768xf32>
    %96 = vector.extract_strided_slice %90 {offsets = [16, 0], sizes = [8, 768], strides = [1, 1]} : vector<72x768xf32> to vector<8x768xf32>
    %c17_i32_34 = arith.constant 17 : i32
    %97 = tpu.dynamic_rotate %96 by %c17_i32_34 dim 1 : vector<8x768xf32>, i32 -> vector<8x768xf32>
    %98 = arith.addf %95, %97 : vector<8x768xf32>
    %99 = vector.extract_strided_slice %90 {offsets = [24, 0], sizes = [8, 768], strides = [1, 1]} : vector<72x768xf32> to vector<8x768xf32>
    %c1_i32_35 = arith.constant 1 : i32
    %100 = tpu.dynamic_rotate %99 by %c1_i32_35 dim 1 : vector<8x768xf32>, i32 -> vector<8x768xf32>
    %101 = arith.addf %98, %100 : vector<8x768xf32>
    %102 = vector.extract_strided_slice %90 {offsets = [32, 0], sizes = [8, 768], strides = [1, 1]} : vector<72x768xf32> to vector<8x768xf32>
    %c0_i32_36 = arith.constant 0 : i32
    %103 = tpu.dynamic_rotate %102 by %c0_i32_36 dim 1 : vector<8x768xf32>, i32 -> vector<8x768xf32>
    %104 = arith.addf %101, %103 : vector<8x768xf32>
    %105 = vector.extract_strided_slice %90 {offsets = [40, 0], sizes = [8, 768], strides = [1, 1]} : vector<72x768xf32> to vector<8x768xf32>
    %c767_i32_37 = arith.constant 767 : i32
    %106 = tpu.dynamic_rotate %105 by %c767_i32_37 dim 1 : vector<8x768xf32>, i32 -> vector<8x768xf32>
    %107 = arith.addf %104, %106 : vector<8x768xf32>
    %108 = vector.extract_strided_slice %90 {offsets = [48, 0], sizes = [8, 768], strides = [1, 1]} : vector<72x768xf32> to vector<8x768xf32>
    %c751_i32_38 = arith.constant 751 : i32
    %109 = tpu.dynamic_rotate %108 by %c751_i32_38 dim 1 : vector<8x768xf32>, i32 -> vector<8x768xf32>
    %110 = arith.addf %107, %109 : vector<8x768xf32>
    %111 = vector.extract_strided_slice %90 {offsets = [56, 0], sizes = [8, 768], strides = [1, 1]} : vector<72x768xf32> to vector<8x768xf32>
    %c750_i32_39 = arith.constant 750 : i32
    %112 = tpu.dynamic_rotate %111 by %c750_i32_39 dim 1 : vector<8x768xf32>, i32 -> vector<8x768xf32>
    %113 = arith.addf %110, %112 : vector<8x768xf32>
    %114 = vector.extract_strided_slice %90 {offsets = [64, 0], sizes = [8, 768], strides = [1, 1]} : vector<72x768xf32> to vector<8x768xf32>
    %c749_i32_40 = arith.constant 749 : i32
    %115 = tpu.dynamic_rotate %114 by %c749_i32_40 dim 1 : vector<8x768xf32>, i32 -> vector<8x768xf32>
    %116 = arith.addf %113, %115 : vector<8x768xf32>
    %117 = arith.index_cast %c2_i32 : i32 to index
    %c0_41 = arith.constant 0 : index
    %c0_42 = arith.constant 0 : index
    %118 = vector.load %arg6[%117, %c0_41, %c0_42] : memref<8x8x768xf32, #tpu.memory_space<vmem>>, vector<1x8x768xf32>
    %119 = vector.shape_cast %118 : vector<1x8x768xf32> to vector<8x768xf32>
    %120 = vector.shape_cast %116 : vector<8x768xf32> to vector<1x8x768xf32>
    tpu.vector_store %arg6[%117, %c0_41, %c0_42], %120 {strides = array<i32>} : memref<8x8x768xf32, #tpu.memory_space<vmem>>, vector<1x8x768xf32>,
    %c3_i32 = arith.constant 3 : i32
    %121 = arith.index_cast %c3_i32 : i32 to index
    %c0_43 = arith.constant 0 : index
    %c0_44 = arith.constant 0 : index
    %122 = vector.load %arg2[%121, %c0_43, %c0_44] : memref<8x2x768xbf16, #tpu.memory_space<vmem>>, vector<1x2x768xbf16>
    %123 = vector.shape_cast %122 : vector<1x2x768xbf16> to vector<2x768xbf16>
    %cst_45 = arith.constant 0.000000e+00 : bf16
    %124 = vector.broadcast %cst_45 : bf16 to vector<2x768xbf16>
    %125 = arith.maximumf %123, %124 : vector<2x768xbf16>
    %cst_46 = arith.constant 0.000000e+00 : bf16
    %126 = vector.broadcast %cst_46 : bf16 to vector<2x768xbf16>
    %127 = arith.minimumf %123, %126 : vector<2x768xbf16>
    %128 = tpu.concatenate %125, %127 in 0 : vector<2x768xbf16>, vector<2x768xbf16> -> vector<4x768xbf16>
    %cst_47 = arith.constant dense<0.000000e+00> : vector<72x768xf32>
    %129 = tpu.matmul %3, %128, %cst_47 {dimension_numbers = #tpu.dot_dimension_numbers<[1], [0], [0], [1], [0, 0, 1, 1], [], []>} : vector<72x4xbf16>, vector<4x768xbf16>, vector<72x768xf32> -> vector<72x768xf32>
    %130 = vector.extract_strided_slice %129 {offsets = [0, 0], sizes = [8, 768], strides = [1, 1]} : vector<72x768xf32> to vector<8x768xf32>
    %c19_i32_48 = arith.constant 19 : i32
    %131 = tpu.dynamic_rotate %130 by %c19_i32_48 dim 1 : vector<8x768xf32>, i32 -> vector<8x768xf32>
    %132 = vector.extract_strided_slice %129 {offsets = [8, 0], sizes = [8, 768], strides = [1, 1]} : vector<72x768xf32> to vector<8x768xf32>
    %c18_i32_49 = arith.constant 18 : i32
    %133 = tpu.dynamic_rotate %132 by %c18_i32_49 dim 1 : vector<8x768xf32>, i32 -> vector<8x768xf32>
    %134 = arith.addf %131, %133 : vector<8x768xf32>
    %135 = vector.extract_strided_slice %129 {offsets = [16, 0], sizes = [8, 768], strides = [1, 1]} : vector<72x768xf32> to vector<8x768xf32>
    %c17_i32_50 = arith.constant 17 : i32
    %136 = tpu.dynamic_rotate %135 by %c17_i32_50 dim 1 : vector<8x768xf32>, i32 -> vector<8x768xf32>
    %137 = arith.addf %134, %136 : vector<8x768xf32>
    %138 = vector.extract_strided_slice %129 {offsets = [24, 0], sizes = [8, 768], strides = [1, 1]} : vector<72x768xf32> to vector<8x768xf32>
    %c1_i32_51 = arith.constant 1 : i32
    %139 = tpu.dynamic_rotate %138 by %c1_i32_51 dim 1 : vector<8x768xf32>, i32 -> vector<8x768xf32>
    %140 = arith.addf %137, %139 : vector<8x768xf32>
    %141 = vector.extract_strided_slice %129 {offsets = [32, 0], sizes = [8, 768], strides = [1, 1]} : vector<72x768xf32> to vector<8x768xf32>
    %c0_i32_52 = arith.constant 0 : i32
    %142 = tpu.dynamic_rotate %141 by %c0_i32_52 dim 1 : vector<8x768xf32>, i32 -> vector<8x768xf32>
    %143 = arith.addf %140, %142 : vector<8x768xf32>
    %144 = vector.extract_strided_slice %129 {offsets = [40, 0], sizes = [8, 768], strides = [1, 1]} : vector<72x768xf32> to vector<8x768xf32>
    %c767_i32_53 = arith.constant 767 : i32
    %145 = tpu.dynamic_rotate %144 by %c767_i32_53 dim 1 : vector<8x768xf32>, i32 -> vector<8x768xf32>
    %146 = arith.addf %143, %145 : vector<8x768xf32>
    %147 = vector.extract_strided_slice %129 {offsets = [48, 0], sizes = [8, 768], strides = [1, 1]} : vector<72x768xf32> to vector<8x768xf32>
    %c751_i32_54 = arith.constant 751 : i32
    %148 = tpu.dynamic_rotate %147 by %c751_i32_54 dim 1 : vector<8x768xf32>, i32 -> vector<8x768xf32>
    %149 = arith.addf %146, %148 : vector<8x768xf32>
    %150 = vector.extract_strided_slice %129 {offsets = [56, 0], sizes = [8, 768], strides = [1, 1]} : vector<72x768xf32> to vector<8x768xf32>
    %c750_i32_55 = arith.constant 750 : i32
    %151 = tpu.dynamic_rotate %150 by %c750_i32_55 dim 1 : vector<8x768xf32>, i32 -> vector<8x768xf32>
    %152 = arith.addf %149, %151 : vector<8x768xf32>
    %153 = vector.extract_strided_slice %129 {offsets = [64, 0], sizes = [8, 768], strides = [1, 1]} : vector<72x768xf32> to vector<8x768xf32>
    %c749_i32_56 = arith.constant 749 : i32
    %154 = tpu.dynamic_rotate %153 by %c749_i32_56 dim 1 : vector<8x768xf32>, i32 -> vector<8x768xf32>
    %155 = arith.addf %152, %154 : vector<8x768xf32>
    %156 = arith.index_cast %c3_i32 : i32 to index
    %c0_57 = arith.constant 0 : index
    %c0_58 = arith.constant 0 : index
    %157 = vector.load %arg6[%156, %c0_57, %c0_58] : memref<8x8x768xf32, #tpu.memory_space<vmem>>, vector<1x8x768xf32>
    %158 = vector.shape_cast %157 : vector<1x8x768xf32> to vector<8x768xf32>
    %159 = vector.shape_cast %155 : vector<8x768xf32> to vector<1x8x768xf32>
    tpu.vector_store %arg6[%156, %c0_57, %c0_58], %159 {strides = array<i32>} : memref<8x8x768xf32, #tpu.memory_space<vmem>>, vector<1x8x768xf32>,
    %c4_i32 = arith.constant 4 : i32
    %160 = arith.index_cast %c4_i32 : i32 to index
    %c0_59 = arith.constant 0 : index
    %c0_60 = arith.constant 0 : index
    %161 = vector.load %arg2[%160, %c0_59, %c0_60] : memref<8x2x768xbf16, #tpu.memory_space<vmem>>, vector<1x2x768xbf16>
    %162 = vector.shape_cast %161 : vector<1x2x768xbf16> to vector<2x768xbf16>
    %cst_61 = arith.constant 0.000000e+00 : bf16
    %163 = vector.broadcast %cst_61 : bf16 to vector<2x768xbf16>
    %164 = arith.maximumf %162, %163 : vector<2x768xbf16>
    %cst_62 = arith.constant 0.000000e+00 : bf16
    %165 = vector.broadcast %cst_62 : bf16 to vector<2x768xbf16>
    %166 = arith.minimumf %162, %165 : vector<2x768xbf16>
    %167 = tpu.concatenate %164, %166 in 0 : vector<2x768xbf16>, vector<2x768xbf16> -> vector<4x768xbf16>
    %cst_63 = arith.constant dense<0.000000e+00> : vector<72x768xf32>
    %168 = tpu.matmul %3, %167, %cst_63 {dimension_numbers = #tpu.dot_dimension_numbers<[1], [0], [0], [1], [0, 0, 1, 1], [], []>} : vector<72x4xbf16>, vector<4x768xbf16>, vector<72x768xf32> -> vector<72x768xf32>
    %169 = vector.extract_strided_slice %168 {offsets = [0, 0], sizes = [8, 768], strides = [1, 1]} : vector<72x768xf32> to vector<8x768xf32>
    %c19_i32_64 = arith.constant 19 : i32
    %170 = tpu.dynamic_rotate %169 by %c19_i32_64 dim 1 : vector<8x768xf32>, i32 -> vector<8x768xf32>
    %171 = vector.extract_strided_slice %168 {offsets = [8, 0], sizes = [8, 768], strides = [1, 1]} : vector<72x768xf32> to vector<8x768xf32>
    %c18_i32_65 = arith.constant 18 : i32
    %172 = tpu.dynamic_rotate %171 by %c18_i32_65 dim 1 : vector<8x768xf32>, i32 -> vector<8x768xf32>
    %173 = arith.addf %170, %172 : vector<8x768xf32>
    %174 = vector.extract_strided_slice %168 {offsets = [16, 0], sizes = [8, 768], strides = [1, 1]} : vector<72x768xf32> to vector<8x768xf32>
    %c17_i32_66 = arith.constant 17 : i32
    %175 = tpu.dynamic_rotate %174 by %c17_i32_66 dim 1 : vector<8x768xf32>, i32 -> vector<8x768xf32>
    %176 = arith.addf %173, %175 : vector<8x768xf32>
    %177 = vector.extract_strided_slice %168 {offsets = [24, 0], sizes = [8, 768], strides = [1, 1]} : vector<72x768xf32> to vector<8x768xf32>
    %c1_i32_67 = arith.constant 1 : i32
    %178 = tpu.dynamic_rotate %177 by %c1_i32_67 dim 1 : vector<8x768xf32>, i32 -> vector<8x768xf32>
    %179 = arith.addf %176, %178 : vector<8x768xf32>
    %180 = vector.extract_strided_slice %168 {offsets = [32, 0], sizes = [8, 768], strides = [1, 1]} : vector<72x768xf32> to vector<8x768xf32>
    %c0_i32_68 = arith.constant 0 : i32
    %181 = tpu.dynamic_rotate %180 by %c0_i32_68 dim 1 : vector<8x768xf32>, i32 -> vector<8x768xf32>
    %182 = arith.addf %179, %181 : vector<8x768xf32>
    %183 = vector.extract_strided_slice %168 {offsets = [40, 0], sizes = [8, 768], strides = [1, 1]} : vector<72x768xf32> to vector<8x768xf32>
    %c767_i32_69 = arith.constant 767 : i32
    %184 = tpu.dynamic_rotate %183 by %c767_i32_69 dim 1 : vector<8x768xf32>, i32 -> vector<8x768xf32>
    %185 = arith.addf %182, %184 : vector<8x768xf32>
    %186 = vector.extract_strided_slice %168 {offsets = [48, 0], sizes = [8, 768], strides = [1, 1]} : vector<72x768xf32> to vector<8x768xf32>
    %c751_i32_70 = arith.constant 751 : i32
    %187 = tpu.dynamic_rotate %186 by %c751_i32_70 dim 1 : vector<8x768xf32>, i32 -> vector<8x768xf32>
    %188 = arith.addf %185, %187 : vector<8x768xf32>
    %189 = vector.extract_strided_slice %168 {offsets = [56, 0], sizes = [8, 768], strides = [1, 1]} : vector<72x768xf32> to vector<8x768xf32>
    %c750_i32_71 = arith.constant 750 : i32
    %190 = tpu.dynamic_rotate %189 by %c750_i32_71 dim 1 : vector<8x768xf32>, i32 -> vector<8x768xf32>
    %191 = arith.addf %188, %190 : vector<8x768xf32>
    %192 = vector.extract_strided_slice %168 {offsets = [64, 0], sizes = [8, 768], strides = [1, 1]} : vector<72x768xf32> to vector<8x768xf32>
    %c749_i32_72 = arith.constant 749 : i32
    %193 = tpu.dynamic_rotate %192 by %c749_i32_72 dim 1 : vector<8x768xf32>, i32 -> vector<8x768xf32>
    %194 = arith.addf %191, %193 : vector<8x768xf32>
    %195 = arith.index_cast %c4_i32 : i32 to index
    %c0_73 = arith.constant 0 : index
    %c0_74 = arith.constant 0 : index
    %196 = vector.load %arg6[%195, %c0_73, %c0_74] : memref<8x8x768xf32, #tpu.memory_space<vmem>>, vector<1x8x768xf32>
    %197 = vector.shape_cast %196 : vector<1x8x768xf32> to vector<8x768xf32>
    %198 = vector.shape_cast %194 : vector<8x768xf32> to vector<1x8x768xf32>
    tpu.vector_store %arg6[%195, %c0_73, %c0_74], %198 {strides = array<i32>} : memref<8x8x768xf32, #tpu.memory_space<vmem>>, vector<1x8x768xf32>,
    %c5_i32 = arith.constant 5 : i32
    %199 = arith.index_cast %c5_i32 : i32 to index
    %c0_75 = arith.constant 0 : index
    %c0_76 = arith.constant 0 : index
    %200 = vector.load %arg2[%199, %c0_75, %c0_76] : memref<8x2x768xbf16, #tpu.memory_space<vmem>>, vector<1x2x768xbf16>
    %201 = vector.shape_cast %200 : vector<1x2x768xbf16> to vector<2x768xbf16>
    %cst_77 = arith.constant 0.000000e+00 : bf16
    %202 = vector.broadcast %cst_77 : bf16 to vector<2x768xbf16>
    %203 = arith.maximumf %201, %202 : vector<2x768xbf16>
    %cst_78 = arith.constant 0.000000e+00 : bf16
    %204 = vector.broadcast %cst_78 : bf16 to vector<2x768xbf16>
    %205 = arith.minimumf %201, %204 : vector<2x768xbf16>
    %206 = tpu.concatenate %203, %205 in 0 : vector<2x768xbf16>, vector<2x768xbf16> -> vector<4x768xbf16>
    %cst_79 = arith.constant dense<0.000000e+00> : vector<72x768xf32>
    %207 = tpu.matmul %3, %206, %cst_79 {dimension_numbers = #tpu.dot_dimension_numbers<[1], [0], [0], [1], [0, 0, 1, 1], [], []>} : vector<72x4xbf16>, vector<4x768xbf16>, vector<72x768xf32> -> vector<72x768xf32>
    %208 = vector.extract_strided_slice %207 {offsets = [0, 0], sizes = [8, 768], strides = [1, 1]} : vector<72x768xf32> to vector<8x768xf32>
    %c19_i32_80 = arith.constant 19 : i32
    %209 = tpu.dynamic_rotate %208 by %c19_i32_80 dim 1 : vector<8x768xf32>, i32 -> vector<8x768xf32>
    %210 = vector.extract_strided_slice %207 {offsets = [8, 0], sizes = [8, 768], strides = [1, 1]} : vector<72x768xf32> to vector<8x768xf32>
    %c18_i32_81 = arith.constant 18 : i32
    %211 = tpu.dynamic_rotate %210 by %c18_i32_81 dim 1 : vector<8x768xf32>, i32 -> vector<8x768xf32>
    %212 = arith.addf %209, %211 : vector<8x768xf32>
    %213 = vector.extract_strided_slice %207 {offsets = [16, 0], sizes = [8, 768], strides = [1, 1]} : vector<72x768xf32> to vector<8x768xf32>
    %c17_i32_82 = arith.constant 17 : i32
    %214 = tpu.dynamic_rotate %213 by %c17_i32_82 dim 1 : vector<8x768xf32>, i32 -> vector<8x768xf32>
    %215 = arith.addf %212, %214 : vector<8x768xf32>
    %216 = vector.extract_strided_slice %207 {offsets = [24, 0], sizes = [8, 768], strides = [1, 1]} : vector<72x768xf32> to vector<8x768xf32>
    %c1_i32_83 = arith.constant 1 : i32
    %217 = tpu.dynamic_rotate %216 by %c1_i32_83 dim 1 : vector<8x768xf32>, i32 -> vector<8x768xf32>
    %218 = arith.addf %215, %217 : vector<8x768xf32>
    %219 = vector.extract_strided_slice %207 {offsets = [32, 0], sizes = [8, 768], strides = [1, 1]} : vector<72x768xf32> to vector<8x768xf32>
    %c0_i32_84 = arith.constant 0 : i32
    %220 = tpu.dynamic_rotate %219 by %c0_i32_84 dim 1 : vector<8x768xf32>, i32 -> vector<8x768xf32>
    %221 = arith.addf %218, %220 : vector<8x768xf32>
    %222 = vector.extract_strided_slice %207 {offsets = [40, 0], sizes = [8, 768], strides = [1, 1]} : vector<72x768xf32> to vector<8x768xf32>
    %c767_i32_85 = arith.constant 767 : i32
    %223 = tpu.dynamic_rotate %222 by %c767_i32_85 dim 1 : vector<8x768xf32>, i32 -> vector<8x768xf32>
    %224 = arith.addf %221, %223 : vector<8x768xf32>
    %225 = vector.extract_strided_slice %207 {offsets = [48, 0], sizes = [8, 768], strides = [1, 1]} : vector<72x768xf32> to vector<8x768xf32>
    %c751_i32_86 = arith.constant 751 : i32
    %226 = tpu.dynamic_rotate %225 by %c751_i32_86 dim 1 : vector<8x768xf32>, i32 -> vector<8x768xf32>
    %227 = arith.addf %224, %226 : vector<8x768xf32>
    %228 = vector.extract_strided_slice %207 {offsets = [56, 0], sizes = [8, 768], strides = [1, 1]} : vector<72x768xf32> to vector<8x768xf32>
    %c750_i32_87 = arith.constant 750 : i32
    %229 = tpu.dynamic_rotate %228 by %c750_i32_87 dim 1 : vector<8x768xf32>, i32 -> vector<8x768xf32>
    %230 = arith.addf %227, %229 : vector<8x768xf32>
    %231 = vector.extract_strided_slice %207 {offsets = [64, 0], sizes = [8, 768], strides = [1, 1]} : vector<72x768xf32> to vector<8x768xf32>
    %c749_i32_88 = arith.constant 749 : i32
    %232 = tpu.dynamic_rotate %231 by %c749_i32_88 dim 1 : vector<8x768xf32>, i32 -> vector<8x768xf32>
    %233 = arith.addf %230, %232 : vector<8x768xf32>
    %234 = arith.index_cast %c5_i32 : i32 to index
    %c0_89 = arith.constant 0 : index
    %c0_90 = arith.constant 0 : index
    %235 = vector.load %arg6[%234, %c0_89, %c0_90] : memref<8x8x768xf32, #tpu.memory_space<vmem>>, vector<1x8x768xf32>
    %236 = vector.shape_cast %235 : vector<1x8x768xf32> to vector<8x768xf32>
    %237 = vector.shape_cast %233 : vector<8x768xf32> to vector<1x8x768xf32>
    tpu.vector_store %arg6[%234, %c0_89, %c0_90], %237 {strides = array<i32>} : memref<8x8x768xf32, #tpu.memory_space<vmem>>, vector<1x8x768xf32>,
    %c6_i32 = arith.constant 6 : i32
    %238 = arith.index_cast %c6_i32 : i32 to index
    %c0_91 = arith.constant 0 : index
    %c0_92 = arith.constant 0 : index
    %239 = vector.load %arg2[%238, %c0_91, %c0_92] : memref<8x2x768xbf16, #tpu.memory_space<vmem>>, vector<1x2x768xbf16>
    %240 = vector.shape_cast %239 : vector<1x2x768xbf16> to vector<2x768xbf16>
    %cst_93 = arith.constant 0.000000e+00 : bf16
    %241 = vector.broadcast %cst_93 : bf16 to vector<2x768xbf16>
    %242 = arith.maximumf %240, %241 : vector<2x768xbf16>
    %cst_94 = arith.constant 0.000000e+00 : bf16
    %243 = vector.broadcast %cst_94 : bf16 to vector<2x768xbf16>
    %244 = arith.minimumf %240, %243 : vector<2x768xbf16>
    %245 = tpu.concatenate %242, %244 in 0 : vector<2x768xbf16>, vector<2x768xbf16> -> vector<4x768xbf16>
    %cst_95 = arith.constant dense<0.000000e+00> : vector<72x768xf32>
    %246 = tpu.matmul %3, %245, %cst_95 {dimension_numbers = #tpu.dot_dimension_numbers<[1], [0], [0], [1], [0, 0, 1, 1], [], []>} : vector<72x4xbf16>, vector<4x768xbf16>, vector<72x768xf32> -> vector<72x768xf32>
    %247 = vector.extract_strided_slice %246 {offsets = [0, 0], sizes = [8, 768], strides = [1, 1]} : vector<72x768xf32> to vector<8x768xf32>
    %c19_i32_96 = arith.constant 19 : i32
    %248 = tpu.dynamic_rotate %247 by %c19_i32_96 dim 1 : vector<8x768xf32>, i32 -> vector<8x768xf32>
    %249 = vector.extract_strided_slice %246 {offsets = [8, 0], sizes = [8, 768], strides = [1, 1]} : vector<72x768xf32> to vector<8x768xf32>
    %c18_i32_97 = arith.constant 18 : i32
    %250 = tpu.dynamic_rotate %249 by %c18_i32_97 dim 1 : vector<8x768xf32>, i32 -> vector<8x768xf32>
    %251 = arith.addf %248, %250 : vector<8x768xf32>
    %252 = vector.extract_strided_slice %246 {offsets = [16, 0], sizes = [8, 768], strides = [1, 1]} : vector<72x768xf32> to vector<8x768xf32>
    %c17_i32_98 = arith.constant 17 : i32
    %253 = tpu.dynamic_rotate %252 by %c17_i32_98 dim 1 : vector<8x768xf32>, i32 -> vector<8x768xf32>
    %254 = arith.addf %251, %253 : vector<8x768xf32>
    %255 = vector.extract_strided_slice %246 {offsets = [24, 0], sizes = [8, 768], strides = [1, 1]} : vector<72x768xf32> to vector<8x768xf32>
    %c1_i32_99 = arith.constant 1 : i32
    %256 = tpu.dynamic_rotate %255 by %c1_i32_99 dim 1 : vector<8x768xf32>, i32 -> vector<8x768xf32>
    %257 = arith.addf %254, %256 : vector<8x768xf32>
    %258 = vector.extract_strided_slice %246 {offsets = [32, 0], sizes = [8, 768], strides = [1, 1]} : vector<72x768xf32> to vector<8x768xf32>
    %c0_i32_100 = arith.constant 0 : i32
    %259 = tpu.dynamic_rotate %258 by %c0_i32_100 dim 1 : vector<8x768xf32>, i32 -> vector<8x768xf32>
    %260 = arith.addf %257, %259 : vector<8x768xf32>
    %261 = vector.extract_strided_slice %246 {offsets = [40, 0], sizes = [8, 768], strides = [1, 1]} : vector<72x768xf32> to vector<8x768xf32>
    %c767_i32_101 = arith.constant 767 : i32
    %262 = tpu.dynamic_rotate %261 by %c767_i32_101 dim 1 : vector<8x768xf32>, i32 -> vector<8x768xf32>
    %263 = arith.addf %260, %262 : vector<8x768xf32>
    %264 = vector.extract_strided_slice %246 {offsets = [48, 0], sizes = [8, 768], strides = [1, 1]} : vector<72x768xf32> to vector<8x768xf32>
    %c751_i32_102 = arith.constant 751 : i32
    %265 = tpu.dynamic_rotate %264 by %c751_i32_102 dim 1 : vector<8x768xf32>, i32 -> vector<8x768xf32>
    %266 = arith.addf %263, %265 : vector<8x768xf32>
    %267 = vector.extract_strided_slice %246 {offsets = [56, 0], sizes = [8, 768], strides = [1, 1]} : vector<72x768xf32> to vector<8x768xf32>
    %c750_i32_103 = arith.constant 750 : i32
    %268 = tpu.dynamic_rotate %267 by %c750_i32_103 dim 1 : vector<8x768xf32>, i32 -> vector<8x768xf32>
    %269 = arith.addf %266, %268 : vector<8x768xf32>
    %270 = vector.extract_strided_slice %246 {offsets = [64, 0], sizes = [8, 768], strides = [1, 1]} : vector<72x768xf32> to vector<8x768xf32>
    %c749_i32_104 = arith.constant 749 : i32
    %271 = tpu.dynamic_rotate %270 by %c749_i32_104 dim 1 : vector<8x768xf32>, i32 -> vector<8x768xf32>
    %272 = arith.addf %269, %271 : vector<8x768xf32>
    %273 = arith.index_cast %c6_i32 : i32 to index
    %c0_105 = arith.constant 0 : index
    %c0_106 = arith.constant 0 : index
    %274 = vector.load %arg6[%273, %c0_105, %c0_106] : memref<8x8x768xf32, #tpu.memory_space<vmem>>, vector<1x8x768xf32>
    %275 = vector.shape_cast %274 : vector<1x8x768xf32> to vector<8x768xf32>
    %276 = vector.shape_cast %272 : vector<8x768xf32> to vector<1x8x768xf32>
    tpu.vector_store %arg6[%273, %c0_105, %c0_106], %276 {strides = array<i32>} : memref<8x8x768xf32, #tpu.memory_space<vmem>>, vector<1x8x768xf32>,
    %c7_i32 = arith.constant 7 : i32
    %277 = arith.index_cast %c7_i32 : i32 to index
    %c0_107 = arith.constant 0 : index
    %c0_108 = arith.constant 0 : index
    %278 = vector.load %arg2[%277, %c0_107, %c0_108] : memref<8x2x768xbf16, #tpu.memory_space<vmem>>, vector<1x2x768xbf16>
    %279 = vector.shape_cast %278 : vector<1x2x768xbf16> to vector<2x768xbf16>
    %cst_109 = arith.constant 0.000000e+00 : bf16
    %280 = vector.broadcast %cst_109 : bf16 to vector<2x768xbf16>
    %281 = arith.maximumf %279, %280 : vector<2x768xbf16>
    %cst_110 = arith.constant 0.000000e+00 : bf16
    %282 = vector.broadcast %cst_110 : bf16 to vector<2x768xbf16>
    %283 = arith.minimumf %279, %282 : vector<2x768xbf16>
    %284 = tpu.concatenate %281, %283 in 0 : vector<2x768xbf16>, vector<2x768xbf16> -> vector<4x768xbf16>
    %cst_111 = arith.constant dense<0.000000e+00> : vector<72x768xf32>
    %285 = tpu.matmul %3, %284, %cst_111 {dimension_numbers = #tpu.dot_dimension_numbers<[1], [0], [0], [1], [0, 0, 1, 1], [], []>} : vector<72x4xbf16>, vector<4x768xbf16>, vector<72x768xf32> -> vector<72x768xf32>
    %286 = vector.extract_strided_slice %285 {offsets = [0, 0], sizes = [8, 768], strides = [1, 1]} : vector<72x768xf32> to vector<8x768xf32>
    %c19_i32_112 = arith.constant 19 : i32
    %287 = tpu.dynamic_rotate %286 by %c19_i32_112 dim 1 : vector<8x768xf32>, i32 -> vector<8x768xf32>
    %288 = vector.extract_strided_slice %285 {offsets = [8, 0], sizes = [8, 768], strides = [1, 1]} : vector<72x768xf32> to vector<8x768xf32>
    %c18_i32_113 = arith.constant 18 : i32
    %289 = tpu.dynamic_rotate %288 by %c18_i32_113 dim 1 : vector<8x768xf32>, i32 -> vector<8x768xf32>
    %290 = arith.addf %287, %289 : vector<8x768xf32>
    %291 = vector.extract_strided_slice %285 {offsets = [16, 0], sizes = [8, 768], strides = [1, 1]} : vector<72x768xf32> to vector<8x768xf32>
    %c17_i32_114 = arith.constant 17 : i32
    %292 = tpu.dynamic_rotate %291 by %c17_i32_114 dim 1 : vector<8x768xf32>, i32 -> vector<8x768xf32>
    %293 = arith.addf %290, %292 : vector<8x768xf32>
    %294 = vector.extract_strided_slice %285 {offsets = [24, 0], sizes = [8, 768], strides = [1, 1]} : vector<72x768xf32> to vector<8x768xf32>
    %c1_i32_115 = arith.constant 1 : i32
    %295 = tpu.dynamic_rotate %294 by %c1_i32_115 dim 1 : vector<8x768xf32>, i32 -> vector<8x768xf32>
    %296 = arith.addf %293, %295 : vector<8x768xf32>
    %297 = vector.extract_strided_slice %285 {offsets = [32, 0], sizes = [8, 768], strides = [1, 1]} : vector<72x768xf32> to vector<8x768xf32>
    %c0_i32_116 = arith.constant 0 : i32
    %298 = tpu.dynamic_rotate %297 by %c0_i32_116 dim 1 : vector<8x768xf32>, i32 -> vector<8x768xf32>
    %299 = arith.addf %296, %298 : vector<8x768xf32>
    %300 = vector.extract_strided_slice %285 {offsets = [40, 0], sizes = [8, 768], strides = [1, 1]} : vector<72x768xf32> to vector<8x768xf32>
    %c767_i32_117 = arith.constant 767 : i32
    %301 = tpu.dynamic_rotate %300 by %c767_i32_117 dim 1 : vector<8x768xf32>, i32 -> vector<8x768xf32>
    %302 = arith.addf %299, %301 : vector<8x768xf32>
    %303 = vector.extract_strided_slice %285 {offsets = [48, 0], sizes = [8, 768], strides = [1, 1]} : vector<72x768xf32> to vector<8x768xf32>
    %c751_i32_118 = arith.constant 751 : i32
    %304 = tpu.dynamic_rotate %303 by %c751_i32_118 dim 1 : vector<8x768xf32>, i32 -> vector<8x768xf32>
    %305 = arith.addf %302, %304 : vector<8x768xf32>
    %306 = vector.extract_strided_slice %285 {offsets = [56, 0], sizes = [8, 768], strides = [1, 1]} : vector<72x768xf32> to vector<8x768xf32>
    %c750_i32_119 = arith.constant 750 : i32
    %307 = tpu.dynamic_rotate %306 by %c750_i32_119 dim 1 : vector<8x768xf32>, i32 -> vector<8x768xf32>
    %308 = arith.addf %305, %307 : vector<8x768xf32>
    %309 = vector.extract_strided_slice %285 {offsets = [64, 0], sizes = [8, 768], strides = [1, 1]} : vector<72x768xf32> to vector<8x768xf32>
    %c749_i32_120 = arith.constant 749 : i32
    %310 = tpu.dynamic_rotate %309 by %c749_i32_120 dim 1 : vector<8x768xf32>, i32 -> vector<8x768xf32>
    %311 = arith.addf %308, %310 : vector<8x768xf32>
    %312 = arith.index_cast %c7_i32 : i32 to index
    %c0_121 = arith.constant 0 : index
    %c0_122 = arith.constant 0 : index
    %313 = vector.load %arg6[%312, %c0_121, %c0_122] : memref<8x8x768xf32, #tpu.memory_space<vmem>>, vector<1x8x768xf32>
    %314 = vector.shape_cast %313 : vector<1x8x768xf32> to vector<8x768xf32>
    %315 = vector.shape_cast %311 : vector<8x768xf32> to vector<1x8x768xf32>
    tpu.vector_store %arg6[%312, %c0_121, %c0_122], %315 {strides = array<i32>} : memref<8x8x768xf32, #tpu.memory_space<vmem>>, vector<1x8x768xf32>,
    %c8_i32 = arith.constant 8 : i32
    %c0_123 = arith.constant 0 : index
    %c0_124 = arith.constant 0 : index
    %316 = vector.load %arg4[%c0_123, %c0_124] : memref<8x4xf32, #tpu.memory_space<vmem>>, vector<8x1xf32>
    %c0_125 = arith.constant 0 : index
    %c1 = arith.constant 1 : index
    %317 = vector.load %arg4[%c0_125, %c1] : memref<8x4xf32, #tpu.memory_space<vmem>>, vector<8x1xf32>
    %c0_126 = arith.constant 0 : index
    %c2 = arith.constant 2 : index
    %318 = vector.load %arg4[%c0_126, %c2] : memref<8x4xf32, #tpu.memory_space<vmem>>, vector<8x1xf32>
    %c0_127 = arith.constant 0 : index
    %c3 = arith.constant 3 : index
    %319 = vector.load %arg4[%c0_127, %c3] : memref<8x4xf32, #tpu.memory_space<vmem>>, vector<8x1xf32>
    %c0_128 = arith.constant 0 : index
    %c0_129 = arith.constant 0 : index
    %320 = vector.load %arg5[%c0_128, %c0_129] : memref<8x768xf32, #tpu.memory_space<vmem>>, vector<8x768xf32>
    %c0_i32_130 = arith.constant 0 : i32
    %c7_i32_131 = arith.constant 7 : i32
    %321 = arith.subi %c7_i32_131, %c0_i32_130 : i32
    %322 = arith.index_cast %321 : i32 to index
    %c0_132 = arith.constant 0 : index
    %c0_133 = arith.constant 0 : index
    %323 = vector.load %arg6[%322, %c0_132, %c0_133] : memref<8x8x768xf32, #tpu.memory_space<vmem>>, vector<1x8x768xf32>
    %324 = vector.shape_cast %323 : vector<1x8x768xf32> to vector<8x768xf32>
    %325 = vector.broadcast %316 : vector<8x1xf32> to vector<8x768xf32>
    %326 = arith.mulf %325, %320 : vector<8x768xf32>
    %327 = vector.broadcast %319 : vector<8x1xf32> to vector<8x768xf32>
    %328 = arith.mulf %324, %327 : vector<8x768xf32>
    %329 = vector.broadcast %317 : vector<8x1xf32> to vector<8x768xf32>
    %330 = arith.addf %329, %328 : vector<8x768xf32>
    %331 = arith.addf %326, %330 : vector<8x768xf32>
    %332 = vector.broadcast %318 : vector<8x1xf32> to vector<8x768xf32>
    %333 = arith.addf %332, %324 : vector<8x768xf32>
    %334 = tpu.reciprocal %333 {approx = true} : vector<8x768xf32> -> vector<8x768xf32>
    %335 = arith.mulf %333, %334 : vector<8x768xf32>
    %cst_134 = arith.constant 2.000000e+00 : f32
    %336 = vector.broadcast %cst_134 : f32 to vector<8x768xf32>
    %337 = arith.subf %336, %335 : vector<8x768xf32>
    %338 = arith.mulf %334, %337 : vector<8x768xf32>
    %339 = arith.mulf %331, %338 : vector<8x768xf32>
    %cst_135 = arith.constant 5.000000e-01 : f32
    %340 = vector.broadcast %cst_135 : f32 to vector<8x768xf32>
    %341 = arith.mulf %340, %339 : vector<8x768xf32>
    %342 = math.tanh %341 : vector<8x768xf32>
    %cst_136 = arith.constant 5.000000e-01 : f32
    %343 = vector.broadcast %cst_136 : f32 to vector<8x768xf32>
    %344 = arith.mulf %343, %342 : vector<8x768xf32>
    %cst_137 = arith.constant 5.000000e-01 : f32
    %345 = vector.broadcast %cst_137 : f32 to vector<8x768xf32>
    %346 = arith.addf %344, %345 : vector<8x768xf32>
    %c1_i32_138 = arith.constant 1 : i32
    %c7_i32_139 = arith.constant 7 : i32
    %347 = arith.subi %c7_i32_139, %c1_i32_138 : i32
    %348 = arith.index_cast %347 : i32 to index
    %c0_140 = arith.constant 0 : index
    %c0_141 = arith.constant 0 : index
    %349 = vector.load %arg6[%348, %c0_140, %c0_141] : memref<8x8x768xf32, #tpu.memory_space<vmem>>, vector<1x8x768xf32>
    %350 = vector.shape_cast %349 : vector<1x8x768xf32> to vector<8x768xf32>
    %351 = vector.broadcast %316 : vector<8x1xf32> to vector<8x768xf32>
    %352 = arith.mulf %351, %346 : vector<8x768xf32>
    %353 = vector.broadcast %319 : vector<8x1xf32> to vector<8x768xf32>
    %354 = arith.mulf %350, %353 : vector<8x768xf32>
    %355 = vector.broadcast %317 : vector<8x1xf32> to vector<8x768xf32>
    %356 = arith.addf %355, %354 : vector<8x768xf32>
    %357 = arith.addf %352, %356 : vector<8x768xf32>
    %358 = vector.broadcast %318 : vector<8x1xf32> to vector<8x768xf32>
    %359 = arith.addf %358, %350 : vector<8x768xf32>
    %360 = tpu.reciprocal %359 {approx = true} : vector<8x768xf32> -> vector<8x768xf32>
    %361 = arith.mulf %359, %360 : vector<8x768xf32>
    %cst_142 = arith.constant 2.000000e+00 : f32
    %362 = vector.broadcast %cst_142 : f32 to vector<8x768xf32>
    %363 = arith.subf %362, %361 : vector<8x768xf32>
    %364 = arith.mulf %360, %363 : vector<8x768xf32>
    %365 = arith.mulf %357, %364 : vector<8x768xf32>
    %cst_143 = arith.constant 5.000000e-01 : f32
    %366 = vector.broadcast %cst_143 : f32 to vector<8x768xf32>
    %367 = arith.mulf %366, %365 : vector<8x768xf32>
    %368 = math.tanh %367 : vector<8x768xf32>
    %cst_144 = arith.constant 5.000000e-01 : f32
    %369 = vector.broadcast %cst_144 : f32 to vector<8x768xf32>
    %370 = arith.mulf %369, %368 : vector<8x768xf32>
    %cst_145 = arith.constant 5.000000e-01 : f32
    %371 = vector.broadcast %cst_145 : f32 to vector<8x768xf32>
    %372 = arith.addf %370, %371 : vector<8x768xf32>
    %c2_i32_146 = arith.constant 2 : i32
    %c7_i32_147 = arith.constant 7 : i32
    %373 = arith.subi %c7_i32_147, %c2_i32_146 : i32
    %374 = arith.index_cast %373 : i32 to index
    %c0_148 = arith.constant 0 : index
    %c0_149 = arith.constant 0 : index
    %375 = vector.load %arg6[%374, %c0_148, %c0_149] : memref<8x8x768xf32, #tpu.memory_space<vmem>>, vector<1x8x768xf32>
    %376 = vector.shape_cast %375 : vector<1x8x768xf32> to vector<8x768xf32>
    %377 = vector.broadcast %316 : vector<8x1xf32> to vector<8x768xf32>
    %378 = arith.mulf %377, %372 : vector<8x768xf32>
    %379 = vector.broadcast %319 : vector<8x1xf32> to vector<8x768xf32>
    %380 = arith.mulf %376, %379 : vector<8x768xf32>
    %381 = vector.broadcast %317 : vector<8x1xf32> to vector<8x768xf32>
    %382 = arith.addf %381, %380 : vector<8x768xf32>
    %383 = arith.addf %378, %382 : vector<8x768xf32>
    %384 = vector.broadcast %318 : vector<8x1xf32> to vector<8x768xf32>
    %385 = arith.addf %384, %376 : vector<8x768xf32>
    %386 = tpu.reciprocal %385 {approx = true} : vector<8x768xf32> -> vector<8x768xf32>
    %387 = arith.mulf %385, %386 : vector<8x768xf32>
    %cst_150 = arith.constant 2.000000e+00 : f32
    %388 = vector.broadcast %cst_150 : f32 to vector<8x768xf32>
    %389 = arith.subf %388, %387 : vector<8x768xf32>
    %390 = arith.mulf %386, %389 : vector<8x768xf32>
    %391 = arith.mulf %383, %390 : vector<8x768xf32>
    %cst_151 = arith.constant 5.000000e-01 : f32
    %392 = vector.broadcast %cst_151 : f32 to vector<8x768xf32>
    %393 = arith.mulf %392, %391 : vector<8x768xf32>
    %394 = math.tanh %393 : vector<8x768xf32>
    %cst_152 = arith.constant 5.000000e-01 : f32
    %395 = vector.broadcast %cst_152 : f32 to vector<8x768xf32>
    %396 = arith.mulf %395, %394 : vector<8x768xf32>
    %cst_153 = arith.constant 5.000000e-01 : f32
    %397 = vector.broadcast %cst_153 : f32 to vector<8x768xf32>
    %398 = arith.addf %396, %397 : vector<8x768xf32>
    %c3_i32_154 = arith.constant 3 : i32
    %c7_i32_155 = arith.constant 7 : i32
    %399 = arith.subi %c7_i32_155, %c3_i32_154 : i32
    %400 = arith.index_cast %399 : i32 to index
    %c0_156 = arith.constant 0 : index
    %c0_157 = arith.constant 0 : index
    %401 = vector.load %arg6[%400, %c0_156, %c0_157] : memref<8x8x768xf32, #tpu.memory_space<vmem>>, vector<1x8x768xf32>
    %402 = vector.shape_cast %401 : vector<1x8x768xf32> to vector<8x768xf32>
    %403 = vector.broadcast %316 : vector<8x1xf32> to vector<8x768xf32>
    %404 = arith.mulf %403, %398 : vector<8x768xf32>
    %405 = vector.broadcast %319 : vector<8x1xf32> to vector<8x768xf32>
    %406 = arith.mulf %402, %405 : vector<8x768xf32>
    %407 = vector.broadcast %317 : vector<8x1xf32> to vector<8x768xf32>
    %408 = arith.addf %407, %406 : vector<8x768xf32>
    %409 = arith.addf %404, %408 : vector<8x768xf32>
    %410 = vector.broadcast %318 : vector<8x1xf32> to vector<8x768xf32>
    %411 = arith.addf %410, %402 : vector<8x768xf32>
    %412 = tpu.reciprocal %411 {approx = true} : vector<8x768xf32> -> vector<8x768xf32>
    %413 = arith.mulf %411, %412 : vector<8x768xf32>
    %cst_158 = arith.constant 2.000000e+00 : f32
    %414 = vector.broadcast %cst_158 : f32 to vector<8x768xf32>
    %415 = arith.subf %414, %413 : vector<8x768xf32>
    %416 = arith.mulf %412, %415 : vector<8x768xf32>
    %417 = arith.mulf %409, %416 : vector<8x768xf32>
    %cst_159 = arith.constant 5.000000e-01 : f32
    %418 = vector.broadcast %cst_159 : f32 to vector<8x768xf32>
    %419 = arith.mulf %418, %417 : vector<8x768xf32>
    %420 = math.tanh %419 : vector<8x768xf32>
    %cst_160 = arith.constant 5.000000e-01 : f32
    %421 = vector.broadcast %cst_160 : f32 to vector<8x768xf32>
    %422 = arith.mulf %421, %420 : vector<8x768xf32>
    %cst_161 = arith.constant 5.000000e-01 : f32
    %423 = vector.broadcast %cst_161 : f32 to vector<8x768xf32>
    %424 = arith.addf %422, %423 : vector<8x768xf32>
    %c4_i32_162 = arith.constant 4 : i32
    %c7_i32_163 = arith.constant 7 : i32
    %425 = arith.subi %c7_i32_163, %c4_i32_162 : i32
    %426 = arith.index_cast %425 : i32 to index
    %c0_164 = arith.constant 0 : index
    %c0_165 = arith.constant 0 : index
    %427 = vector.load %arg6[%426, %c0_164, %c0_165] : memref<8x8x768xf32, #tpu.memory_space<vmem>>, vector<1x8x768xf32>
    %428 = vector.shape_cast %427 : vector<1x8x768xf32> to vector<8x768xf32>
    %429 = vector.broadcast %316 : vector<8x1xf32> to vector<8x768xf32>
    %430 = arith.mulf %429, %424 : vector<8x768xf32>
    %431 = vector.broadcast %319 : vector<8x1xf32> to vector<8x768xf32>
    %432 = arith.mulf %428, %431 : vector<8x768xf32>
    %433 = vector.broadcast %317 : vector<8x1xf32> to vector<8x768xf32>
    %434 = arith.addf %433, %432 : vector<8x768xf32>
    %435 = arith.addf %430, %434 : vector<8x768xf32>
    %436 = vector.broadcast %318 : vector<8x1xf32> to vector<8x768xf32>
    %437 = arith.addf %436, %428 : vector<8x768xf32>
    %438 = tpu.reciprocal %437 {approx = true} : vector<8x768xf32> -> vector<8x768xf32>
    %439 = arith.mulf %437, %438 : vector<8x768xf32>
    %cst_166 = arith.constant 2.000000e+00 : f32
    %440 = vector.broadcast %cst_166 : f32 to vector<8x768xf32>
    %441 = arith.subf %440, %439 : vector<8x768xf32>
    %442 = arith.mulf %438, %441 : vector<8x768xf32>
    %443 = arith.mulf %435, %442 : vector<8x768xf32>
    %cst_167 = arith.constant 5.000000e-01 : f32
    %444 = vector.broadcast %cst_167 : f32 to vector<8x768xf32>
    %445 = arith.mulf %444, %443 : vector<8x768xf32>
    %446 = math.tanh %445 : vector<8x768xf32>
    %cst_168 = arith.constant 5.000000e-01 : f32
    %447 = vector.broadcast %cst_168 : f32 to vector<8x768xf32>
    %448 = arith.mulf %447, %446 : vector<8x768xf32>
    %cst_169 = arith.constant 5.000000e-01 : f32
    %449 = vector.broadcast %cst_169 : f32 to vector<8x768xf32>
    %450 = arith.addf %448, %449 : vector<8x768xf32>
    %c5_i32_170 = arith.constant 5 : i32
    %c7_i32_171 = arith.constant 7 : i32
    %451 = arith.subi %c7_i32_171, %c5_i32_170 : i32
    %452 = arith.index_cast %451 : i32 to index
    %c0_172 = arith.constant 0 : index
    %c0_173 = arith.constant 0 : index
    %453 = vector.load %arg6[%452, %c0_172, %c0_173] : memref<8x8x768xf32, #tpu.memory_space<vmem>>, vector<1x8x768xf32>
    %454 = vector.shape_cast %453 : vector<1x8x768xf32> to vector<8x768xf32>
    %455 = vector.broadcast %316 : vector<8x1xf32> to vector<8x768xf32>
    %456 = arith.mulf %455, %450 : vector<8x768xf32>
    %457 = vector.broadcast %319 : vector<8x1xf32> to vector<8x768xf32>
    %458 = arith.mulf %454, %457 : vector<8x768xf32>
    %459 = vector.broadcast %317 : vector<8x1xf32> to vector<8x768xf32>
    %460 = arith.addf %459, %458 : vector<8x768xf32>
    %461 = arith.addf %456, %460 : vector<8x768xf32>
    %462 = vector.broadcast %318 : vector<8x1xf32> to vector<8x768xf32>
    %463 = arith.addf %462, %454 : vector<8x768xf32>
    %464 = tpu.reciprocal %463 {approx = true} : vector<8x768xf32> -> vector<8x768xf32>
    %465 = arith.mulf %463, %464 : vector<8x768xf32>
    %cst_174 = arith.constant 2.000000e+00 : f32
    %466 = vector.broadcast %cst_174 : f32 to vector<8x768xf32>
    %467 = arith.subf %466, %465 : vector<8x768xf32>
    %468 = arith.mulf %464, %467 : vector<8x768xf32>
    %469 = arith.mulf %461, %468 : vector<8x768xf32>
    %cst_175 = arith.constant 5.000000e-01 : f32
    %470 = vector.broadcast %cst_175 : f32 to vector<8x768xf32>
    %471 = arith.mulf %470, %469 : vector<8x768xf32>
    %472 = math.tanh %471 : vector<8x768xf32>
    %cst_176 = arith.constant 5.000000e-01 : f32
    %473 = vector.broadcast %cst_176 : f32 to vector<8x768xf32>
    %474 = arith.mulf %473, %472 : vector<8x768xf32>
    %cst_177 = arith.constant 5.000000e-01 : f32
    %475 = vector.broadcast %cst_177 : f32 to vector<8x768xf32>
    %476 = arith.addf %474, %475 : vector<8x768xf32>
    %c6_i32_178 = arith.constant 6 : i32
    %c7_i32_179 = arith.constant 7 : i32
    %477 = arith.subi %c7_i32_179, %c6_i32_178 : i32
    %478 = arith.index_cast %477 : i32 to index
    %c0_180 = arith.constant 0 : index
    %c0_181 = arith.constant 0 : index
    %479 = vector.load %arg6[%478, %c0_180, %c0_181] : memref<8x8x768xf32, #tpu.memory_space<vmem>>, vector<1x8x768xf32>
    %480 = vector.shape_cast %479 : vector<1x8x768xf32> to vector<8x768xf32>
    %481 = vector.broadcast %316 : vector<8x1xf32> to vector<8x768xf32>
    %482 = arith.mulf %481, %476 : vector<8x768xf32>
    %483 = vector.broadcast %319 : vector<8x1xf32> to vector<8x768xf32>
    %484 = arith.mulf %480, %483 : vector<8x768xf32>
    %485 = vector.broadcast %317 : vector<8x1xf32> to vector<8x768xf32>
    %486 = arith.addf %485, %484 : vector<8x768xf32>
    %487 = arith.addf %482, %486 : vector<8x768xf32>
    %488 = vector.broadcast %318 : vector<8x1xf32> to vector<8x768xf32>
    %489 = arith.addf %488, %480 : vector<8x768xf32>
    %490 = tpu.reciprocal %489 {approx = true} : vector<8x768xf32> -> vector<8x768xf32>
    %491 = arith.mulf %489, %490 : vector<8x768xf32>
    %cst_182 = arith.constant 2.000000e+00 : f32
    %492 = vector.broadcast %cst_182 : f32 to vector<8x768xf32>
    %493 = arith.subf %492, %491 : vector<8x768xf32>
    %494 = arith.mulf %490, %493 : vector<8x768xf32>
    %495 = arith.mulf %487, %494 : vector<8x768xf32>
    %cst_183 = arith.constant 5.000000e-01 : f32
    %496 = vector.broadcast %cst_183 : f32 to vector<8x768xf32>
    %497 = arith.mulf %496, %495 : vector<8x768xf32>
    %498 = math.tanh %497 : vector<8x768xf32>
    %cst_184 = arith.constant 5.000000e-01 : f32
    %499 = vector.broadcast %cst_184 : f32 to vector<8x768xf32>
    %500 = arith.mulf %499, %498 : vector<8x768xf32>
    %cst_185 = arith.constant 5.000000e-01 : f32
    %501 = vector.broadcast %cst_185 : f32 to vector<8x768xf32>
    %502 = arith.addf %500, %501 : vector<8x768xf32>
    %c7_i32_186 = arith.constant 7 : i32
    %c7_i32_187 = arith.constant 7 : i32
    %503 = arith.subi %c7_i32_187, %c7_i32_186 : i32
    %504 = arith.index_cast %503 : i32 to index
    %c0_188 = arith.constant 0 : index
    %c0_189 = arith.constant 0 : index
    %505 = vector.load %arg6[%504, %c0_188, %c0_189] : memref<8x8x768xf32, #tpu.memory_space<vmem>>, vector<1x8x768xf32>
    %506 = vector.shape_cast %505 : vector<1x8x768xf32> to vector<8x768xf32>
    %507 = vector.broadcast %316 : vector<8x1xf32> to vector<8x768xf32>
    %508 = arith.mulf %507, %502 : vector<8x768xf32>
    %509 = vector.broadcast %319 : vector<8x1xf32> to vector<8x768xf32>
    %510 = arith.mulf %506, %509 : vector<8x768xf32>
    %511 = vector.broadcast %317 : vector<8x1xf32> to vector<8x768xf32>
    %512 = arith.addf %511, %510 : vector<8x768xf32>
    %513 = arith.addf %508, %512 : vector<8x768xf32>
    %514 = vector.broadcast %318 : vector<8x1xf32> to vector<8x768xf32>
    %515 = arith.addf %514, %506 : vector<8x768xf32>
    %516 = tpu.reciprocal %515 {approx = true} : vector<8x768xf32> -> vector<8x768xf32>
    %517 = arith.mulf %515, %516 : vector<8x768xf32>
    %cst_190 = arith.constant 2.000000e+00 : f32
    %518 = vector.broadcast %cst_190 : f32 to vector<8x768xf32>
    %519 = arith.subf %518, %517 : vector<8x768xf32>
    %520 = arith.mulf %516, %519 : vector<8x768xf32>
    %521 = arith.mulf %513, %520 : vector<8x768xf32>
    %cst_191 = arith.constant 5.000000e-01 : f32
    %522 = vector.broadcast %cst_191 : f32 to vector<8x768xf32>
    %523 = arith.mulf %522, %521 : vector<8x768xf32>
    %524 = math.tanh %523 : vector<8x768xf32>
    %cst_192 = arith.constant 5.000000e-01 : f32
    %525 = vector.broadcast %cst_192 : f32 to vector<8x768xf32>
    %526 = arith.mulf %525, %524 : vector<8x768xf32>
    %cst_193 = arith.constant 5.000000e-01 : f32
    %527 = vector.broadcast %cst_193 : f32 to vector<8x768xf32>
    %528 = arith.addf %526, %527 : vector<8x768xf32>
    %c8_i32_194 = arith.constant 8 : i32
    %c0_195 = arith.constant 0 : index
    %c0_196 = arith.constant 0 : index
    %529 = vector.load %arg5[%c0_195, %c0_196] : memref<8x768xf32, #tpu.memory_space<vmem>>, vector<8x768xf32>
    tpu.vector_store %arg5[%c0_195, %c0_196], %528 {strides = array<i32>} : memref<8x768xf32, #tpu.memory_space<vmem>>, vector<8x768xf32>,
    return
  }
  func.func @transform_0(%arg0: i32, %arg1: i32) -> (i32, i32, i32) {
    %c0_i32 = arith.constant 0 : i32
    %0 = arith.subi %c0_i32, %arg1 : i32
    %c0_i32_0 = arith.constant 0 : i32
    %c0_i32_1 = arith.constant 0 : i32
    return %0, %c0_i32_0, %arg0 : i32, i32, i32
  }
  func.func @transform_1(%arg0: i32, %arg1: i32) -> (i32, i32) {
    %c0_i32 = arith.constant 0 : i32
    %c0_i32_0 = arith.constant 0 : i32
    %c0_i32_1 = arith.constant 0 : i32
    return %c0_i32, %c0_i32_0 : i32, i32
  }
  func.func @transform_2(%arg0: i32, %arg1: i32) -> (i32, i32) {
    %c0_i32 = arith.constant 0 : i32
    %c0_i32_0 = arith.constant 0 : i32
    %c0_i32_1 = arith.constant 0 : i32
    return %c0_i32, %c0_i32_0 : i32, i32
  }
  func.func @transform_3(%arg0: i32, %arg1: i32) -> (i32, i32) {
    %c0_i32 = arith.constant 0 : i32
    %c0_i32_0 = arith.constant 0 : i32
    return %c0_i32, %arg0 : i32, i32
  }
}

</mosaic_0001>

<llo_original>
// kernel: continuous_fully_connected_forward.1
$region0: #{continuous_fully_connected_forward.1}
  #allocation0 [shape = 'u32[]', space=smem, size = 0x4, offset = 0x4, fixed_abs, tag = 'smem constant byte address 0x4 - core index']
  #allocation1 [shape = 'u32[144,128]{1,0:T(1,128)}', space=vmem, size = 0x12000, scoped, tag = 'internal scratch']
  #allocation2 [shape = 'f32[8,8,768]{2,1,0:T(8,128)}', space=vmem, size = 0x30000, scoped, tag = 'scratch operand']
  %s0 = inlined_call_operand.hbm [shape: bf16[8,2,768], index: 0, kind: input, shape index: {}]
  %s1 = inlined_call_operand.hbm [shape: bf16[72,4], index: 1, kind: input, shape index: {}]
  %s2 = inlined_call_operand.hbm [shape: f32[8,4], index: 2, kind: input, shape index: {}]
  %s3 = inlined_call_operand.hbm [shape: f32[8,768], index: 3, kind: output, shape index: {}]
  %s4 = sld [smem:[#allocation0]]
  $region38: #{continuous_fully_connected_forward.1} parent=0
    _
  %s6 = ssub.s32 1, %s4
  %s7 = scalar_select 0, %s6, %s4
  $region1: #{continuous_fully_connected_forward.1} parent=0
    #allocation3 [shape = 'u8[24576]{0}', space=vmem, size = 0x6000, scoped, tag = 'input window, operand 0, single buffered']
    #allocation4 [shape = 's32[1]{0}', space=sflag, size = 0x4, scoped, tag = 'scoped memory for continuous_fully_connected_forward.1']
    #allocation5 [shape = 's32[1]{0}', space=sflag, size = 0x4, scoped, tag = 'scoped memory for continuous_fully_connected_forward.1']
    #allocation6 [shape = 'u8[18432]{0}', space=vmem, size = 0x4800, scoped, tag = 'input window, operand 1, single buffered']
    #allocation7 [shape = 's32[1]{0}', space=sflag, size = 0x4, scoped, tag = 'scoped memory for continuous_fully_connected_forward.1']
    #allocation8 [shape = 'u8[4096]{0}', space=vmem, size = 0x1000, scoped, tag = 'input window, operand 2, single buffered']
    #allocation9 [shape = 'u8[24576]{0}', space=vmem, size = 0x6000, scoped, tag = 'output window, operand 0, single buffered']
    %8 = vsyncpa [#allocation4], 0
    %9 = vsyncpa [#allocation7], 0
    %10 = vsyncpa [#allocation5], 0
    // Predicated region
    $region2: #{continuous_fully_connected_forward.1} parent=1 // pred_check
      _
    $region3: #{continuous_fully_connected_forward.1} parent=1 // pred_check_branch
      %12 = sbr.rel (0) target = $region5
    $region4: #{continuous_fully_connected_forward.1} parent=1 // pred_region
      %s13 = ssub.s32 0, 0
      %s14 = smul.u32 8, %s13
      %s16 = ssub.s32 768, 768
      %17 = vsyncadd [#allocation4], %s16
      %s18 = smul.addr %s14, 6
      %s19 = smul.addr %s18, 16
      %s20 = scalar_lea.hbm %s0, %s19
      %s21 = sshll.u32 [#allocation3], 4
      %s22 = int_to_ptr.vmem [resolvable:$true] %s21
      %27 = dma.hbm_to_vmem [thread:$0]  %s20, 768, %s22, [#allocation4], 96, 96, 6
    $region5: #{continuous_fully_connected_forward.1} parent=1 // pred_fallthru
      _
    // Predicated region
    $region6: #{continuous_fully_connected_forward.1} parent=1 // pred_check
      _
    $region7: #{continuous_fully_connected_forward.1} parent=1 // pred_check_branch
      %29 = sbr.rel (0) target = $region9
    $region8: #{continuous_fully_connected_forward.1} parent=1 // pred_region
      %s31 = ssub.s32 576, 576
      %32 = vsyncadd [#allocation7], %s31
      %s33 = sshll.u32 [#allocation6], 4
      %s34 = int_to_ptr.vmem [resolvable:$true] %s33
      %39 = dma.hbm_to_vmem [thread:$0]  %s1, 576, %s34, [#allocation7], 64, 64, 4
    $region9: #{continuous_fully_connected_forward.1} parent=1 // pred_fallthru
      _
    // Predicated region
    $region10: #{continuous_fully_connected_forward.1} parent=1 // pred_check
      _
    $region11: #{continuous_fully_connected_forward.1} parent=1 // pred_check_branch
      %41 = sbr.rel (0) target = $region13
    $region12: #{continuous_fully_connected_forward.1} parent=1 // pred_region
      %s43 = ssub.s32 128, 128
      %44 = vsyncadd [#allocation7], %s43
      %s46 = sshll.u32 [#allocation8], 4
      %s47 = int_to_ptr.vmem [resolvable:$true] %s46
      %49 = dma.hbm_to_vmem [thread:$0]  %s2, 128, %s47, [#allocation7]
    $region13: #{continuous_fully_connected_forward.1} parent=1 // pred_fallthru
      _
    // Predicated region
    $region14: #{continuous_fully_connected_forward.1} parent=1 // pred_check
      _
    $region15: #{continuous_fully_connected_forward.1} parent=1 // pred_check_branch
      %51 = sbr.rel (0) target = $region17
    $region16: #{continuous_fully_connected_forward.1} parent=1 // pred_region
      %52 = dma.done [#allocation4], 768
    $region17: #{continuous_fully_connected_forward.1} parent=1 // pred_fallthru
      _
    // Predicated region
    $region18: #{continuous_fully_connected_forward.1} parent=1 // pred_check
      _
    $region19: #{continuous_fully_connected_forward.1} parent=1 // pred_check_branch
      %54 = sbr.rel (0) target = $region21
    $region20: #{continuous_fully_connected_forward.1} parent=1 // pred_region
      %55 = dma.done [#allocation7], 576
    $region21: #{continuous_fully_connected_forward.1} parent=1 // pred_fallthru
      _
    // Predicated region
    $region22: #{continuous_fully_connected_forward.1} parent=1 // pred_check
      _
    $region23: #{continuous_fully_connected_forward.1} parent=1 // pred_check_branch
      %57 = sbr.rel (0) target = $region25
    $region24: #{continuous_fully_connected_forward.1} parent=1 // pred_region
      %58 = dma.done [#allocation7], 128
    $region25: #{continuous_fully_connected_forward.1} parent=1 // pred_fallthru
      _
    %s59 = ssub.s32 0, 0
    %s60 = smul.u32 8, %s59
    %p62 = scmp.eq.s32.totalorder 0, 0
    // Predicated region
    $region26: #{continuous_fully_connected_forward.1} parent=1 // pred_check
      %p63 = pneg %p62
    $region27: #{continuous_fully_connected_forward.1} parent=1 // pred_check_branch
      %65 = sbr.rel (%p63) target = $region29
    $region28: #{continuous_fully_connected_forward.1} parent=1 // pred_region
      %66 = vst [vmem:[#allocation9] sm:$0xff] 0.0
      %67 = vst [vmem:[#allocation9 + $0x8] sm:$0xff] 0.0
      %68 = vst [vmem:[#allocation9 + $0x10] sm:$0xff] 0.0
      %69 = vst [vmem:[#allocation9 + $0x18] sm:$0xff] 0.0
      %70 = vst [vmem:[#allocation9 + $0x20] sm:$0xff] 0.0
      %71 = vst [vmem:[#allocation9 + $0x28] sm:$0xff] 0.0
    $region29: #{continuous_fully_connected_forward.1} parent=1 // pred_fallthru
      _
    %v72 = vld [vmem:[#allocation6] sm:$0xf]
    %v73 = vld [vmem:[#allocation6 + $0x4] sm:$0xf]
    %v74 = vld [vmem:[#allocation6 + $0x8] sm:$0xf]
    %v75 = vld [vmem:[#allocation6 + $0xc] sm:$0xf]
    %v76 = vld [vmem:[#allocation6 + $0x10] sm:$0xf]
    %v77 = vld [vmem:[#allocation6 + $0x14] sm:$0xf]
    %v78 = vld [vmem:[#allocation6 + $0x18] sm:$0xf]
    %v79 = vld [vmem:[#allocation6 + $0x1c] sm:$0xf]
    %v80 = vld [vmem:[#allocation6 + $0x20] sm:$0xf]
    %v81 = vld [vmem:[#allocation3] sm:$0x3f]
    %v82 = vmax.bf16 %v81, 0
    %v83 = vmin.bf16 %v81, 0
    %v85 = vcombine.high %v82, %v82
    %v87 = vunpack.c.l.s4 1966171168
    %v88 = vunpack.c.0.s8 %v87
    %v89 = vlaneseq
    %v90 = vshrl.u32 %v89, 7
    %v91 = vsub.s32 %v88, %v90
    %v92 = vrot.slane %v82, %v91
    %v94 = vunpack.c.l.s4 1966171168
    %v95 = vunpack.c.0.s8 %v94
    %v96 = vlaneseq
    %v97 = vshrl.u32 %v96, 7
    %v98 = vsub.s32 %v95, %v97
    %v99 = vrot.slane %v85, %v98
    %v100 = vcombine.high %v92, %v92
    %v101 = vcombine.high %v99, %v99
    %v103 = vunpack.c.l.s4 1966171168
    %v104 = vunpack.c.0.s8 %v103
    %v105 = vlaneseq
    %v106 = vshrl.u32 %v105, 7
    %v107 = vsub.s32 %v104, %v106
    %v108 = vrot.slane %v92, %v107
    %v110 = vunpack.c.l.s4 1966171168
    %v111 = vunpack.c.0.s8 %v110
    %v112 = vlaneseq
    %v113 = vshrl.u32 %v112, 7
    %v114 = vsub.s32 %v111, %v113
    %v115 = vrot.slane %v99, %v114
    %v117 = vunpack.c.l.s4 1966171168
    %v118 = vunpack.c.0.s8 %v117
    %v119 = vlaneseq
    %v120 = vshrl.u32 %v119, 7
    %v121 = vsub.s32 %v118, %v120
    %v122 = vrot.slane %v100, %v121
    %v124 = vunpack.c.l.s4 1966171168
    %v125 = vunpack.c.0.s8 %v124
    %v126 = vlaneseq
    %v127 = vshrl.u32 %v126, 7
    %v128 = vsub.s32 %v125, %v127
    %v129 = vrot.slane %v101, %v128
    %v130 = vcombine.high %v108, %v108
    %v131 = vcombine.high %v122, %v122
    %v133 = vcombine.low %v83, %v83
    %v135 = vunpack.c.l.s4 1966171168
    %v136 = vunpack.c.0.s8 %v135
    %v137 = vlaneseq
    %v138 = vshrl.u32 %v137, 7
    %v139 = vsub.s32 %v136, %v138
    %v140 = vrot.slane %v133, %v139
    %v142 = vunpack.c.l.s4 1966171168
    %v143 = vunpack.c.0.s8 %v142
    %v144 = vlaneseq
    %v145 = vshrl.u32 %v144, 7
    %v146 = vsub.s32 %v143, %v145
    %v147 = vrot.slane %v83, %v146
    %v148 = vcombine.high %v140, %v140
    %v149 = vcombine.high %v147, %v147
    %v151 = vunpack.c.l.s4 1966171168
    %v152 = vunpack.c.0.s8 %v151
    %v153 = vlaneseq
    %v154 = vshrl.u32 %v153, 7
    %v155 = vsub.s32 %v152, %v154
    %v156 = vrot.slane %v140, %v155
    %v158 = vunpack.c.l.s4 1966171168
    %v159 = vunpack.c.0.s8 %v158
    %v160 = vlaneseq
    %v161 = vshrl.u32 %v160, 7
    %v162 = vsub.s32 %v159, %v161
    %v163 = vrot.slane %v147, %v162
    %v165 = vunpack.c.l.s4 1966171168
    %v166 = vunpack.c.0.s8 %v165
    %v167 = vlaneseq
    %v168 = vshrl.u32 %v167, 7
    %v169 = vsub.s32 %v166, %v168
    %v170 = vrot.slane %v148, %v169
    %v172 = vunpack.c.l.s4 1966171168
    %v173 = vunpack.c.0.s8 %v172
    %v174 = vlaneseq
    %v175 = vshrl.u32 %v174, 7
    %v176 = vsub.s32 %v173, %v175
    %v177 = vrot.slane %v149, %v176
    %v178 = vcombine.high %v156, %v156
    %v179 = vcombine.high %v170, %v170
    %vm180 = vcmask 1040384
    %v183 = vsel %vm180, %v108, %v156
    %v186 = vsel %vm180, %v122, %v170
    %v189 = vsel %vm180, %v130, %v178
    %v192 = vsel %vm180, %v131, %v179
    %v195 = vsel %vm180, %v115, %v163
    %v198 = vsel %vm180, %v129, %v177
    %v208 = vunpack.c.l.b16 %v72
    %v209 = vunpack.c.l.b16 %v73
    %v210 = vunpack.c.l.b16 %v74
    %v211 = vunpack.c.l.b16 %v75
    %v212 = vunpack.c.l.b16 %v76
    %v213 = vunpack.c.l.b16 %v77
    %v214 = vunpack.c.l.b16 %v78
    %v215 = vunpack.c.l.b16 %v79
    %v216 = vunpack.c.l.b16 %v80
    %v217 = vpack.c.b16 %v209, %v208
    %v218 = vpack.c.b16 %v211, %v210
    %v219 = vpack.c.b16 %v213, %v212
    %v220 = vpack.c.b16 %v215, %v214
    %v221 = vpack.c.b16 %v216, %v216
    %vm222 = vcmask 31744
    %v224 = vsel %vm222, %v217, 0
    %v227 = vsel %vm222, %v218, 0
    %v230 = vsel %vm222, %v219, 0
    %v233 = vsel %vm222, %v220, 0
    %v236 = vsel %vm222, %v221, 0
    %vm238 = vcmask 1041408
    %v239 = vsel %vm238, %v183, 0
    %v241 = vsel %vm238, %v186, 0
    %v243 = vsel %vm238, %v189, 0
    %v245 = vsel %vm238, %v192, 0
    %v247 = vsel %vm238, %v195, 0
    %v249 = vsel %vm238, %v198, 0
    %251 = vmatprep.subr.bf16.mxu0 %v241
    %252 = vmatpush1.bf16.msra.mxu0 %v239
    %253 = vmatprep.subr.bf16.mxu0 0
    %254 = vmatpush1.bf16.msra.mxu0 0
    %255 = vmatprep.subr.bf16.mxu0 0
    %256 = vmatpush1.bf16.msra.mxu0 0
    %257 = vmatprep.subr.bf16.mxu0 0
    %258 = vmatpush1.bf16.msra.mxu0 0
    %259 = vmatprep.subr.bf16.mxu0 0
    %260 = vmatpush1.bf16.msra.mxu0 0
    %261 = vmatprep.subr.bf16.mxu0 0
    %262 = vmatpush1.bf16.msra.mxu0 0
    %263 = vmatprep.subr.bf16.mxu0 0
    %264 = vmatpush1.bf16.msra.mxu0 0
    %265 = vmatprep.subr.bf16.mxu0 0
    %266 = vmatpush1.bf16.msra.mxu0 0
    %267 = vmatprep.subr.bf16.mxu0 0
    %268 = vmatpush1.bf16.msra.mxu0 0
    %269 = vmatprep.subr.bf16.mxu0 0
    %270 = vmatpush1.bf16.msra.mxu0 0
    %271 = vmatprep.subr.bf16.mxu0 0
    %272 = vmatpush1.bf16.msra.mxu0 0
    %273 = vmatprep.subr.bf16.mxu0 0
    %274 = vmatpush1.bf16.msra.mxu0 0
    %275 = vmatprep.subr.bf16.mxu0 0
    %276 = vmatpush1.bf16.msra.mxu0 0
    %277 = vmatprep.subr.bf16.mxu0 0
    %278 = vmatpush1.bf16.msra.mxu0 0
    %279 = vmatprep.subr.bf16.mxu0 0
    %280 = vmatpush1.bf16.msra.mxu0 0
    %281 = vmatprep.subr.bf16.mxu0 0
    %282 = vmatpush1.bf16.msra.mxu0 0
    %283 = vmatprep.mubr.bf16.mxu0 0
    %284 = vmatmul.mubr.bf16.gmra.mrb[0].mxu0 %v224
    %v285 = vpop.f32.mrb[0].mxu0
    %v286 = vadd.f32 0.0, %v285
    %v287 = vpop.f32.mrb[0].mxu0
    %v288 = vadd.f32 0.0, %v287
    %v289 = vpop.f32.mrb[0].mxu0
    %v290 = vadd.f32 0.0, %v289
    %v291 = vpop.f32.mrb[0].mxu0
    %v292 = vadd.f32 0.0, %v291
    %293 = vmatprep.mubr.bf16.mxu0 0
    %294 = vmatmul.mubr.bf16.gmra.mrb[0].mxu0 %v227
    %v295 = vpop.f32.mrb[0].mxu0
    %v296 = vadd.f32 0.0, %v295
    %v297 = vpop.f32.mrb[0].mxu0
    %v298 = vadd.f32 0.0, %v297
    %v299 = vpop.f32.mrb[0].mxu0
    %v300 = vadd.f32 0.0, %v299
    %v301 = vpop.f32.mrb[0].mxu0
    %v302 = vadd.f32 0.0, %v301
    %303 = vmatprep.mubr.bf16.mxu0 0
    %304 = vmatmul.mubr.bf16.gmra.mrb[0].mxu0 %v230
    %v305 = vpop.f32.mrb[0].mxu0
    %v306 = vadd.f32 0.0, %v305
    %v307 = vpop.f32.mrb[0].mxu0
    %v308 = vadd.f32 0.0, %v307
    %v309 = vpop.f32.mrb[0].mxu0
    %v310 = vadd.f32 0.0, %v309
    %v311 = vpop.f32.mrb[0].mxu0
    %v312 = vadd.f32 0.0, %v311
    %313 = vmatprep.mubr.bf16.mxu0 0
    %314 = vmatmul.mubr.bf16.gmra.mrb[0].mxu0 %v233
    %v315 = vpop.f32.mrb[0].mxu0
    %v316 = vadd.f32 0.0, %v315
    %v317 = vpop.f32.mrb[0].mxu0
    %v318 = vadd.f32 0.0, %v317
    %v319 = vpop.f32.mrb[0].mxu0
    %v320 = vadd.f32 0.0, %v319
    %v321 = vpop.f32.mrb[0].mxu0
    %v322 = vadd.f32 0.0, %v321
    %323 = vmatprep.mubr.bf16.mxu0 0
    %324 = vmatmul.mubr.bf16.gmra.mrb[0].mxu0 %v236
    %v325 = vpop.f32.mrb[0].mxu0
    %v326 = vadd.f32 0.0, %v325
    %v327 = vpop.f32.mrb[0].mxu0
    %v328 = vadd.f32 0.0, %v327
    %v329 = vpop.f32.mrb[0].mxu0
    %v330 = vpop.f32.mrb[0].mxu0
    %331 = vdwg.mxu0
    %332 = vmatprep.subr.bf16.mxu0 %v245
    %333 = vmatpush1.bf16.msra.mxu0 %v243
    %334 = vmatprep.subr.bf16.mxu0 0
    %335 = vmatpush1.bf16.msra.mxu0 0
    %336 = vmatprep.subr.bf16.mxu0 0
    %337 = vmatpush1.bf16.msra.mxu0 0
    %338 = vmatprep.subr.bf16.mxu0 0
    %339 = vmatpush1.bf16.msra.mxu0 0
    %340 = vmatprep.subr.bf16.mxu0 0
    %341 = vmatpush1.bf16.msra.mxu0 0
    %342 = vmatprep.subr.bf16.mxu0 0
    %343 = vmatpush1.bf16.msra.mxu0 0
    %344 = vmatprep.subr.bf16.mxu0 0
    %345 = vmatpush1.bf16.msra.mxu0 0
    %346 = vmatprep.subr.bf16.mxu0 0
    %347 = vmatpush1.bf16.msra.mxu0 0
    %348 = vmatprep.subr.bf16.mxu0 0
    %349 = vmatpush1.bf16.msra.mxu0 0
    %350 = vmatprep.subr.bf16.mxu0 0
    %351 = vmatpush1.bf16.msra.mxu0 0
    %352 = vmatprep.subr.bf16.mxu0 0
    %353 = vmatpush1.bf16.msra.mxu0 0
    %354 = vmatprep.subr.bf16.mxu0 0
    %355 = vmatpush1.bf16.msra.mxu0 0
    %356 = vmatprep.subr.bf16.mxu0 0
    %357 = vmatpush1.bf16.msra.mxu0 0
    %358 = vmatprep.subr.bf16.mxu0 0
    %359 = vmatpush1.bf16.msra.mxu0 0
    %360 = vmatprep.subr.bf16.mxu0 0
    %361 = vmatpush1.bf16.msra.mxu0 0
    %362 = vmatprep.subr.bf16.mxu0 0
    %363 = vmatpush1.bf16.msra.mxu0 0
    %364 = vmatprep.mubr.bf16.mxu0 0
    %365 = vmatmul.mubr.bf16.gmra.mrb[0].mxu0 %v224
    %v366 = vpop.f32.mrb[0].mxu0
    %v367 = vadd.f32 0.0, %v366
    %v368 = vpop.f32.mrb[0].mxu0
    %v369 = vadd.f32 0.0, %v368
    %v370 = vpop.f32.mrb[0].mxu0
    %v371 = vadd.f32 0.0, %v370
    %v372 = vpop.f32.mrb[0].mxu0
    %v373 = vadd.f32 0.0, %v372
    %374 = vmatprep.mubr.bf16.mxu0 0
    %375 = vmatmul.mubr.bf16.gmra.mrb[0].mxu0 %v227
    %v376 = vpop.f32.mrb[0].mxu0
    %v377 = vadd.f32 0.0, %v376
    %v378 = vpop.f32.mrb[0].mxu0
    %v379 = vadd.f32 0.0, %v378
    %v380 = vpop.f32.mrb[0].mxu0
    %v381 = vadd.f32 0.0, %v380
    %v382 = vpop.f32.mrb[0].mxu0
    %v383 = vadd.f32 0.0, %v382
    %384 = vmatprep.mubr.bf16.mxu0 0
    %385 = vmatmul.mubr.bf16.gmra.mrb[0].mxu0 %v230
    %v386 = vpop.f32.mrb[0].mxu0
    %v387 = vadd.f32 0.0, %v386
    %v388 = vpop.f32.mrb[0].mxu0
    %v389 = vadd.f32 0.0, %v388
    %v390 = vpop.f32.mrb[0].mxu0
    %v391 = vadd.f32 0.0, %v390
    %v392 = vpop.f32.mrb[0].mxu0
    %v393 = vadd.f32 0.0, %v392
    %394 = vmatprep.mubr.bf16.mxu0 0
    %395 = vmatmul.mubr.bf16.gmra.mrb[0].mxu0 %v233
    %v396 = vpop.f32.mrb[0].mxu0
    %v397 = vadd.f32 0.0, %v396
    %v398 = vpop.f32.mrb[0].mxu0
    %v399 = vadd.f32 0.0, %v398
    %v400 = vpop.f32.mrb[0].mxu0
    %v401 = vadd.f32 0.0, %v400
    %v402 = vpop.f32.mrb[0].mxu0
    %v403 = vadd.f32 0.0, %v402
    %404 = vmatprep.mubr.bf16.mxu0 0
    %405 = vmatmul.mubr.bf16.gmra.mrb[0].mxu0 %v236
    %v406 = vpop.f32.mrb[0].mxu0
    %v407 = vadd.f32 0.0, %v406
    %v408 = vpop.f32.mrb[0].mxu0
    %v409 = vadd.f32 0.0, %v408
    %v410 = vpop.f32.mrb[0].mxu0
    %v411 = vpop.f32.mrb[0].mxu0
    %412 = vdwg.mxu0
    %413 = vmatprep.subr.bf16.mxu0 %v249
    %414 = vmatpush1.bf16.msra.mxu0 %v247
    %415 = vmatprep.subr.bf16.mxu0 0
    %416 = vmatpush1.bf16.msra.mxu0 0
    %417 = vmatprep.subr.bf16.mxu0 0
    %418 = vmatpush1.bf16.msra.mxu0 0
    %419 = vmatprep.subr.bf16.mxu0 0
    %420 = vmatpush1.bf16.msra.mxu0 0
    %421 = vmatprep.subr.bf16.mxu0 0
    %422 = vmatpush1.bf16.msra.mxu0 0
    %423 = vmatprep.subr.bf16.mxu0 0
    %424 = vmatpush1.bf16.msra.mxu0 0
    %425 = vmatprep.subr.bf16.mxu0 0
    %426 = vmatpush1.bf16.msra.mxu0 0
    %427 = vmatprep.subr.bf16.mxu0 0
    %428 = vmatpush1.bf16.msra.mxu0 0
    %429 = vmatprep.subr.bf16.mxu0 0
    %430 = vmatpush1.bf16.msra.mxu0 0
    %431 = vmatprep.subr.bf16.mxu0 0
    %432 = vmatpush1.bf16.msra.mxu0 0
    %433 = vmatprep.subr.bf16.mxu0 0
    %434 = vmatpush1.bf16.msra.mxu0 0
    %435 = vmatprep.subr.bf16.mxu0 0
    %436 = vmatpush1.bf16.msra.mxu0 0
    %437 = vmatprep.subr.bf16.mxu0 0
    %438 = vmatpush1.bf16.msra.mxu0 0
    %439 = vmatprep.subr.bf16.mxu0 0
    %440 = vmatpush1.bf16.msra.mxu0 0
    %441 = vmatprep.subr.bf16.mxu0 0
    %442 = vmatpush1.bf16.msra.mxu0 0
    %443 = vmatprep.subr.bf16.mxu0 0
    %444 = vmatpush1.bf16.msra.mxu0 0
    %445 = vmatprep.mubr.bf16.mxu0 0
    %446 = vmatmul.mubr.bf16.gmra.mrb[0].mxu0 %v224
    %v447 = vpop.f32.mrb[0].mxu0
    %v448 = vadd.f32 0.0, %v447
    %v449 = vpop.f32.mrb[0].mxu0
    %v450 = vadd.f32 0.0, %v449
    %v451 = vpop.f32.mrb[0].mxu0
    %v452 = vadd.f32 0.0, %v451
    %v453 = vpop.f32.mrb[0].mxu0
    %v454 = vadd.f32 0.0, %v453
    %455 = vmatprep.mubr.bf16.mxu0 0
    %456 = vmatmul.mubr.bf16.gmra.mrb[0].mxu0 %v227
    %v457 = vpop.f32.mrb[0].mxu0
    %v458 = vadd.f32 0.0, %v457
    %v459 = vpop.f32.mrb[0].mxu0
    %v460 = vadd.f32 0.0, %v459
    %v461 = vpop.f32.mrb[0].mxu0
    %v462 = vadd.f32 0.0, %v461
    %v463 = vpop.f32.mrb[0].mxu0
    %v464 = vadd.f32 0.0, %v463
    %465 = vmatprep.mubr.bf16.mxu0 0
    %466 = vmatmul.mubr.bf16.gmra.mrb[0].mxu0 %v230
    %v467 = vpop.f32.mrb[0].mxu0
    %v468 = vadd.f32 0.0, %v467
    %v469 = vpop.f32.mrb[0].mxu0
    %v470 = vadd.f32 0.0, %v469
    %v471 = vpop.f32.mrb[0].mxu0
    %v472 = vadd.f32 0.0, %v471
    %v473 = vpop.f32.mrb[0].mxu0
    %v474 = vadd.f32 0.0, %v473
    %475 = vmatprep.mubr.bf16.mxu0 0
    %476 = vmatmul.mubr.bf16.gmra.mrb[0].mxu0 %v233
    %v477 = vpop.f32.mrb[0].mxu0
    %v478 = vadd.f32 0.0, %v477
    %v479 = vpop.f32.mrb[0].mxu0
    %v480 = vadd.f32 0.0, %v479
    %v481 = vpop.f32.mrb[0].mxu0
    %v482 = vadd.f32 0.0, %v481
    %v483 = vpop.f32.mrb[0].mxu0
    %v484 = vadd.f32 0.0, %v483
    %485 = vmatprep.mubr.bf16.mxu0 0
    %486 = vmatmul.mubr.bf16.gmra.mrb[0].mxu0 %v236
    %v487 = vpop.f32.mrb[0].mxu0
    %v488 = vadd.f32 0.0, %v487
    %v489 = vpop.f32.mrb[0].mxu0
    %v490 = vadd.f32 0.0, %v489
    %v491 = vpop.f32.mrb[0].mxu0
    %v492 = vpop.f32.mrb[0].mxu0
    %493 = vdwg.mxu0
    %494 = vrot.lane.b32.xlu0 %v286, 19
    %v495 = vpop.permute.xlu0 %494
    %496 = vrot.lane.b32.xlu0 %v288, 19
    %v497 = vpop.permute.xlu0 %496
    %498 = vrot.lane.b32.xlu0 %v367, 19
    %v499 = vpop.permute.xlu0 %498
    %500 = vrot.lane.b32.xlu0 %v369, 19
    %v501 = vpop.permute.xlu0 %500
    %502 = vrot.lane.b32.xlu0 %v448, 19
    %v503 = vpop.permute.xlu0 %502
    %504 = vrot.lane.b32.xlu0 %v450, 19
    %v505 = vpop.permute.xlu0 %504
    %v506 = vlaneseq
    %v507 = vand.u32 %v506, 127
    %vm508 = vcmp.lt.s32.totalorder %v507, 19
    %v509 = vsel %vm508, %v503, %v505
    %v510 = vsel %vm508, %v501, %v503
    %v511 = vsel %vm508, %v499, %v501
    %v512 = vsel %vm508, %v497, %v499
    %v513 = vsel %vm508, %v495, %v497
    %v514 = vsel %vm508, %v505, %v495
    %515 = vrot.lane.b32.xlu0 %v290, 18
    %v516 = vpop.permute.xlu0 %515
    %517 = vrot.lane.b32.xlu0 %v292, 18
    %v518 = vpop.permute.xlu0 %517
    %519 = vrot.lane.b32.xlu0 %v371, 18
    %v520 = vpop.permute.xlu0 %519
    %521 = vrot.lane.b32.xlu0 %v373, 18
    %v522 = vpop.permute.xlu0 %521
    %523 = vrot.lane.b32.xlu0 %v452, 18
    %v524 = vpop.permute.xlu0 %523
    %525 = vrot.lane.b32.xlu0 %v454, 18
    %v526 = vpop.permute.xlu0 %525
    %vm527 = vcmp.lt.s32.totalorder %v507, 18
    %v528 = vsel %vm527, %v524, %v526
    %v529 = vsel %vm527, %v522, %v524
    %v530 = vsel %vm527, %v520, %v522
    %v531 = vsel %vm527, %v518, %v520
    %v532 = vsel %vm527, %v516, %v518
    %v533 = vsel %vm527, %v526, %v516
    %v534 = vadd.f32 %v514, %v533
    %v535 = vadd.f32 %v513, %v532
    %v536 = vadd.f32 %v512, %v531
    %v537 = vadd.f32 %v511, %v530
    %v538 = vadd.f32 %v510, %v529
    %v539 = vadd.f32 %v509, %v528
    %540 = vrot.lane.b32.xlu0 %v296, 17
    %v541 = vpop.permute.xlu0 %540
    %542 = vrot.lane.b32.xlu0 %v298, 17
    %v543 = vpop.permute.xlu0 %542
    %544 = vrot.lane.b32.xlu0 %v377, 17
    %v545 = vpop.permute.xlu0 %544
    %546 = vrot.lane.b32.xlu0 %v379, 17
    %v547 = vpop.permute.xlu0 %546
    %548 = vrot.lane.b32.xlu0 %v458, 17
    %v549 = vpop.permute.xlu0 %548
    %550 = vrot.lane.b32.xlu0 %v460, 17
    %v551 = vpop.permute.xlu0 %550
    %vm552 = vcmp.lt.s32.totalorder %v507, 17
    %v553 = vsel %vm552, %v549, %v551
    %v554 = vsel %vm552, %v547, %v549
    %v555 = vsel %vm552, %v545, %v547
    %v556 = vsel %vm552, %v543, %v545
    %v557 = vsel %vm552, %v541, %v543
    %v558 = vsel %vm552, %v551, %v541
    %v559 = vadd.f32 %v534, %v558
    %v560 = vadd.f32 %v535, %v557
    %v561 = vadd.f32 %v536, %v556
    %v562 = vadd.f32 %v537, %v555
    %v563 = vadd.f32 %v538, %v554
    %v564 = vadd.f32 %v539, %v553
    %565 = vrot.lane.b32.xlu0 %v300, 1
    %v566 = vpop.permute.xlu0 %565
    %567 = vrot.lane.b32.xlu0 %v302, 1
    %v568 = vpop.permute.xlu0 %567
    %569 = vrot.lane.b32.xlu0 %v381, 1
    %v570 = vpop.permute.xlu0 %569
    %571 = vrot.lane.b32.xlu0 %v383, 1
    %v572 = vpop.permute.xlu0 %571
    %573 = vrot.lane.b32.xlu0 %v462, 1
    %v574 = vpop.permute.xlu0 %573
    %575 = vrot.lane.b32.xlu0 %v464, 1
    %v576 = vpop.permute.xlu0 %575
    %vm577 = vcmp.lt.s32.totalorder %v507, 1
    %v578 = vsel %vm577, %v574, %v576
    %v579 = vsel %vm577, %v572, %v574
    %v580 = vsel %vm577, %v570, %v572
    %v581 = vsel %vm577, %v568, %v570
    %v582 = vsel %vm577, %v566, %v568
    %v583 = vsel %vm577, %v576, %v566
    %v584 = vadd.f32 %v559, %v583
    %v585 = vadd.f32 %v560, %v582
    %v586 = vadd.f32 %v561, %v581
    %v587 = vadd.f32 %v562, %v580
    %v588 = vadd.f32 %v563, %v579
    %v589 = vadd.f32 %v564, %v578
    %v590 = vadd.f32 %v584, %v306
    %v591 = vadd.f32 %v585, %v308
    %v592 = vadd.f32 %v586, %v387
    %v593 = vadd.f32 %v587, %v389
    %v594 = vadd.f32 %v588, %v468
    %v595 = vadd.f32 %v589, %v470
    %596 = vrot.lane.b32.xlu0 %v310, 127
    %v597 = vpop.permute.xlu0 %596
    %598 = vrot.lane.b32.xlu0 %v312, 127
    %v599 = vpop.permute.xlu0 %598
    %600 = vrot.lane.b32.xlu0 %v391, 127
    %v601 = vpop.permute.xlu0 %600
    %602 = vrot.lane.b32.xlu0 %v393, 127
    %v603 = vpop.permute.xlu0 %602
    %604 = vrot.lane.b32.xlu0 %v472, 127
    %v605 = vpop.permute.xlu0 %604
    %606 = vrot.lane.b32.xlu0 %v474, 127
    %v607 = vpop.permute.xlu0 %606
    %vm608 = vcmp.lt.s32.totalorder %v507, 127
    %v609 = vsel %vm608, %v605, %v607
    %v610 = vsel %vm608, %v603, %v605
    %v611 = vsel %vm608, %v601, %v603
    %v612 = vsel %vm608, %v599, %v601
    %v613 = vsel %vm608, %v597, %v599
    %v614 = vsel %vm608, %v607, %v597
    %v615 = vadd.f32 %v590, %v613
    %v616 = vadd.f32 %v591, %v612
    %v617 = vadd.f32 %v592, %v611
    %v618 = vadd.f32 %v593, %v610
    %v619 = vadd.f32 %v594, %v609
    %v620 = vadd.f32 %v595, %v614
    %621 = vrot.lane.b32.xlu0 %v316, 111
    %v622 = vpop.permute.xlu0 %621
    %623 = vrot.lane.b32.xlu0 %v318, 111
    %v624 = vpop.permute.xlu0 %623
    %625 = vrot.lane.b32.xlu0 %v397, 111
    %v626 = vpop.permute.xlu0 %625
    %627 = vrot.lane.b32.xlu0 %v399, 111
    %v628 = vpop.permute.xlu0 %627
    %629 = vrot.lane.b32.xlu0 %v478, 111
    %v630 = vpop.permute.xlu0 %629
    %631 = vrot.lane.b32.xlu0 %v480, 111
    %v632 = vpop.permute.xlu0 %631
    %vm633 = vcmp.lt.s32.totalorder %v507, 111
    %v634 = vsel %vm633, %v630, %v632
    %v635 = vsel %vm633, %v628, %v630
    %v636 = vsel %vm633, %v626, %v628
    %v637 = vsel %vm633, %v624, %v626
    %v638 = vsel %vm633, %v622, %v624
    %v639 = vsel %vm633, %v632, %v622
    %v640 = vadd.f32 %v615, %v638
    %v641 = vadd.f32 %v616, %v637
    %v642 = vadd.f32 %v617, %v636
    %v643 = vadd.f32 %v618, %v635
    %v644 = vadd.f32 %v619, %v634
    %v645 = vadd.f32 %v620, %v639
    %646 = vrot.lane.b32.xlu0 %v320, 110
    %v647 = vpop.permute.xlu0 %646
    %648 = vrot.lane.b32.xlu0 %v322, 110
    %v649 = vpop.permute.xlu0 %648
    %650 = vrot.lane.b32.xlu0 %v401, 110
    %v651 = vpop.permute.xlu0 %650
    %652 = vrot.lane.b32.xlu0 %v403, 110
    %v653 = vpop.permute.xlu0 %652
    %654 = vrot.lane.b32.xlu0 %v482, 110
    %v655 = vpop.permute.xlu0 %654
    %656 = vrot.lane.b32.xlu0 %v484, 110
    %v657 = vpop.permute.xlu0 %656
    %vm658 = vcmp.lt.s32.totalorder %v507, 110
    %v659 = vsel %vm658, %v655, %v657
    %v660 = vsel %vm658, %v653, %v655
    %v661 = vsel %vm658, %v651, %v653
    %v662 = vsel %vm658, %v649, %v651
    %v663 = vsel %vm658, %v647, %v649
    %v664 = vsel %vm658, %v657, %v647
    %v665 = vadd.f32 %v640, %v663
    %v666 = vadd.f32 %v641, %v662
    %v667 = vadd.f32 %v642, %v661
    %v668 = vadd.f32 %v643, %v660
    %v669 = vadd.f32 %v644, %v659
    %v670 = vadd.f32 %v645, %v664
    %671 = vrot.lane.b32.xlu0 %v326, 109
    %v672 = vpop.permute.xlu0 %671
    %673 = vrot.lane.b32.xlu0 %v328, 109
    %v674 = vpop.permute.xlu0 %673
    %675 = vrot.lane.b32.xlu0 %v407, 109
    %v676 = vpop.permute.xlu0 %675
    %677 = vrot.lane.b32.xlu0 %v409, 109
    %v678 = vpop.permute.xlu0 %677
    %679 = vrot.lane.b32.xlu0 %v488, 109
    %v680 = vpop.permute.xlu0 %679
    %681 = vrot.lane.b32.xlu0 %v490, 109
    %v682 = vpop.permute.xlu0 %681
    %vm683 = vcmp.lt.s32.totalorder %v507, 109
    %v684 = vsel %vm683, %v680, %v682
    %v685 = vsel %vm683, %v678, %v680
    %v686 = vsel %vm683, %v676, %v678
    %v687 = vsel %vm683, %v674, %v676
    %v688 = vsel %vm683, %v672, %v674
    %v689 = vsel %vm683, %v682, %v672
    %v690 = vadd.f32 %v665, %v688
    %v691 = vadd.f32 %v666, %v687
    %v692 = vadd.f32 %v667, %v686
    %v693 = vadd.f32 %v668, %v685
    %v694 = vadd.f32 %v669, %v684
    %v695 = vadd.f32 %v670, %v689
    %696 = vst [vmem:[#allocation2] sm:$0xff] %v690
    %697 = vst [vmem:[#allocation2 + $0x8] sm:$0xff] %v691
    %698 = vst [vmem:[#allocation2 + $0x10] sm:$0xff] %v692
    %699 = vst [vmem:[#allocation2 + $0x18] sm:$0xff] %v693
    %700 = vst [vmem:[#allocation2 + $0x20] sm:$0xff] %v694
    %701 = vst [vmem:[#allocation2 + $0x28] sm:$0xff] %v695
    %s702 = scalar_lea.vmem [#allocation3], 6
    %v703 = vld [vmem:[%s702] sm:$0x3f]
    %v704 = vmax.bf16 %v703, 0
    %v705 = vmin.bf16 %v703, 0
    %v707 = vcombine.high %v704, %v704
    %v709 = vunpack.c.l.s4 1966171168
    %v710 = vunpack.c.0.s8 %v709
    %v711 = vlaneseq
    %v712 = vshrl.u32 %v711, 7
    %v713 = vsub.s32 %v710, %v712
    %v714 = vrot.slane %v704, %v713
    %v716 = vunpack.c.l.s4 1966171168
    %v717 = vunpack.c.0.s8 %v716
    %v718 = vlaneseq
    %v719 = vshrl.u32 %v718, 7
    %v720 = vsub.s32 %v717, %v719
    %v721 = vrot.slane %v707, %v720
    %v722 = vcombine.high %v714, %v714
    %v723 = vcombine.high %v721, %v721
    %v725 = vunpack.c.l.s4 1966171168
    %v726 = vunpack.c.0.s8 %v725
    %v727 = vlaneseq
    %v728 = vshrl.u32 %v727, 7
    %v729 = vsub.s32 %v726, %v728
    %v730 = vrot.slane %v714, %v729
    %v732 = vunpack.c.l.s4 1966171168
    %v733 = vunpack.c.0.s8 %v732
    %v734 = vlaneseq
    %v735 = vshrl.u32 %v734, 7
    %v736 = vsub.s32 %v733, %v735
    %v737 = vrot.slane %v721, %v736
    %v739 = vunpack.c.l.s4 1966171168
    %v740 = vunpack.c.0.s8 %v739
    %v741 = vlaneseq
    %v742 = vshrl.u32 %v741, 7
    %v743 = vsub.s32 %v740, %v742
    %v744 = vrot.slane %v722, %v743
    %v746 = vunpack.c.l.s4 1966171168
    %v747 = vunpack.c.0.s8 %v746
    %v748 = vlaneseq
    %v749 = vshrl.u32 %v748, 7
    %v750 = vsub.s32 %v747, %v749
    %v751 = vrot.slane %v723, %v750
    %v752 = vcombine.high %v730, %v730
    %v753 = vcombine.high %v744, %v744
    %v755 = vcombine.low %v705, %v705
    %v757 = vunpack.c.l.s4 1966171168
    %v758 = vunpack.c.0.s8 %v757
    %v759 = vlaneseq
    %v760 = vshrl.u32 %v759, 7
    %v761 = vsub.s32 %v758, %v760
    %v762 = vrot.slane %v755, %v761
    %v764 = vunpack.c.l.s4 1966171168
    %v765 = vunpack.c.0.s8 %v764
    %v766 = vlaneseq
    %v767 = vshrl.u32 %v766, 7
    %v768 = vsub.s32 %v765, %v767
    %v769 = vrot.slane %v705, %v768
    %v770 = vcombine.high %v762, %v762
    %v771 = vcombine.high %v769, %v769
    %v773 = vunpack.c.l.s4 1966171168
    %v774 = vunpack.c.0.s8 %v773
    %v775 = vlaneseq
    %v776 = vshrl.u32 %v775, 7
    %v777 = vsub.s32 %v774, %v776
    %v778 = vrot.slane %v762, %v777
    %v780 = vunpack.c.l.s4 1966171168
    %v781 = vunpack.c.0.s8 %v780
    %v782 = vlaneseq
    %v783 = vshrl.u32 %v782, 7
    %v784 = vsub.s32 %v781, %v783
    %v785 = vrot.slane %v769, %v784
    %v787 = vunpack.c.l.s4 1966171168
    %v788 = vunpack.c.0.s8 %v787
    %v789 = vlaneseq
    %v790 = vshrl.u32 %v789, 7
    %v791 = vsub.s32 %v788, %v790
    %v792 = vrot.slane %v770, %v791
    %v794 = vunpack.c.l.s4 1966171168
    %v795 = vunpack.c.0.s8 %v794
    %v796 = vlaneseq
    %v797 = vshrl.u32 %v796, 7
    %v798 = vsub.s32 %v795, %v797
    %v799 = vrot.slane %v771, %v798
    %v800 = vcombine.high %v778, %v778
    %v801 = vcombine.high %v792, %v792
    %v804 = vsel %vm180, %v730, %v778
    %v807 = vsel %vm180, %v744, %v792
    %v810 = vsel %vm180, %v752, %v800
    %v813 = vsel %vm180, %v753, %v801
    %v816 = vsel %vm180, %v737, %v785
    %v819 = vsel %vm180, %v751, %v799
    %v820 = vsel %vm238, %v804, 0
    %v822 = vsel %vm238, %v807, 0
    %v824 = vsel %vm238, %v810, 0
    %v826 = vsel %vm238, %v813, 0
    %v828 = vsel %vm238, %v816, 0
    %v830 = vsel %vm238, %v819, 0
    %832 = vmatprep.subr.bf16.mxu0 %v822
    %833 = vmatpush1.bf16.msra.mxu0 %v820
    %834 = vmatprep.subr.bf16.mxu0 0
    %835 = vmatpush1.bf16.msra.mxu0 0
    %836 = vmatprep.subr.bf16.mxu0 0
    %837 = vmatpush1.bf16.msra.mxu0 0
    %838 = vmatprep.subr.bf16.mxu0 0
    %839 = vmatpush1.bf16.msra.mxu0 0
    %840 = vmatprep.subr.bf16.mxu0 0
    %841 = vmatpush1.bf16.msra.mxu0 0
    %842 = vmatprep.subr.bf16.mxu0 0
    %843 = vmatpush1.bf16.msra.mxu0 0
    %844 = vmatprep.subr.bf16.mxu0 0
    %845 = vmatpush1.bf16.msra.mxu0 0
    %846 = vmatprep.subr.bf16.mxu0 0
    %847 = vmatpush1.bf16.msra.mxu0 0
    %848 = vmatprep.subr.bf16.mxu0 0
    %849 = vmatpush1.bf16.msra.mxu0 0
    %850 = vmatprep.subr.bf16.mxu0 0
    %851 = vmatpush1.bf16.msra.mxu0 0
    %852 = vmatprep.subr.bf16.mxu0 0
    %853 = vmatpush1.bf16.msra.mxu0 0
    %854 = vmatprep.subr.bf16.mxu0 0
    %855 = vmatpush1.bf16.msra.mxu0 0
    %856 = vmatprep.subr.bf16.mxu0 0
    %857 = vmatpush1.bf16.msra.mxu0 0
    %858 = vmatprep.subr.bf16.mxu0 0
    %859 = vmatpush1.bf16.msra.mxu0 0
    %860 = vmatprep.subr.bf16.mxu0 0
    %861 = vmatpush1.bf16.msra.mxu0 0
    %862 = vmatprep.subr.bf16.mxu0 0
    %863 = vmatpush1.bf16.msra.mxu0 0
    %864 = vmatprep.mubr.bf16.mxu0 0
    %865 = vmatmul.mubr.bf16.gmra.mrb[0].mxu0 %v224
    %v866 = vpop.f32.mrb[0].mxu0
    %v867 = vadd.f32 0.0, %v866
    %v868 = vpop.f32.mrb[0].mxu0
    %v869 = vadd.f32 0.0, %v868
    %v870 = vpop.f32.mrb[0].mxu0
    %v871 = vadd.f32 0.0, %v870
    %v872 = vpop.f32.mrb[0].mxu0
    %v873 = vadd.f32 0.0, %v872
    %874 = vmatprep.mubr.bf16.mxu0 0
    %875 = vmatmul.mubr.bf16.gmra.mrb[0].mxu0 %v227
    %v876 = vpop.f32.mrb[0].mxu0
    %v877 = vadd.f32 0.0, %v876
    %v878 = vpop.f32.mrb[0].mxu0
    %v879 = vadd.f32 0.0, %v878
    %v880 = vpop.f32.mrb[0].mxu0
    %v881 = vadd.f32 0.0, %v880
    %v882 = vpop.f32.mrb[0].mxu0
    %v883 = vadd.f32 0.0, %v882
    %884 = vmatprep.mubr.bf16.mxu0 0
    %885 = vmatmul.mubr.bf16.gmra.mrb[0].mxu0 %v230
    %v886 = vpop.f32.mrb[0].mxu0
    %v887 = vadd.f32 0.0, %v886
    %v888 = vpop.f32.mrb[0].mxu0
    %v889 = vadd.f32 0.0, %v888
    %v890 = vpop.f32.mrb[0].mxu0
    %v891 = vadd.f32 0.0, %v890
    %v892 = vpop.f32.mrb[0].mxu0
    %v893 = vadd.f32 0.0, %v892
    %894 = vmatprep.mubr.bf16.mxu0 0
    %895 = vmatmul.mubr.bf16.gmra.mrb[0].mxu0 %v233
    %v896 = vpop.f32.mrb[0].mxu0
    %v897 = vadd.f32 0.0, %v896
    %v898 = vpop.f32.mrb[0].mxu0
    %v899 = vadd.f32 0.0, %v898
    %v900 = vpop.f32.mrb[0].mxu0
    %v901 = vadd.f32 0.0, %v900
    %v902 = vpop.f32.mrb[0].mxu0
    %v903 = vadd.f32 0.0, %v902
    %904 = vmatprep.mubr.bf16.mxu0 0
    %905 = vmatmul.mubr.bf16.gmra.mrb[0].mxu0 %v236
    %v906 = vpop.f32.mrb[0].mxu0
    %v907 = vadd.f32 0.0, %v906
    %v908 = vpop.f32.mrb[0].mxu0
    %v909 = vadd.f32 0.0, %v908
    %v910 = vpop.f32.mrb[0].mxu0
    %v911 = vpop.f32.mrb[0].mxu0
    %912 = vdwg.mxu0
    %913 = vmatprep.subr.bf16.mxu0 %v826
    %914 = vmatpush1.bf16.msra.mxu0 %v824
    %915 = vmatprep.subr.bf16.mxu0 0
    %916 = vmatpush1.bf16.msra.mxu0 0
    %917 = vmatprep.subr.bf16.mxu0 0
    %918 = vmatpush1.bf16.msra.mxu0 0
    %919 = vmatprep.subr.bf16.mxu0 0
    %920 = vmatpush1.bf16.msra.mxu0 0
    %921 = vmatprep.subr.bf16.mxu0 0
    %922 = vmatpush1.bf16.msra.mxu0 0
    %923 = vmatprep.subr.bf16.mxu0 0
    %924 = vmatpush1.bf16.msra.mxu0 0
    %925 = vmatprep.subr.bf16.mxu0 0
    %926 = vmatpush1.bf16.msra.mxu0 0
    %927 = vmatprep.subr.bf16.mxu0 0
    %928 = vmatpush1.bf16.msra.mxu0 0
    %929 = vmatprep.subr.bf16.mxu0 0
    %930 = vmatpush1.bf16.msra.mxu0 0
    %931 = vmatprep.subr.bf16.mxu0 0
    %932 = vmatpush1.bf16.msra.mxu0 0
    %933 = vmatprep.subr.bf16.mxu0 0
    %934 = vmatpush1.bf16.msra.mxu0 0
    %935 = vmatprep.subr.bf16.mxu0 0
    %936 = vmatpush1.bf16.msra.mxu0 0
    %937 = vmatprep.subr.bf16.mxu0 0
    %938 = vmatpush1.bf16.msra.mxu0 0
    %939 = vmatprep.subr.bf16.mxu0 0
    %940 = vmatpush1.bf16.msra.mxu0 0
    %941 = vmatprep.subr.bf16.mxu0 0
    %942 = vmatpush1.bf16.msra.mxu0 0
    %943 = vmatprep.subr.bf16.mxu0 0
    %944 = vmatpush1.bf16.msra.mxu0 0
    %945 = vmatprep.mubr.bf16.mxu0 0
    %946 = vmatmul.mubr.bf16.gmra.mrb[0].mxu0 %v224
    %v947 = vpop.f32.mrb[0].mxu0
    %v948 = vadd.f32 0.0, %v947
    %v949 = vpop.f32.mrb[0].mxu0
    %v950 = vadd.f32 0.0, %v949
    %v951 = vpop.f32.mrb[0].mxu0
    %v952 = vadd.f32 0.0, %v951
    %v953 = vpop.f32.mrb[0].mxu0
    %v954 = vadd.f32 0.0, %v953
    %955 = vmatprep.mubr.bf16.mxu0 0
    %956 = vmatmul.mubr.bf16.gmra.mrb[0].mxu0 %v227
    %v957 = vpop.f32.mrb[0].mxu0
    %v958 = vadd.f32 0.0, %v957
    %v959 = vpop.f32.mrb[0].mxu0
    %v960 = vadd.f32 0.0, %v959
    %v961 = vpop.f32.mrb[0].mxu0
    %v962 = vadd.f32 0.0, %v961
    %v963 = vpop.f32.mrb[0].mxu0
    %v964 = vadd.f32 0.0, %v963
    %965 = vmatprep.mubr.bf16.mxu0 0
    %966 = vmatmul.mubr.bf16.gmra.mrb[0].mxu0 %v230
    %v967 = vpop.f32.mrb[0].mxu0
    %v968 = vadd.f32 0.0, %v967
    %v969 = vpop.f32.mrb[0].mxu0
    %v970 = vadd.f32 0.0, %v969
    %v971 = vpop.f32.mrb[0].mxu0
    %v972 = vadd.f32 0.0, %v971
    %v973 = vpop.f32.mrb[0].mxu0
    %v974 = vadd.f32 0.0, %v973
    %975 = vmatprep.mubr.bf16.mxu0 0
    %976 = vmatmul.mubr.bf16.gmra.mrb[0].mxu0 %v233
    %v977 = vpop.f32.mrb[0].mxu0
    %v978 = vadd.f32 0.0, %v977
    %v979 = vpop.f32.mrb[0].mxu0
    %v980 = vadd.f32 0.0, %v979
    %v981 = vpop.f32.mrb[0].mxu0
    %v982 = vadd.f32 0.0, %v981
    %v983 = vpop.f32.mrb[0].mxu0
    %v984 = vadd.f32 0.0, %v983
    %985 = vmatprep.mubr.bf16.mxu0 0
    %986 = vmatmul.mubr.bf16.gmra.mrb[0].mxu0 %v236
    %v987 = vpop.f32.mrb[0].mxu0
    %v988 = vadd.f32 0.0, %v987
    %v989 = vpop.f32.mrb[0].mxu0
    %v990 = vadd.f32 0.0, %v989
    %v991 = vpop.f32.mrb[0].mxu0
    %v992 = vpop.f32.mrb[0].mxu0
    %993 = vdwg.mxu0
    %994 = vmatprep.subr.bf16.mxu0 %v830
    %995 = vmatpush1.bf16.msra.mxu0 %v828
    %996 = vmatprep.subr.bf16.mxu0 0
    %997 = vmatpush1.bf16.msra.mxu0 0
    %998 = vmatprep.subr.bf16.mxu0 0
    %999 = vmatpush1.bf16.msra.mxu0 0
    %1000 = vmatprep.subr.bf16.mxu0 0
    %1001 = vmatpush1.bf16.msra.mxu0 0
    %1002 = vmatprep.subr.bf16.mxu0 0
    %1003 = vmatpush1.bf16.msra.mxu0 0
    %1004 = vmatprep.subr.bf16.mxu0 0
    %1005 = vmatpush1.bf16.msra.mxu0 0
    %1006 = vmatprep.subr.bf16.mxu0 0
    %1007 = vmatpush1.bf16.msra.mxu0 0
    %1008 = vmatprep.subr.bf16.mxu0 0
    %1009 = vmatpush1.bf16.msra.mxu0 0
    %1010 = vmatprep.subr.bf16.mxu0 0
    %1011 = vmatpush1.bf16.msra.mxu0 0
    %1012 = vmatprep.subr.bf16.mxu0 0
    %1013 = vmatpush1.bf16.msra.mxu0 0
    %1014 = vmatprep.subr.bf16.mxu0 0
    %1015 = vmatpush1.bf16.msra.mxu0 0
    %1016 = vmatprep.subr.bf16.mxu0 0
    %1017 = vmatpush1.bf16.msra.mxu0 0
    %1018 = vmatprep.subr.bf16.mxu0 0
    %1019 = vmatpush1.bf16.msra.mxu0 0
    %1020 = vmatprep.subr.bf16.mxu0 0
    %1021 = vmatpush1.bf16.msra.mxu0 0
    %1022 = vmatprep.subr.bf16.mxu0 0
    %1023 = vmatpush1.bf16.msra.mxu0 0
    %1024 = vmatprep.subr.bf16.mxu0 0
    %1025 = vmatpush1.bf16.msra.mxu0 0
    %1026 = vmatprep.mubr.bf16.mxu0 0
    %1027 = vmatmul.mubr.bf16.gmra.mrb[0].mxu0 %v224
    %v1028 = vpop.f32.mrb[0].mxu0
    %v1029 = vadd.f32 0.0, %v1028
    %v1030 = vpop.f32.mrb[0].mxu0
    %v1031 = vadd.f32 0.0, %v1030
    %v1032 = vpop.f32.mrb[0].mxu0
    %v1033 = vadd.f32 0.0, %v1032
    %v1034 = vpop.f32.mrb[0].mxu0
    %v1035 = vadd.f32 0.0, %v1034
    %1036 = vmatprep.mubr.bf16.mxu0 0
    %1037 = vmatmul.mubr.bf16.gmra.mrb[0].mxu0 %v227
    %v1038 = vpop.f32.mrb[0].mxu0
    %v1039 = vadd.f32 0.0, %v1038
    %v1040 = vpop.f32.mrb[0].mxu0
    %v1041 = vadd.f32 0.0, %v1040
    %v1042 = vpop.f32.mrb[0].mxu0
    %v1043 = vadd.f32 0.0, %v1042
    %v1044 = vpop.f32.mrb[0].mxu0
    %v1045 = vadd.f32 0.0, %v1044
    %1046 = vmatprep.mubr.bf16.mxu0 0
    %1047 = vmatmul.mubr.bf16.gmra.mrb[0].mxu0 %v230
    %v1048 = vpop.f32.mrb[0].mxu0
    %v1049 = vadd.f32 0.0, %v1048
    %v1050 = vpop.f32.mrb[0].mxu0
    %v1051 = vadd.f32 0.0, %v1050
    %v1052 = vpop.f32.mrb[0].mxu0
    %v1053 = vadd.f32 0.0, %v1052
    %v1054 = vpop.f32.mrb[0].mxu0
    %v1055 = vadd.f32 0.0, %v1054
    %1056 = vmatprep.mubr.bf16.mxu0 0
    %1057 = vmatmul.mubr.bf16.gmra.mrb[0].mxu0 %v233
    %v1058 = vpop.f32.mrb[0].mxu0
    %v1059 = vadd.f32 0.0, %v1058
    %v1060 = vpop.f32.mrb[0].mxu0
    %v1061 = vadd.f32 0.0, %v1060
    %v1062 = vpop.f32.mrb[0].mxu0
    %v1063 = vadd.f32 0.0, %v1062
    %v1064 = vpop.f32.mrb[0].mxu0
    %v1065 = vadd.f32 0.0, %v1064
    %1066 = vmatprep.mubr.bf16.mxu0 0
    %1067 = vmatmul.mubr.bf16.gmra.mrb[0].mxu0 %v236
    %v1068 = vpop.f32.mrb[0].mxu0
    %v1069 = vadd.f32 0.0, %v1068
    %v1070 = vpop.f32.mrb[0].mxu0
    %v1071 = vadd.f32 0.0, %v1070
    %v1072 = vpop.f32.mrb[0].mxu0
    %v1073 = vpop.f32.mrb[0].mxu0
    %1074 = vdwg.mxu0
    %1075 = vrot.lane.b32.xlu0 %v867, 19
    %v1076 = vpop.permute.xlu0 %1075
    %1077 = vrot.lane.b32.xlu0 %v869, 19
    %v1078 = vpop.permute.xlu0 %1077
    %1079 = vrot.lane.b32.xlu0 %v948, 19
    %v1080 = vpop.permute.xlu0 %1079
    %1081 = vrot.lane.b32.xlu0 %v950, 19
    %v1082 = vpop.permute.xlu0 %1081
    %1083 = vrot.lane.b32.xlu0 %v1029, 19
    %v1084 = vpop.permute.xlu0 %1083
    %1085 = vrot.lane.b32.xlu0 %v1031, 19
    %v1086 = vpop.permute.xlu0 %1085
    %v1087 = vsel %vm508, %v1084, %v1086
    %v1088 = vsel %vm508, %v1082, %v1084
    %v1089 = vsel %vm508, %v1080, %v1082
    %v1090 = vsel %vm508, %v1078, %v1080
    %v1091 = vsel %vm508, %v1076, %v1078
    %v1092 = vsel %vm508, %v1086, %v1076
    %1093 = vrot.lane.b32.xlu0 %v871, 18
    %v1094 = vpop.permute.xlu0 %1093
    %1095 = vrot.lane.b32.xlu0 %v873, 18
    %v1096 = vpop.permute.xlu0 %1095
    %1097 = vrot.lane.b32.xlu0 %v952, 18
    %v1098 = vpop.permute.xlu0 %1097
    %1099 = vrot.lane.b32.xlu0 %v954, 18
    %v1100 = vpop.permute.xlu0 %1099
    %1101 = vrot.lane.b32.xlu0 %v1033, 18
    %v1102 = vpop.permute.xlu0 %1101
    %1103 = vrot.lane.b32.xlu0 %v1035, 18
    %v1104 = vpop.permute.xlu0 %1103
    %v1105 = vsel %vm527, %v1102, %v1104
    %v1106 = vsel %vm527, %v1100, %v1102
    %v1107 = vsel %vm527, %v1098, %v1100
    %v1108 = vsel %vm527, %v1096, %v1098
    %v1109 = vsel %vm527, %v1094, %v1096
    %v1110 = vsel %vm527, %v1104, %v1094
    %v1111 = vadd.f32 %v1092, %v1110
    %v1112 = vadd.f32 %v1091, %v1109
    %v1113 = vadd.f32 %v1090, %v1108
    %v1114 = vadd.f32 %v1089, %v1107
    %v1115 = vadd.f32 %v1088, %v1106
    %v1116 = vadd.f32 %v1087, %v1105
    %1117 = vrot.lane.b32.xlu0 %v877, 17
    %v1118 = vpop.permute.xlu0 %1117
    %1119 = vrot.lane.b32.xlu0 %v879, 17
    %v1120 = vpop.permute.xlu0 %1119
    %1121 = vrot.lane.b32.xlu0 %v958, 17
    %v1122 = vpop.permute.xlu0 %1121
    %1123 = vrot.lane.b32.xlu0 %v960, 17
    %v1124 = vpop.permute.xlu0 %1123
    %1125 = vrot.lane.b32.xlu0 %v1039, 17
    %v1126 = vpop.permute.xlu0 %1125
    %1127 = vrot.lane.b32.xlu0 %v1041, 17
    %v1128 = vpop.permute.xlu0 %1127
    %v1129 = vsel %vm552, %v1126, %v1128
    %v1130 = vsel %vm552, %v1124, %v1126
    %v1131 = vsel %vm552, %v1122, %v1124
    %v1132 = vsel %vm552, %v1120, %v1122
    %v1133 = vsel %vm552, %v1118, %v1120
    %v1134 = vsel %vm552, %v1128, %v1118
    %v1135 = vadd.f32 %v1111, %v1134
    %v1136 = vadd.f32 %v1112, %v1133
    %v1137 = vadd.f32 %v1113, %v1132
    %v1138 = vadd.f32 %v1114, %v1131
    %v1139 = vadd.f32 %v1115, %v1130
    %v1140 = vadd.f32 %v1116, %v1129
    %1141 = vrot.lane.b32.xlu0 %v881, 1
    %v1142 = vpop.permute.xlu0 %1141
    %1143 = vrot.lane.b32.xlu0 %v883, 1
    %v1144 = vpop.permute.xlu0 %1143
    %1145 = vrot.lane.b32.xlu0 %v962, 1
    %v1146 = vpop.permute.xlu0 %1145
    %1147 = vrot.lane.b32.xlu0 %v964, 1
    %v1148 = vpop.permute.xlu0 %1147
    %1149 = vrot.lane.b32.xlu0 %v1043, 1
    %v1150 = vpop.permute.xlu0 %1149
    %1151 = vrot.lane.b32.xlu0 %v1045, 1
    %v1152 = vpop.permute.xlu0 %1151
    %v1153 = vsel %vm577, %v1150, %v1152
    %v1154 = vsel %vm577, %v1148, %v1150
    %v1155 = vsel %vm577, %v1146, %v1148
    %v1156 = vsel %vm577, %v1144, %v1146
    %v1157 = vsel %vm577, %v1142, %v1144
    %v1158 = vsel %vm577, %v1152, %v1142
    %v1159 = vadd.f32 %v1135, %v1158
    %v1160 = vadd.f32 %v1136, %v1157
    %v1161 = vadd.f32 %v1137, %v1156
    %v1162 = vadd.f32 %v1138, %v1155
    %v1163 = vadd.f32 %v1139, %v1154
    %v1164 = vadd.f32 %v1140, %v1153
    %v1165 = vadd.f32 %v1159, %v887
    %v1166 = vadd.f32 %v1160, %v889
    %v1167 = vadd.f32 %v1161, %v968
    %v1168 = vadd.f32 %v1162, %v970
    %v1169 = vadd.f32 %v1163, %v1049
    %v1170 = vadd.f32 %v1164, %v1051
    %1171 = vrot.lane.b32.xlu0 %v891, 127
    %v1172 = vpop.permute.xlu0 %1171
    %1173 = vrot.lane.b32.xlu0 %v893, 127
    %v1174 = vpop.permute.xlu0 %1173
    %1175 = vrot.lane.b32.xlu0 %v972, 127
    %v1176 = vpop.permute.xlu0 %1175
    %1177 = vrot.lane.b32.xlu0 %v974, 127
    %v1178 = vpop.permute.xlu0 %1177
    %1179 = vrot.lane.b32.xlu0 %v1053, 127
    %v1180 = vpop.permute.xlu0 %1179
    %1181 = vrot.lane.b32.xlu0 %v1055, 127
    %v1182 = vpop.permute.xlu0 %1181
    %v1183 = vsel %vm608, %v1180, %v1182
    %v1184 = vsel %vm608, %v1178, %v1180
    %v1185 = vsel %vm608, %v1176, %v1178
    %v1186 = vsel %vm608, %v1174, %v1176
    %v1187 = vsel %vm608, %v1172, %v1174
    %v1188 = vsel %vm608, %v1182, %v1172
    %v1189 = vadd.f32 %v1165, %v1187
    %v1190 = vadd.f32 %v1166, %v1186
    %v1191 = vadd.f32 %v1167, %v1185
    %v1192 = vadd.f32 %v1168, %v1184
    %v1193 = vadd.f32 %v1169, %v1183
    %v1194 = vadd.f32 %v1170, %v1188
    %1195 = vrot.lane.b32.xlu0 %v897, 111
    %v1196 = vpop.permute.xlu0 %1195
    %1197 = vrot.lane.b32.xlu0 %v899, 111
    %v1198 = vpop.permute.xlu0 %1197
    %1199 = vrot.lane.b32.xlu0 %v978, 111
    %v1200 = vpop.permute.xlu0 %1199
    %1201 = vrot.lane.b32.xlu0 %v980, 111
    %v1202 = vpop.permute.xlu0 %1201
    %1203 = vrot.lane.b32.xlu0 %v1059, 111
    %v1204 = vpop.permute.xlu0 %1203
    %1205 = vrot.lane.b32.xlu0 %v1061, 111
    %v1206 = vpop.permute.xlu0 %1205
    %v1207 = vsel %vm633, %v1204, %v1206
    %v1208 = vsel %vm633, %v1202, %v1204
    %v1209 = vsel %vm633, %v1200, %v1202
    %v1210 = vsel %vm633, %v1198, %v1200
    %v1211 = vsel %vm633, %v1196, %v1198
    %v1212 = vsel %vm633, %v1206, %v1196
    %v1213 = vadd.f32 %v1189, %v1211
    %v1214 = vadd.f32 %v1190, %v1210
    %v1215 = vadd.f32 %v1191, %v1209
    %v1216 = vadd.f32 %v1192, %v1208
    %v1217 = vadd.f32 %v1193, %v1207
    %v1218 = vadd.f32 %v1194, %v1212
    %1219 = vrot.lane.b32.xlu0 %v901, 110
    %v1220 = vpop.permute.xlu0 %1219
    %1221 = vrot.lane.b32.xlu0 %v903, 110
    %v1222 = vpop.permute.xlu0 %1221
    %1223 = vrot.lane.b32.xlu0 %v982, 110
    %v1224 = vpop.permute.xlu0 %1223
    %1225 = vrot.lane.b32.xlu0 %v984, 110
    %v1226 = vpop.permute.xlu0 %1225
    %1227 = vrot.lane.b32.xlu0 %v1063, 110
    %v1228 = vpop.permute.xlu0 %1227
    %1229 = vrot.lane.b32.xlu0 %v1065, 110
    %v1230 = vpop.permute.xlu0 %1229
    %v1231 = vsel %vm658, %v1228, %v1230
    %v1232 = vsel %vm658, %v1226, %v1228
    %v1233 = vsel %vm658, %v1224, %v1226
    %v1234 = vsel %vm658, %v1222, %v1224
    %v1235 = vsel %vm658, %v1220, %v1222
    %v1236 = vsel %vm658, %v1230, %v1220
    %v1237 = vadd.f32 %v1213, %v1235
    %v1238 = vadd.f32 %v1214, %v1234
    %v1239 = vadd.f32 %v1215, %v1233
    %v1240 = vadd.f32 %v1216, %v1232
    %v1241 = vadd.f32 %v1217, %v1231
    %v1242 = vadd.f32 %v1218, %v1236
    %1243 = vrot.lane.b32.xlu0 %v907, 109
    %v1244 = vpop.permute.xlu0 %1243
    %1245 = vrot.lane.b32.xlu0 %v909, 109
    %v1246 = vpop.permute.xlu0 %1245
    %1247 = vrot.lane.b32.xlu0 %v988, 109
    %v1248 = vpop.permute.xlu0 %1247
    %1249 = vrot.lane.b32.xlu0 %v990, 109
    %v1250 = vpop.permute.xlu0 %1249
    %1251 = vrot.lane.b32.xlu0 %v1069, 109
    %v1252 = vpop.permute.xlu0 %1251
    %1253 = vrot.lane.b32.xlu0 %v1071, 109
    %v1254 = vpop.permute.xlu0 %1253
    %v1255 = vsel %vm683, %v1252, %v1254
    %v1256 = vsel %vm683, %v1250, %v1252
    %v1257 = vsel %vm683, %v1248, %v1250
    %v1258 = vsel %vm683, %v1246, %v1248
    %v1259 = vsel %vm683, %v1244, %v1246
    %v1260 = vsel %vm683, %v1254, %v1244
    %v1261 = vadd.f32 %v1237, %v1259
    %v1262 = vadd.f32 %v1238, %v1258
    %v1263 = vadd.f32 %v1239, %v1257
    %v1264 = vadd.f32 %v1240, %v1256
    %v1265 = vadd.f32 %v1241, %v1255
    %v1266 = vadd.f32 %v1242, %v1260
    %s1267 = scalar_lea.vmem [#allocation2], 48
    %1268 = vst [vmem:[%s1267] sm:$0xff] %v1261
    %1269 = vst [vmem:[%s1267 + $0x8] sm:$0xff] %v1262
    %1270 = vst [vmem:[%s1267 + $0x10] sm:$0xff] %v1263
    %1271 = vst [vmem:[%s1267 + $0x18] sm:$0xff] %v1264
    %1272 = vst [vmem:[%s1267 + $0x20] sm:$0xff] %v1265
    %1273 = vst [vmem:[%s1267 + $0x28] sm:$0xff] %v1266
    %s1274 = scalar_lea.vmem [#allocation3], 12
    %v1275 = vld [vmem:[%s1274] sm:$0x3f]
    %v1276 = vmax.bf16 %v1275, 0
    %v1277 = vmin.bf16 %v1275, 0
    %v1279 = vcombine.high %v1276, %v1276
    %v1281 = vunpack.c.l.s4 1966171168
    %v1282 = vunpack.c.0.s8 %v1281
    %v1283 = vlaneseq
    %v1284 = vshrl.u32 %v1283, 7
    %v1285 = vsub.s32 %v1282, %v1284
    %v1286 = vrot.slane %v1276, %v1285
    %v1288 = vunpack.c.l.s4 1966171168
    %v1289 = vunpack.c.0.s8 %v1288
    %v1290 = vlaneseq
    %v1291 = vshrl.u32 %v1290, 7
    %v1292 = vsub.s32 %v1289, %v1291
    %v1293 = vrot.slane %v1279, %v1292
    %v1294 = vcombine.high %v1286, %v1286
    %v1295 = vcombine.high %v1293, %v1293
    %v1297 = vunpack.c.l.s4 1966171168
    %v1298 = vunpack.c.0.s8 %v1297
    %v1299 = vlaneseq
    %v1300 = vshrl.u32 %v1299, 7
    %v1301 = vsub.s32 %v1298, %v1300
    %v1302 = vrot.slane %v1286, %v1301
    %v1304 = vunpack.c.l.s4 1966171168
    %v1305 = vunpack.c.0.s8 %v1304
    %v1306 = vlaneseq
    %v1307 = vshrl.u32 %v1306, 7
    %v1308 = vsub.s32 %v1305, %v1307
    %v1309 = vrot.slane %v1293, %v1308
    %v1311 = vunpack.c.l.s4 1966171168
    %v1312 = vunpack.c.0.s8 %v1311
    %v1313 = vlaneseq
    %v1314 = vshrl.u32 %v1313, 7
    %v1315 = vsub.s32 %v1312, %v1314
    %v1316 = vrot.slane %v1294, %v1315
    %v1318 = vunpack.c.l.s4 1966171168
    %v1319 = vunpack.c.0.s8 %v1318
    %v1320 = vlaneseq
    %v1321 = vshrl.u32 %v1320, 7
    %v1322 = vsub.s32 %v1319, %v1321
    %v1323 = vrot.slane %v1295, %v1322
    %v1324 = vcombine.high %v1302, %v1302
    %v1325 = vcombine.high %v1316, %v1316
    %v1327 = vcombine.low %v1277, %v1277
    %v1329 = vunpack.c.l.s4 1966171168
    %v1330 = vunpack.c.0.s8 %v1329
    %v1331 = vlaneseq
    %v1332 = vshrl.u32 %v1331, 7
    %v1333 = vsub.s32 %v1330, %v1332
    %v1334 = vrot.slane %v1327, %v1333
    %v1336 = vunpack.c.l.s4 1966171168
    %v1337 = vunpack.c.0.s8 %v1336
    %v1338 = vlaneseq
    %v1339 = vshrl.u32 %v1338, 7
    %v1340 = vsub.s32 %v1337, %v1339
    %v1341 = vrot.slane %v1277, %v1340
    %v1342 = vcombine.high %v1334, %v1334
    %v1343 = vcombine.high %v1341, %v1341
    %v1345 = vunpack.c.l.s4 1966171168
    %v1346 = vunpack.c.0.s8 %v1345
    %v1347 = vlaneseq
    %v1348 = vshrl.u32 %v1347, 7
    %v1349 = vsub.s32 %v1346, %v1348
    %v1350 = vrot.slane %v1334, %v1349
    %v1352 = vunpack.c.l.s4 1966171168
    %v1353 = vunpack.c.0.s8 %v1352
    %v1354 = vlaneseq
    %v1355 = vshrl.u32 %v1354, 7
    %v1356 = vsub.s32 %v1353, %v1355
    %v1357 = vrot.slane %v1341, %v1356
    %v1359 = vunpack.c.l.s4 1966171168
    %v1360 = vunpack.c.0.s8 %v1359
    %v1361 = vlaneseq
    %v1362 = vshrl.u32 %v1361, 7
    %v1363 = vsub.s32 %v1360, %v1362
    %v1364 = vrot.slane %v1342, %v1363
    %v1366 = vunpack.c.l.s4 1966171168
    %v1367 = vunpack.c.0.s8 %v1366
    %v1368 = vlaneseq
    %v1369 = vshrl.u32 %v1368, 7
    %v1370 = vsub.s32 %v1367, %v1369
    %v1371 = vrot.slane %v1343, %v1370
    %v1372 = vcombine.high %v1350, %v1350
    %v1373 = vcombine.high %v1364, %v1364
    %v1376 = vsel %vm180, %v1302, %v1350
    %v1379 = vsel %vm180, %v1316, %v1364
    %v1382 = vsel %vm180, %v1324, %v1372
    %v1385 = vsel %vm180, %v1325, %v1373
    %v1388 = vsel %vm180, %v1309, %v1357
    %v1391 = vsel %vm180, %v1323, %v1371
    %v1392 = vsel %vm238, %v1376, 0
    %v1394 = vsel %vm238, %v1379, 0
    %v1396 = vsel %vm238, %v1382, 0
    %v1398 = vsel %vm238, %v1385, 0
    %v1400 = vsel %vm238, %v1388, 0
    %v1402 = vsel %vm238, %v1391, 0
    %1404 = vmatprep.subr.bf16.mxu0 %v1394
    %1405 = vmatpush1.bf16.msra.mxu0 %v1392
    %1406 = vmatprep.subr.bf16.mxu0 0
    %1407 = vmatpush1.bf16.msra.mxu0 0
    %1408 = vmatprep.subr.bf16.mxu0 0
    %1409 = vmatpush1.bf16.msra.mxu0 0
    %1410 = vmatprep.subr.bf16.mxu0 0
    %1411 = vmatpush1.bf16.msra.mxu0 0
    %1412 = vmatprep.subr.bf16.mxu0 0
    %1413 = vmatpush1.bf16.msra.mxu0 0
    %1414 = vmatprep.subr.bf16.mxu0 0
    %1415 = vmatpush1.bf16.msra.mxu0 0
    %1416 = vmatprep.subr.bf16.mxu0 0
    %1417 = vmatpush1.bf16.msra.mxu0 0
    %1418 = vmatprep.subr.bf16.mxu0 0
    %1419 = vmatpush1.bf16.msra.mxu0 0
    %1420 = vmatprep.subr.bf16.mxu0 0
    %1421 = vmatpush1.bf16.msra.mxu0 0
    %1422 = vmatprep.subr.bf16.mxu0 0
    %1423 = vmatpush1.bf16.msra.mxu0 0
    %1424 = vmatprep.subr.bf16.mxu0 0
    %1425 = vmatpush1.bf16.msra.mxu0 0
    %1426 = vmatprep.subr.bf16.mxu0 0
    %1427 = vmatpush1.bf16.msra.mxu0 0
    %1428 = vmatprep.subr.bf16.mxu0 0
    %1429 = vmatpush1.bf16.msra.mxu0 0
    %1430 = vmatprep.subr.bf16.mxu0 0
    %1431 = vmatpush1.bf16.msra.mxu0 0
    %1432 = vmatprep.subr.bf16.mxu0 0
    %1433 = vmatpush1.bf16.msra.mxu0 0
    %1434 = vmatprep.subr.bf16.mxu0 0
    %1435 = vmatpush1.bf16.msra.mxu0 0
    %1436 = vmatprep.mubr.bf16.mxu0 0
    %1437 = vmatmul.mubr.bf16.gmra.mrb[0].mxu0 %v224
    %v1438 = vpop.f32.mrb[0].mxu0
    %v1439 = vadd.f32 0.0, %v1438
    %v1440 = vpop.f32.mrb[0].mxu0
    %v1441 = vadd.f32 0.0, %v1440
    %v1442 = vpop.f32.mrb[0].mxu0
    %v1443 = vadd.f32 0.0, %v1442
    %v1444 = vpop.f32.mrb[0].mxu0
    %v1445 = vadd.f32 0.0, %v1444
    %1446 = vmatprep.mubr.bf16.mxu0 0
    %1447 = vmatmul.mubr.bf16.gmra.mrb[0].mxu0 %v227
    %v1448 = vpop.f32.mrb[0].mxu0
    %v1449 = vadd.f32 0.0, %v1448
    %v1450 = vpop.f32.mrb[0].mxu0
    %v1451 = vadd.f32 0.0, %v1450
    %v1452 = vpop.f32.mrb[0].mxu0
    %v1453 = vadd.f32 0.0, %v1452
    %v1454 = vpop.f32.mrb[0].mxu0
    %v1455 = vadd.f32 0.0, %v1454
    %1456 = vmatprep.mubr.bf16.mxu0 0
    %1457 = vmatmul.mubr.bf16.gmra.mrb[0].mxu0 %v230
    %v1458 = vpop.f32.mrb[0].mxu0
    %v1459 = vadd.f32 0.0, %v1458
    %v1460 = vpop.f32.mrb[0].mxu0
    %v1461 = vadd.f32 0.0, %v1460
    %v1462 = vpop.f32.mrb[0].mxu0
    %v1463 = vadd.f32 0.0, %v1462
    %v1464 = vpop.f32.mrb[0].mxu0
    %v1465 = vadd.f32 0.0, %v1464
    %1466 = vmatprep.mubr.bf16.mxu0 0
    %1467 = vmatmul.mubr.bf16.gmra.mrb[0].mxu0 %v233
    %v1468 = vpop.f32.mrb[0].mxu0
    %v1469 = vadd.f32 0.0, %v1468
    %v1470 = vpop.f32.mrb[0].mxu0
    %v1471 = vadd.f32 0.0, %v1470
    %v1472 = vpop.f32.mrb[0].mxu0
    %v1473 = vadd.f32 0.0, %v1472
    %v1474 = vpop.f32.mrb[0].mxu0
    %v1475 = vadd.f32 0.0, %v1474
    %1476 = vmatprep.mubr.bf16.mxu0 0
    %1477 = vmatmul.mubr.bf16.gmra.mrb[0].mxu0 %v236
    %v1478 = vpop.f32.mrb[0].mxu0
    %v1479 = vadd.f32 0.0, %v1478
    %v1480 = vpop.f32.mrb[0].mxu0
    %v1481 = vadd.f32 0.0, %v1480
    %v1482 = vpop.f32.mrb[0].mxu0
    %v1483 = vpop.f32.mrb[0].mxu0
    %1484 = vdwg.mxu0
    %1485 = vmatprep.subr.bf16.mxu0 %v1398
    %1486 = vmatpush1.bf16.msra.mxu0 %v1396
    %1487 = vmatprep.subr.bf16.mxu0 0
    %1488 = vmatpush1.bf16.msra.mxu0 0
    %1489 = vmatprep.subr.bf16.mxu0 0
    %1490 = vmatpush1.bf16.msra.mxu0 0
    %1491 = vmatprep.subr.bf16.mxu0 0
    %1492 = vmatpush1.bf16.msra.mxu0 0
    %1493 = vmatprep.subr.bf16.mxu0 0
    %1494 = vmatpush1.bf16.msra.mxu0 0
    %1495 = vmatprep.subr.bf16.mxu0 0
    %1496 = vmatpush1.bf16.msra.mxu0 0
    %1497 = vmatprep.subr.bf16.mxu0 0
    %1498 = vmatpush1.bf16.msra.mxu0 0
    %1499 = vmatprep.subr.bf16.mxu0 0
    %1500 = vmatpush1.bf16.msra.mxu0 0
    %1501 = vmatprep.subr.bf16.mxu0 0
    %1502 = vmatpush1.bf16.msra.mxu0 0
    %1503 = vmatprep.subr.bf16.mxu0 0
    %1504 = vmatpush1.bf16.msra.mxu0 0
    %1505 = vmatprep.subr.bf16.mxu0 0
    %1506 = vmatpush1.bf16.msra.mxu0 0
    %1507 = vmatprep.subr.bf16.mxu0 0
    %1508 = vmatpush1.bf16.msra.mxu0 0
    %1509 = vmatprep.subr.bf16.mxu0 0
    %1510 = vmatpush1.bf16.msra.mxu0 0
    %1511 = vmatprep.subr.bf16.mxu0 0
    %1512 = vmatpush1.bf16.msra.mxu0 0
    %1513 = vmatprep.subr.bf16.mxu0 0
    %1514 = vmatpush1.bf16.msra.mxu0 0
    %1515 = vmatprep.subr.bf16.mxu0 0
    %1516 = vmatpush1.bf16.msra.mxu0 0
    %1517 = vmatprep.mubr.bf16.mxu0 0
    %1518 = vmatmul.mubr.bf16.gmra.mrb[0].mxu0 %v224
    %v1519 = vpop.f32.mrb[0].mxu0
    %v1520 = vadd.f32 0.0, %v1519
    %v1521 = vpop.f32.mrb[0].mxu0
    %v1522 = vadd.f32 0.0, %v1521
    %v1523 = vpop.f32.mrb[0].mxu0
    %v1524 = vadd.f32 0.0, %v1523
    %v1525 = vpop.f32.mrb[0].mxu0
    %v1526 = vadd.f32 0.0, %v1525
    %1527 = vmatprep.mubr.bf16.mxu0 0
    %1528 = vmatmul.mubr.bf16.gmra.mrb[0].mxu0 %v227
    %v1529 = vpop.f32.mrb[0].mxu0
    %v1530 = vadd.f32 0.0, %v1529
    %v1531 = vpop.f32.mrb[0].mxu0
    %v1532 = vadd.f32 0.0, %v1531
    %v1533 = vpop.f32.mrb[0].mxu0
    %v1534 = vadd.f32 0.0, %v1533
    %v1535 = vpop.f32.mrb[0].mxu0
    %v1536 = vadd.f32 0.0, %v1535
    %1537 = vmatprep.mubr.bf16.mxu0 0
    %1538 = vmatmul.mubr.bf16.gmra.mrb[0].mxu0 %v230
    %v1539 = vpop.f32.mrb[0].mxu0
    %v1540 = vadd.f32 0.0, %v1539
    %v1541 = vpop.f32.mrb[0].mxu0
    %v1542 = vadd.f32 0.0, %v1541
    %v1543 = vpop.f32.mrb[0].mxu0
    %v1544 = vadd.f32 0.0, %v1543
    %v1545 = vpop.f32.mrb[0].mxu0
    %v1546 = vadd.f32 0.0, %v1545
    %1547 = vmatprep.mubr.bf16.mxu0 0
    %1548 = vmatmul.mubr.bf16.gmra.mrb[0].mxu0 %v233
    %v1549 = vpop.f32.mrb[0].mxu0
    %v1550 = vadd.f32 0.0, %v1549
    %v1551 = vpop.f32.mrb[0].mxu0
    %v1552 = vadd.f32 0.0, %v1551
    %v1553 = vpop.f32.mrb[0].mxu0
    %v1554 = vadd.f32 0.0, %v1553
    %v1555 = vpop.f32.mrb[0].mxu0
    %v1556 = vadd.f32 0.0, %v1555
    %1557 = vmatprep.mubr.bf16.mxu0 0
    %1558 = vmatmul.mubr.bf16.gmra.mrb[0].mxu0 %v236
    %v1559 = vpop.f32.mrb[0].mxu0
    %v1560 = vadd.f32 0.0, %v1559
    %v1561 = vpop.f32.mrb[0].mxu0
    %v1562 = vadd.f32 0.0, %v1561
    %v1563 = vpop.f32.mrb[0].mxu0
    %v1564 = vpop.f32.mrb[0].mxu0
    %1565 = vdwg.mxu0
    %1566 = vmatprep.subr.bf16.mxu0 %v1402
    %1567 = vmatpush1.bf16.msra.mxu0 %v1400
    %1568 = vmatprep.subr.bf16.mxu0 0
    %1569 = vmatpush1.bf16.msra.mxu0 0
    %1570 = vmatprep.subr.bf16.mxu0 0
    %1571 = vmatpush1.bf16.msra.mxu0 0
    %1572 = vmatprep.subr.bf16.mxu0 0
    %1573 = vmatpush1.bf16.msra.mxu0 0
    %1574 = vmatprep.subr.bf16.mxu0 0
    %1575 = vmatpush1.bf16.msra.mxu0 0
    %1576 = vmatprep.subr.bf16.mxu0 0
    %1577 = vmatpush1.bf16.msra.mxu0 0
    %1578 = vmatprep.subr.bf16.mxu0 0
    %1579 = vmatpush1.bf16.msra.mxu0 0
    %1580 = vmatprep.subr.bf16.mxu0 0
    %1581 = vmatpush1.bf16.msra.mxu0 0
    %1582 = vmatprep.subr.bf16.mxu0 0
    %1583 = vmatpush1.bf16.msra.mxu0 0
    %1584 = vmatprep.subr.bf16.mxu0 0
    %1585 = vmatpush1.bf16.msra.mxu0 0
    %1586 = vmatprep.subr.bf16.mxu0 0
    %1587 = vmatpush1.bf16.msra.mxu0 0
    %1588 = vmatprep.subr.bf16.mxu0 0
    %1589 = vmatpush1.bf16.msra.mxu0 0
    %1590 = vmatprep.subr.bf16.mxu0 0
    %1591 = vmatpush1.bf16.msra.mxu0 0
    %1592 = vmatprep.subr.bf16.mxu0 0
    %1593 = vmatpush1.bf16.msra.mxu0 0
    %1594 = vmatprep.subr.bf16.mxu0 0
    %1595 = vmatpush1.bf16.msra.mxu0 0
    %1596 = vmatprep.subr.bf16.mxu0 0
    %1597 = vmatpush1.bf16.msra.mxu0 0
    %1598 = vmatprep.mubr.bf16.mxu0 0
    %1599 = vmatmul.mubr.bf16.gmra.mrb[0].mxu0 %v224
    %v1600 = vpop.f32.mrb[0].mxu0
    %v1601 = vadd.f32 0.0, %v1600
    %v1602 = vpop.f32.mrb[0].mxu0
    %v1603 = vadd.f32 0.0, %v1602
    %v1604 = vpop.f32.mrb[0].mxu0
    %v1605 = vadd.f32 0.0, %v1604
    %v1606 = vpop.f32.mrb[0].mxu0
    %v1607 = vadd.f32 0.0, %v1606
    %1608 = vmatprep.mubr.bf16.mxu0 0
    %1609 = vmatmul.mubr.bf16.gmra.mrb[0].mxu0 %v227
    %v1610 = vpop.f32.mrb[0].mxu0
    %v1611 = vadd.f32 0.0, %v1610
    %v1612 = vpop.f32.mrb[0].mxu0
    %v1613 = vadd.f32 0.0, %v1612
    %v1614 = vpop.f32.mrb[0].mxu0
    %v1615 = vadd.f32 0.0, %v1614
    %v1616 = vpop.f32.mrb[0].mxu0
    %v1617 = vadd.f32 0.0, %v1616
    %1618 = vmatprep.mubr.bf16.mxu0 0
    %1619 = vmatmul.mubr.bf16.gmra.mrb[0].mxu0 %v230
    %v1620 = vpop.f32.mrb[0].mxu0
    %v1621 = vadd.f32 0.0, %v1620
    %v1622 = vpop.f32.mrb[0].mxu0
    %v1623 = vadd.f32 0.0, %v1622
    %v1624 = vpop.f32.mrb[0].mxu0
    %v1625 = vadd.f32 0.0, %v1624
    %v1626 = vpop.f32.mrb[0].mxu0
    %v1627 = vadd.f32 0.0, %v1626
    %1628 = vmatprep.mubr.bf16.mxu0 0
    %1629 = vmatmul.mubr.bf16.gmra.mrb[0].mxu0 %v233
    %v1630 = vpop.f32.mrb[0].mxu0
    %v1631 = vadd.f32 0.0, %v1630
    %v1632 = vpop.f32.mrb[0].mxu0
    %v1633 = vadd.f32 0.0, %v1632
    %v1634 = vpop.f32.mrb[0].mxu0
    %v1635 = vadd.f32 0.0, %v1634
    %v1636 = vpop.f32.mrb[0].mxu0
    %v1637 = vadd.f32 0.0, %v1636
    %1638 = vmatprep.mubr.bf16.mxu0 0
    %1639 = vmatmul.mubr.bf16.gmra.mrb[0].mxu0 %v236
    %v1640 = vpop.f32.mrb[0].mxu0
    %v1641 = vadd.f32 0.0, %v1640
    %v1642 = vpop.f32.mrb[0].mxu0
    %v1643 = vadd.f32 0.0, %v1642
    %v1644 = vpop.f32.mrb[0].mxu0
    %v1645 = vpop.f32.mrb[0].mxu0
    %1646 = vdwg.mxu0
    %1647 = vrot.lane.b32.xlu0 %v1439, 19
    %v1648 = vpop.permute.xlu0 %1647
    %1649 = vrot.lane.b32.xlu0 %v1441, 19
    %v1650 = vpop.permute.xlu0 %1649
    %1651 = vrot.lane.b32.xlu0 %v1520, 19
    %v1652 = vpop.permute.xlu0 %1651
    %1653 = vrot.lane.b32.xlu0 %v1522, 19
    %v1654 = vpop.permute.xlu0 %1653
    %1655 = vrot.lane.b32.xlu0 %v1601, 19
    %v1656 = vpop.permute.xlu0 %1655
    %1657 = vrot.lane.b32.xlu0 %v1603, 19
    %v1658 = vpop.permute.xlu0 %1657
    %v1659 = vsel %vm508, %v1656, %v1658
    %v1660 = vsel %vm508, %v1654, %v1656
    %v1661 = vsel %vm508, %v1652, %v1654
    %v1662 = vsel %vm508, %v1650, %v1652
    %v1663 = vsel %vm508, %v1648, %v1650
    %v1664 = vsel %vm508, %v1658, %v1648
    %1665 = vrot.lane.b32.xlu0 %v1443, 18
    %v1666 = vpop.permute.xlu0 %1665
    %1667 = vrot.lane.b32.xlu0 %v1445, 18
    %v1668 = vpop.permute.xlu0 %1667
    %1669 = vrot.lane.b32.xlu0 %v1524, 18
    %v1670 = vpop.permute.xlu0 %1669
    %1671 = vrot.lane.b32.xlu0 %v1526, 18
    %v1672 = vpop.permute.xlu0 %1671
    %1673 = vrot.lane.b32.xlu0 %v1605, 18
    %v1674 = vpop.permute.xlu0 %1673
    %1675 = vrot.lane.b32.xlu0 %v1607, 18
    %v1676 = vpop.permute.xlu0 %1675
    %v1677 = vsel %vm527, %v1674, %v1676
    %v1678 = vsel %vm527, %v1672, %v1674
    %v1679 = vsel %vm527, %v1670, %v1672
    %v1680 = vsel %vm527, %v1668, %v1670
    %v1681 = vsel %vm527, %v1666, %v1668
    %v1682 = vsel %vm527, %v1676, %v1666
    %v1683 = vadd.f32 %v1664, %v1682
    %v1684 = vadd.f32 %v1663, %v1681
    %v1685 = vadd.f32 %v1662, %v1680
    %v1686 = vadd.f32 %v1661, %v1679
    %v1687 = vadd.f32 %v1660, %v1678
    %v1688 = vadd.f32 %v1659, %v1677
    %1689 = vrot.lane.b32.xlu0 %v1449, 17
    %v1690 = vpop.permute.xlu0 %1689
    %1691 = vrot.lane.b32.xlu0 %v1451, 17
    %v1692 = vpop.permute.xlu0 %1691
    %1693 = vrot.lane.b32.xlu0 %v1530, 17
    %v1694 = vpop.permute.xlu0 %1693
    %1695 = vrot.lane.b32.xlu0 %v1532, 17
    %v1696 = vpop.permute.xlu0 %1695
    %1697 = vrot.lane.b32.xlu0 %v1611, 17
    %v1698 = vpop.permute.xlu0 %1697
    %1699 = vrot.lane.b32.xlu0 %v1613, 17
    %v1700 = vpop.permute.xlu0 %1699
    %v1701 = vsel %vm552, %v1698, %v1700
    %v1702 = vsel %vm552, %v1696, %v1698
    %v1703 = vsel %vm552, %v1694, %v1696
    %v1704 = vsel %vm552, %v1692, %v1694
    %v1705 = vsel %vm552, %v1690, %v1692
    %v1706 = vsel %vm552, %v1700, %v1690
    %v1707 = vadd.f32 %v1683, %v1706
    %v1708 = vadd.f32 %v1684, %v1705
    %v1709 = vadd.f32 %v1685, %v1704
    %v1710 = vadd.f32 %v1686, %v1703
    %v1711 = vadd.f32 %v1687, %v1702
    %v1712 = vadd.f32 %v1688, %v1701
    %1713 = vrot.lane.b32.xlu0 %v1453, 1
    %v1714 = vpop.permute.xlu0 %1713
    %1715 = vrot.lane.b32.xlu0 %v1455, 1
    %v1716 = vpop.permute.xlu0 %1715
    %1717 = vrot.lane.b32.xlu0 %v1534, 1
    %v1718 = vpop.permute.xlu0 %1717
    %1719 = vrot.lane.b32.xlu0 %v1536, 1
    %v1720 = vpop.permute.xlu0 %1719
    %1721 = vrot.lane.b32.xlu0 %v1615, 1
    %v1722 = vpop.permute.xlu0 %1721
    %1723 = vrot.lane.b32.xlu0 %v1617, 1
    %v1724 = vpop.permute.xlu0 %1723
    %v1725 = vsel %vm577, %v1722, %v1724
    %v1726 = vsel %vm577, %v1720, %v1722
    %v1727 = vsel %vm577, %v1718, %v1720
    %v1728 = vsel %vm577, %v1716, %v1718
    %v1729 = vsel %vm577, %v1714, %v1716
    %v1730 = vsel %vm577, %v1724, %v1714
    %v1731 = vadd.f32 %v1707, %v1730
    %v1732 = vadd.f32 %v1708, %v1729
    %v1733 = vadd.f32 %v1709, %v1728
    %v1734 = vadd.f32 %v1710, %v1727
    %v1735 = vadd.f32 %v1711, %v1726
    %v1736 = vadd.f32 %v1712, %v1725
    %v1737 = vadd.f32 %v1731, %v1459
    %v1738 = vadd.f32 %v1732, %v1461
    %v1739 = vadd.f32 %v1733, %v1540
    %v1740 = vadd.f32 %v1734, %v1542
    %v1741 = vadd.f32 %v1735, %v1621
    %v1742 = vadd.f32 %v1736, %v1623
    %1743 = vrot.lane.b32.xlu0 %v1463, 127
    %v1744 = vpop.permute.xlu0 %1743
    %1745 = vrot.lane.b32.xlu0 %v1465, 127
    %v1746 = vpop.permute.xlu0 %1745
    %1747 = vrot.lane.b32.xlu0 %v1544, 127
    %v1748 = vpop.permute.xlu0 %1747
    %1749 = vrot.lane.b32.xlu0 %v1546, 127
    %v1750 = vpop.permute.xlu0 %1749
    %1751 = vrot.lane.b32.xlu0 %v1625, 127
    %v1752 = vpop.permute.xlu0 %1751
    %1753 = vrot.lane.b32.xlu0 %v1627, 127
    %v1754 = vpop.permute.xlu0 %1753
    %v1755 = vsel %vm608, %v1752, %v1754
    %v1756 = vsel %vm608, %v1750, %v1752
    %v1757 = vsel %vm608, %v1748, %v1750
    %v1758 = vsel %vm608, %v1746, %v1748
    %v1759 = vsel %vm608, %v1744, %v1746
    %v1760 = vsel %vm608, %v1754, %v1744
    %v1761 = vadd.f32 %v1737, %v1759
    %v1762 = vadd.f32 %v1738, %v1758
    %v1763 = vadd.f32 %v1739, %v1757
    %v1764 = vadd.f32 %v1740, %v1756
    %v1765 = vadd.f32 %v1741, %v1755
    %v1766 = vadd.f32 %v1742, %v1760
    %1767 = vrot.lane.b32.xlu0 %v1469, 111
    %v1768 = vpop.permute.xlu0 %1767
    %1769 = vrot.lane.b32.xlu0 %v1471, 111
    %v1770 = vpop.permute.xlu0 %1769
    %1771 = vrot.lane.b32.xlu0 %v1550, 111
    %v1772 = vpop.permute.xlu0 %1771
    %1773 = vrot.lane.b32.xlu0 %v1552, 111
    %v1774 = vpop.permute.xlu0 %1773
    %1775 = vrot.lane.b32.xlu0 %v1631, 111
    %v1776 = vpop.permute.xlu0 %1775
    %1777 = vrot.lane.b32.xlu0 %v1633, 111
    %v1778 = vpop.permute.xlu0 %1777
    %v1779 = vsel %vm633, %v1776, %v1778
    %v1780 = vsel %vm633, %v1774, %v1776
    %v1781 = vsel %vm633, %v1772, %v1774
    %v1782 = vsel %vm633, %v1770, %v1772
    %v1783 = vsel %vm633, %v1768, %v1770
    %v1784 = vsel %vm633, %v1778, %v1768
    %v1785 = vadd.f32 %v1761, %v1783
    %v1786 = vadd.f32 %v1762, %v1782
    %v1787 = vadd.f32 %v1763, %v1781
    %v1788 = vadd.f32 %v1764, %v1780
    %v1789 = vadd.f32 %v1765, %v1779
    %v1790 = vadd.f32 %v1766, %v1784
    %1791 = vrot.lane.b32.xlu0 %v1473, 110
    %v1792 = vpop.permute.xlu0 %1791
    %1793 = vrot.lane.b32.xlu0 %v1475, 110
    %v1794 = vpop.permute.xlu0 %1793
    %1795 = vrot.lane.b32.xlu0 %v1554, 110
    %v1796 = vpop.permute.xlu0 %1795
    %1797 = vrot.lane.b32.xlu0 %v1556, 110
    %v1798 = vpop.permute.xlu0 %1797
    %1799 = vrot.lane.b32.xlu0 %v1635, 110
    %v1800 = vpop.permute.xlu0 %1799
    %1801 = vrot.lane.b32.xlu0 %v1637, 110
    %v1802 = vpop.permute.xlu0 %1801
    %v1803 = vsel %vm658, %v1800, %v1802
    %v1804 = vsel %vm658, %v1798, %v1800
    %v1805 = vsel %vm658, %v1796, %v1798
    %v1806 = vsel %vm658, %v1794, %v1796
    %v1807 = vsel %vm658, %v1792, %v1794
    %v1808 = vsel %vm658, %v1802, %v1792
    %v1809 = vadd.f32 %v1785, %v1807
    %v1810 = vadd.f32 %v1786, %v1806
    %v1811 = vadd.f32 %v1787, %v1805
    %v1812 = vadd.f32 %v1788, %v1804
    %v1813 = vadd.f32 %v1789, %v1803
    %v1814 = vadd.f32 %v1790, %v1808
    %1815 = vrot.lane.b32.xlu0 %v1479, 109
    %v1816 = vpop.permute.xlu0 %1815
    %1817 = vrot.lane.b32.xlu0 %v1481, 109
    %v1818 = vpop.permute.xlu0 %1817
    %1819 = vrot.lane.b32.xlu0 %v1560, 109
    %v1820 = vpop.permute.xlu0 %1819
    %1821 = vrot.lane.b32.xlu0 %v1562, 109
    %v1822 = vpop.permute.xlu0 %1821
    %1823 = vrot.lane.b32.xlu0 %v1641, 109
    %v1824 = vpop.permute.xlu0 %1823
    %1825 = vrot.lane.b32.xlu0 %v1643, 109
    %v1826 = vpop.permute.xlu0 %1825
    %v1827 = vsel %vm683, %v1824, %v1826
    %v1828 = vsel %vm683, %v1822, %v1824
    %v1829 = vsel %vm683, %v1820, %v1822
    %v1830 = vsel %vm683, %v1818, %v1820
    %v1831 = vsel %vm683, %v1816, %v1818
    %v1832 = vsel %vm683, %v1826, %v1816
    %v1833 = vadd.f32 %v1809, %v1831
    %v1834 = vadd.f32 %v1810, %v1830
    %v1835 = vadd.f32 %v1811, %v1829
    %v1836 = vadd.f32 %v1812, %v1828
    %v1837 = vadd.f32 %v1813, %v1827
    %v1838 = vadd.f32 %v1814, %v1832
    %s1839 = scalar_lea.vmem [#allocation2], 96
    %1840 = vst [vmem:[%s1839] sm:$0xff] %v1833
    %1841 = vst [vmem:[%s1839 + $0x8] sm:$0xff] %v1834
    %1842 = vst [vmem:[%s1839 + $0x10] sm:$0xff] %v1835
    %1843 = vst [vmem:[%s1839 + $0x18] sm:$0xff] %v1836
    %1844 = vst [vmem:[%s1839 + $0x20] sm:$0xff] %v1837
    %1845 = vst [vmem:[%s1839 + $0x28] sm:$0xff] %v1838
    %s1846 = scalar_lea.vmem [#allocation3], 18
    %v1847 = vld [vmem:[%s1846] sm:$0x3f]
    %v1848 = vmax.bf16 %v1847, 0
    %v1849 = vmin.bf16 %v1847, 0
    %v1851 = vcombine.high %v1848, %v1848
    %v1853 = vunpack.c.l.s4 1966171168
    %v1854 = vunpack.c.0.s8 %v1853
    %v1855 = vlaneseq
    %v1856 = vshrl.u32 %v1855, 7
    %v1857 = vsub.s32 %v1854, %v1856
    %v1858 = vrot.slane %v1848, %v1857
    %v1860 = vunpack.c.l.s4 1966171168
    %v1861 = vunpack.c.0.s8 %v1860
    %v1862 = vlaneseq
    %v1863 = vshrl.u32 %v1862, 7
    %v1864 = vsub.s32 %v1861, %v1863
    %v1865 = vrot.slane %v1851, %v1864
    %v1866 = vcombine.high %v1858, %v1858
    %v1867 = vcombine.high %v1865, %v1865
    %v1869 = vunpack.c.l.s4 1966171168
    %v1870 = vunpack.c.0.s8 %v1869
    %v1871 = vlaneseq
    %v1872 = vshrl.u32 %v1871, 7
    %v1873 = vsub.s32 %v1870, %v1872
    %v1874 = vrot.slane %v1858, %v1873
    %v1876 = vunpack.c.l.s4 1966171168
    %v1877 = vunpack.c.0.s8 %v1876
    %v1878 = vlaneseq
    %v1879 = vshrl.u32 %v1878, 7
    %v1880 = vsub.s32 %v1877, %v1879
    %v1881 = vrot.slane %v1865, %v1880
    %v1883 = vunpack.c.l.s4 1966171168
    %v1884 = vunpack.c.0.s8 %v1883
    %v1885 = vlaneseq
    %v1886 = vshrl.u32 %v1885, 7
    %v1887 = vsub.s32 %v1884, %v1886
    %v1888 = vrot.slane %v1866, %v1887
    %v1890 = vunpack.c.l.s4 1966171168
    %v1891 = vunpack.c.0.s8 %v1890
    %v1892 = vlaneseq
    %v1893 = vshrl.u32 %v1892, 7
    %v1894 = vsub.s32 %v1891, %v1893
    %v1895 = vrot.slane %v1867, %v1894
    %v1896 = vcombine.high %v1874, %v1874
    %v1897 = vcombine.high %v1888, %v1888
    %v1899 = vcombine.low %v1849, %v1849
    %v1901 = vunpack.c.l.s4 1966171168
    %v1902 = vunpack.c.0.s8 %v1901
    %v1903 = vlaneseq
    %v1904 = vshrl.u32 %v1903, 7
    %v1905 = vsub.s32 %v1902, %v1904
    %v1906 = vrot.slane %v1899, %v1905
    %v1908 = vunpack.c.l.s4 1966171168
    %v1909 = vunpack.c.0.s8 %v1908
    %v1910 = vlaneseq
    %v1911 = vshrl.u32 %v1910, 7
    %v1912 = vsub.s32 %v1909, %v1911
    %v1913 = vrot.slane %v1849, %v1912
    %v1914 = vcombine.high %v1906, %v1906
    %v1915 = vcombine.high %v1913, %v1913
    %v1917 = vunpack.c.l.s4 1966171168
    %v1918 = vunpack.c.0.s8 %v1917
    %v1919 = vlaneseq
    %v1920 = vshrl.u32 %v1919, 7
    %v1921 = vsub.s32 %v1918, %v1920
    %v1922 = vrot.slane %v1906, %v1921
    %v1924 = vunpack.c.l.s4 1966171168
    %v1925 = vunpack.c.0.s8 %v1924
    %v1926 = vlaneseq
    %v1927 = vshrl.u32 %v1926, 7
    %v1928 = vsub.s32 %v1925, %v1927
    %v1929 = vrot.slane %v1913, %v1928
    %v1931 = vunpack.c.l.s4 1966171168
    %v1932 = vunpack.c.0.s8 %v1931
    %v1933 = vlaneseq
    %v1934 = vshrl.u32 %v1933, 7
    %v1935 = vsub.s32 %v1932, %v1934
    %v1936 = vrot.slane %v1914, %v1935
    %v1938 = vunpack.c.l.s4 1966171168
    %v1939 = vunpack.c.0.s8 %v1938
    %v1940 = vlaneseq
    %v1941 = vshrl.u32 %v1940, 7
    %v1942 = vsub.s32 %v1939, %v1941
    %v1943 = vrot.slane %v1915, %v1942
    %v1944 = vcombine.high %v1922, %v1922
    %v1945 = vcombine.high %v1936, %v1936
    %v1948 = vsel %vm180, %v1874, %v1922
    %v1951 = vsel %vm180, %v1888, %v1936
    %v1954 = vsel %vm180, %v1896, %v1944
    %v1957 = vsel %vm180, %v1897, %v1945
    %v1960 = vsel %vm180, %v1881, %v1929
    %v1963 = vsel %vm180, %v1895, %v1943
    %v1964 = vsel %vm238, %v1948, 0
    %v1966 = vsel %vm238, %v1951, 0
    %v1968 = vsel %vm238, %v1954, 0
    %v1970 = vsel %vm238, %v1957, 0
    %v1972 = vsel %vm238, %v1960, 0
    %v1974 = vsel %vm238, %v1963, 0
    %1976 = vmatprep.subr.bf16.mxu0 %v1966
    %1977 = vmatpush1.bf16.msra.mxu0 %v1964
    %1978 = vmatprep.subr.bf16.mxu0 0
    %1979 = vmatpush1.bf16.msra.mxu0 0
    %1980 = vmatprep.subr.bf16.mxu0 0
    %1981 = vmatpush1.bf16.msra.mxu0 0
    %1982 = vmatprep.subr.bf16.mxu0 0
    %1983 = vmatpush1.bf16.msra.mxu0 0
    %1984 = vmatprep.subr.bf16.mxu0 0
    %1985 = vmatpush1.bf16.msra.mxu0 0
    %1986 = vmatprep.subr.bf16.mxu0 0
    %1987 = vmatpush1.bf16.msra.mxu0 0
    %1988 = vmatprep.subr.bf16.mxu0 0
    %1989 = vmatpush1.bf16.msra.mxu0 0
    %1990 = vmatprep.subr.bf16.mxu0 0
    %1991 = vmatpush1.bf16.msra.mxu0 0
    %1992 = vmatprep.subr.bf16.mxu0 0
    %1993 = vmatpush1.bf16.msra.mxu0 0
    %1994 = vmatprep.subr.bf16.mxu0 0
    %1995 = vmatpush1.bf16.msra.mxu0 0
    %1996 = vmatprep.subr.bf16.mxu0 0
    %1997 = vmatpush1.bf16.msra.mxu0 0
    %1998 = vmatprep.subr.bf16.mxu0 0
    %1999 = vmatpush1.bf16.msra.mxu0 0
    %2000 = vmatprep.subr.bf16.mxu0 0
    %2001 = vmatpush1.bf16.msra.mxu0 0
    %2002 = vmatprep.subr.bf16.mxu0 0
    %2003 = vmatpush1.bf16.msra.mxu0 0
    %2004 = vmatprep.subr.bf16.mxu0 0
    %2005 = vmatpush1.bf16.msra.mxu0 0
    %2006 = vmatprep.subr.bf16.mxu0 0
    %2007 = vmatpush1.bf16.msra.mxu0 0
    %2008 = vmatprep.mubr.bf16.mxu0 0
    %2009 = vmatmul.mubr.bf16.gmra.mrb[0].mxu0 %v224
    %v2010 = vpop.f32.mrb[0].mxu0
    %v2011 = vadd.f32 0.0, %v2010
    %v2012 = vpop.f32.mrb[0].mxu0
    %v2013 = vadd.f32 0.0, %v2012
    %v2014 = vpop.f32.mrb[0].mxu0
    %v2015 = vadd.f32 0.0, %v2014
    %v2016 = vpop.f32.mrb[0].mxu0
    %v2017 = vadd.f32 0.0, %v2016
    %2018 = vmatprep.mubr.bf16.mxu0 0
    %2019 = vmatmul.mubr.bf16.gmra.mrb[0].mxu0 %v227
    %v2020 = vpop.f32.mrb[0].mxu0
    %v2021 = vadd.f32 0.0, %v2020
    %v2022 = vpop.f32.mrb[0].mxu0
    %v2023 = vadd.f32 0.0, %v2022
    %v2024 = vpop.f32.mrb[0].mxu0
    %v2025 = vadd.f32 0.0, %v2024
    %v2026 = vpop.f32.mrb[0].mxu0
    %v2027 = vadd.f32 0.0, %v2026
    %2028 = vmatprep.mubr.bf16.mxu0 0
    %2029 = vmatmul.mubr.bf16.gmra.mrb[0].mxu0 %v230
    %v2030 = vpop.f32.mrb[0].mxu0
    %v2031 = vadd.f32 0.0, %v2030
    %v2032 = vpop.f32.mrb[0].mxu0
    %v2033 = vadd.f32 0.0, %v2032
    %v2034 = vpop.f32.mrb[0].mxu0
    %v2035 = vadd.f32 0.0, %v2034
    %v2036 = vpop.f32.mrb[0].mxu0
    %v2037 = vadd.f32 0.0, %v2036
    %2038 = vmatprep.mubr.bf16.mxu0 0
    %2039 = vmatmul.mubr.bf16.gmra.mrb[0].mxu0 %v233
    %v2040 = vpop.f32.mrb[0].mxu0
    %v2041 = vadd.f32 0.0, %v2040
    %v2042 = vpop.f32.mrb[0].mxu0
    %v2043 = vadd.f32 0.0, %v2042
    %v2044 = vpop.f32.mrb[0].mxu0
    %v2045 = vadd.f32 0.0, %v2044
    %v2046 = vpop.f32.mrb[0].mxu0
    %v2047 = vadd.f32 0.0, %v2046
    %2048 = vmatprep.mubr.bf16.mxu0 0
    %2049 = vmatmul.mubr.bf16.gmra.mrb[0].mxu0 %v236
    %v2050 = vpop.f32.mrb[0].mxu0
    %v2051 = vadd.f32 0.0, %v2050
    %v2052 = vpop.f32.mrb[0].mxu0
    %v2053 = vadd.f32 0.0, %v2052
    %v2054 = vpop.f32.mrb[0].mxu0
    %v2055 = vpop.f32.mrb[0].mxu0
    %2056 = vdwg.mxu0
    %2057 = vmatprep.subr.bf16.mxu0 %v1970
    %2058 = vmatpush1.bf16.msra.mxu0 %v1968
    %2059 = vmatprep.subr.bf16.mxu0 0
    %2060 = vmatpush1.bf16.msra.mxu0 0
    %2061 = vmatprep.subr.bf16.mxu0 0
    %2062 = vmatpush1.bf16.msra.mxu0 0
    %2063 = vmatprep.subr.bf16.mxu0 0
    %2064 = vmatpush1.bf16.msra.mxu0 0
    %2065 = vmatprep.subr.bf16.mxu0 0
    %2066 = vmatpush1.bf16.msra.mxu0 0
    %2067 = vmatprep.subr.bf16.mxu0 0
    %2068 = vmatpush1.bf16.msra.mxu0 0
    %2069 = vmatprep.subr.bf16.mxu0 0
    %2070 = vmatpush1.bf16.msra.mxu0 0
    %2071 = vmatprep.subr.bf16.mxu0 0
    %2072 = vmatpush1.bf16.msra.mxu0 0
    %2073 = vmatprep.subr.bf16.mxu0 0
    %2074 = vmatpush1.bf16.msra.mxu0 0
    %2075 = vmatprep.subr.bf16.mxu0 0
    %2076 = vmatpush1.bf16.msra.mxu0 0
    %2077 = vmatprep.subr.bf16.mxu0 0
    %2078 = vmatpush1.bf16.msra.mxu0 0
    %2079 = vmatprep.subr.bf16.mxu0 0
    %2080 = vmatpush1.bf16.msra.mxu0 0
    %2081 = vmatprep.subr.bf16.mxu0 0
    %2082 = vmatpush1.bf16.msra.mxu0 0
    %2083 = vmatprep.subr.bf16.mxu0 0
    %2084 = vmatpush1.bf16.msra.mxu0 0
    %2085 = vmatprep.subr.bf16.mxu0 0
    %2086 = vmatpush1.bf16.msra.mxu0 0
    %2087 = vmatprep.subr.bf16.mxu0 0
    %2088 = vmatpush1.bf16.msra.mxu0 0
    %2089 = vmatprep.mubr.bf16.mxu0 0
    %2090 = vmatmul.mubr.bf16.gmra.mrb[0].mxu0 %v224
    %v2091 = vpop.f32.mrb[0].mxu0
    %v2092 = vadd.f32 0.0, %v2091
    %v2093 = vpop.f32.mrb[0].mxu0
    %v2094 = vadd.f32 0.0, %v2093
    %v2095 = vpop.f32.mrb[0].mxu0
    %v2096 = vadd.f32 0.0, %v2095
    %v2097 = vpop.f32.mrb[0].mxu0
    %v2098 = vadd.f32 0.0, %v2097
    %2099 = vmatprep.mubr.bf16.mxu0 0
    %2100 = vmatmul.mubr.bf16.gmra.mrb[0].mxu0 %v227
    %v2101 = vpop.f32.mrb[0].mxu0
    %v2102 = vadd.f32 0.0, %v2101
    %v2103 = vpop.f32.mrb[0].mxu0
    %v2104 = vadd.f32 0.0, %v2103
    %v2105 = vpop.f32.mrb[0].mxu0
    %v2106 = vadd.f32 0.0, %v2105
    %v2107 = vpop.f32.mrb[0].mxu0
    %v2108 = vadd.f32 0.0, %v2107
    %2109 = vmatprep.mubr.bf16.mxu0 0
    %2110 = vmatmul.mubr.bf16.gmra.mrb[0].mxu0 %v230
    %v2111 = vpop.f32.mrb[0].mxu0
    %v2112 = vadd.f32 0.0, %v2111
    %v2113 = vpop.f32.mrb[0].mxu0
    %v2114 = vadd.f32 0.0, %v2113
    %v2115 = vpop.f32.mrb[0].mxu0
    %v2116 = vadd.f32 0.0, %v2115
    %v2117 = vpop.f32.mrb[0].mxu0
    %v2118 = vadd.f32 0.0, %v2117
    %2119 = vmatprep.mubr.bf16.mxu0 0
    %2120 = vmatmul.mubr.bf16.gmra.mrb[0].mxu0 %v233
    %v2121 = vpop.f32.mrb[0].mxu0
    %v2122 = vadd.f32 0.0, %v2121
    %v2123 = vpop.f32.mrb[0].mxu0
    %v2124 = vadd.f32 0.0, %v2123
    %v2125 = vpop.f32.mrb[0].mxu0
    %v2126 = vadd.f32 0.0, %v2125
    %v2127 = vpop.f32.mrb[0].mxu0
    %v2128 = vadd.f32 0.0, %v2127
    %2129 = vmatprep.mubr.bf16.mxu0 0
    %2130 = vmatmul.mubr.bf16.gmra.mrb[0].mxu0 %v236
    %v2131 = vpop.f32.mrb[0].mxu0
    %v2132 = vadd.f32 0.0, %v2131
    %v2133 = vpop.f32.mrb[0].mxu0
    %v2134 = vadd.f32 0.0, %v2133
    %v2135 = vpop.f32.mrb[0].mxu0
    %v2136 = vpop.f32.mrb[0].mxu0
    %2137 = vdwg.mxu0
    %2138 = vmatprep.subr.bf16.mxu0 %v1974
    %2139 = vmatpush1.bf16.msra.mxu0 %v1972
    %2140 = vmatprep.subr.bf16.mxu0 0
    %2141 = vmatpush1.bf16.msra.mxu0 0
    %2142 = vmatprep.subr.bf16.mxu0 0
    %2143 = vmatpush1.bf16.msra.mxu0 0
    %2144 = vmatprep.subr.bf16.mxu0 0
    %2145 = vmatpush1.bf16.msra.mxu0 0
    %2146 = vmatprep.subr.bf16.mxu0 0
    %2147 = vmatpush1.bf16.msra.mxu0 0
    %2148 = vmatprep.subr.bf16.mxu0 0
    %2149 = vmatpush1.bf16.msra.mxu0 0
    %2150 = vmatprep.subr.bf16.mxu0 0
    %2151 = vmatpush1.bf16.msra.mxu0 0
    %2152 = vmatprep.subr.bf16.mxu0 0
    %2153 = vmatpush1.bf16.msra.mxu0 0
    %2154 = vmatprep.subr.bf16.mxu0 0
    %2155 = vmatpush1.bf16.msra.mxu0 0
    %2156 = vmatprep.subr.bf16.mxu0 0
    %2157 = vmatpush1.bf16.msra.mxu0 0
    %2158 = vmatprep.subr.bf16.mxu0 0
    %2159 = vmatpush1.bf16.msra.mxu0 0
    %2160 = vmatprep.subr.bf16.mxu0 0
    %2161 = vmatpush1.bf16.msra.mxu0 0
    %2162 = vmatprep.subr.bf16.mxu0 0
    %2163 = vmatpush1.bf16.msra.mxu0 0
    %2164 = vmatprep.subr.bf16.mxu0 0
    %2165 = vmatpush1.bf16.msra.mxu0 0
    %2166 = vmatprep.subr.bf16.mxu0 0
    %2167 = vmatpush1.bf16.msra.mxu0 0
    %2168 = vmatprep.subr.bf16.mxu0 0
    %2169 = vmatpush1.bf16.msra.mxu0 0
    %2170 = vmatprep.mubr.bf16.mxu0 0
    %2171 = vmatmul.mubr.bf16.gmra.mrb[0].mxu0 %v224
    %v2172 = vpop.f32.mrb[0].mxu0
    %v2173 = vadd.f32 0.0, %v2172
    %v2174 = vpop.f32.mrb[0].mxu0
    %v2175 = vadd.f32 0.0, %v2174
    %v2176 = vpop.f32.mrb[0].mxu0
    %v2177 = vadd.f32 0.0, %v2176
    %v2178 = vpop.f32.mrb[0].mxu0
    %v2179 = vadd.f32 0.0, %v2178
    %2180 = vmatprep.mubr.bf16.mxu0 0
    %2181 = vmatmul.mubr.bf16.gmra.mrb[0].mxu0 %v227
    %v2182 = vpop.f32.mrb[0].mxu0
    %v2183 = vadd.f32 0.0, %v2182
    %v2184 = vpop.f32.mrb[0].mxu0
    %v2185 = vadd.f32 0.0, %v2184
    %v2186 = vpop.f32.mrb[0].mxu0
    %v2187 = vadd.f32 0.0, %v2186
    %v2188 = vpop.f32.mrb[0].mxu0
    %v2189 = vadd.f32 0.0, %v2188
    %2190 = vmatprep.mubr.bf16.mxu0 0
    %2191 = vmatmul.mubr.bf16.gmra.mrb[0].mxu0 %v230
    %v2192 = vpop.f32.mrb[0].mxu0
    %v2193 = vadd.f32 0.0, %v2192
    %v2194 = vpop.f32.mrb[0].mxu0
    %v2195 = vadd.f32 0.0, %v2194
    %v2196 = vpop.f32.mrb[0].mxu0
    %v2197 = vadd.f32 0.0, %v2196
    %v2198 = vpop.f32.mrb[0].mxu0
    %v2199 = vadd.f32 0.0, %v2198
    %2200 = vmatprep.mubr.bf16.mxu0 0
    %2201 = vmatmul.mubr.bf16.gmra.mrb[0].mxu0 %v233
    %v2202 = vpop.f32.mrb[0].mxu0
    %v2203 = vadd.f32 0.0, %v2202
    %v2204 = vpop.f32.mrb[0].mxu0
    %v2205 = vadd.f32 0.0, %v2204
    %v2206 = vpop.f32.mrb[0].mxu0
    %v2207 = vadd.f32 0.0, %v2206
    %v2208 = vpop.f32.mrb[0].mxu0
    %v2209 = vadd.f32 0.0, %v2208
    %2210 = vmatprep.mubr.bf16.mxu0 0
    %2211 = vmatmul.mubr.bf16.gmra.mrb[0].mxu0 %v236
    %v2212 = vpop.f32.mrb[0].mxu0
    %v2213 = vadd.f32 0.0, %v2212
    %v2214 = vpop.f32.mrb[0].mxu0
    %v2215 = vadd.f32 0.0, %v2214
    %v2216 = vpop.f32.mrb[0].mxu0
    %v2217 = vpop.f32.mrb[0].mxu0
    %2218 = vdwg.mxu0
    %2219 = vrot.lane.b32.xlu0 %v2011, 19
    %v2220 = vpop.permute.xlu0 %2219
    %2221 = vrot.lane.b32.xlu0 %v2013, 19
    %v2222 = vpop.permute.xlu0 %2221
    %2223 = vrot.lane.b32.xlu0 %v2092, 19
    %v2224 = vpop.permute.xlu0 %2223
    %2225 = vrot.lane.b32.xlu0 %v2094, 19
    %v2226 = vpop.permute.xlu0 %2225
    %2227 = vrot.lane.b32.xlu0 %v2173, 19
    %v2228 = vpop.permute.xlu0 %2227
    %2229 = vrot.lane.b32.xlu0 %v2175, 19
    %v2230 = vpop.permute.xlu0 %2229
    %v2231 = vsel %vm508, %v2228, %v2230
    %v2232 = vsel %vm508, %v2226, %v2228
    %v2233 = vsel %vm508, %v2224, %v2226
    %v2234 = vsel %vm508, %v2222, %v2224
    %v2235 = vsel %vm508, %v2220, %v2222
    %v2236 = vsel %vm508, %v2230, %v2220
    %2237 = vrot.lane.b32.xlu0 %v2015, 18
    %v2238 = vpop.permute.xlu0 %2237
    %2239 = vrot.lane.b32.xlu0 %v2017, 18
    %v2240 = vpop.permute.xlu0 %2239
    %2241 = vrot.lane.b32.xlu0 %v2096, 18
    %v2242 = vpop.permute.xlu0 %2241
    %2243 = vrot.lane.b32.xlu0 %v2098, 18
    %v2244 = vpop.permute.xlu0 %2243
    %2245 = vrot.lane.b32.xlu0 %v2177, 18
    %v2246 = vpop.permute.xlu0 %2245
    %2247 = vrot.lane.b32.xlu0 %v2179, 18
    %v2248 = vpop.permute.xlu0 %2247
    %v2249 = vsel %vm527, %v2246, %v2248
    %v2250 = vsel %vm527, %v2244, %v2246
    %v2251 = vsel %vm527, %v2242, %v2244
    %v2252 = vsel %vm527, %v2240, %v2242
    %v2253 = vsel %vm527, %v2238, %v2240
    %v2254 = vsel %vm527, %v2248, %v2238
    %v2255 = vadd.f32 %v2236, %v2254
    %v2256 = vadd.f32 %v2235, %v2253
    %v2257 = vadd.f32 %v2234, %v2252
    %v2258 = vadd.f32 %v2233, %v2251
    %v2259 = vadd.f32 %v2232, %v2250
    %v2260 = vadd.f32 %v2231, %v2249
    %2261 = vrot.lane.b32.xlu0 %v2021, 17
    %v2262 = vpop.permute.xlu0 %2261
    %2263 = vrot.lane.b32.xlu0 %v2023, 17
    %v2264 = vpop.permute.xlu0 %2263
    %2265 = vrot.lane.b32.xlu0 %v2102, 17
    %v2266 = vpop.permute.xlu0 %2265
    %2267 = vrot.lane.b32.xlu0 %v2104, 17
    %v2268 = vpop.permute.xlu0 %2267
    %2269 = vrot.lane.b32.xlu0 %v2183, 17
    %v2270 = vpop.permute.xlu0 %2269
    %2271 = vrot.lane.b32.xlu0 %v2185, 17
    %v2272 = vpop.permute.xlu0 %2271
    %v2273 = vsel %vm552, %v2270, %v2272
    %v2274 = vsel %vm552, %v2268, %v2270
    %v2275 = vsel %vm552, %v2266, %v2268
    %v2276 = vsel %vm552, %v2264, %v2266
    %v2277 = vsel %vm552, %v2262, %v2264
    %v2278 = vsel %vm552, %v2272, %v2262
    %v2279 = vadd.f32 %v2255, %v2278
    %v2280 = vadd.f32 %v2256, %v2277
    %v2281 = vadd.f32 %v2257, %v2276
    %v2282 = vadd.f32 %v2258, %v2275
    %v2283 = vadd.f32 %v2259, %v2274
    %v2284 = vadd.f32 %v2260, %v2273
    %2285 = vrot.lane.b32.xlu0 %v2025, 1
    %v2286 = vpop.permute.xlu0 %2285
    %2287 = vrot.lane.b32.xlu0 %v2027, 1
    %v2288 = vpop.permute.xlu0 %2287
    %2289 = vrot.lane.b32.xlu0 %v2106, 1
    %v2290 = vpop.permute.xlu0 %2289
    %2291 = vrot.lane.b32.xlu0 %v2108, 1
    %v2292 = vpop.permute.xlu0 %2291
    %2293 = vrot.lane.b32.xlu0 %v2187, 1
    %v2294 = vpop.permute.xlu0 %2293
    %2295 = vrot.lane.b32.xlu0 %v2189, 1
    %v2296 = vpop.permute.xlu0 %2295
    %v2297 = vsel %vm577, %v2294, %v2296
    %v2298 = vsel %vm577, %v2292, %v2294
    %v2299 = vsel %vm577, %v2290, %v2292
    %v2300 = vsel %vm577, %v2288, %v2290
    %v2301 = vsel %vm577, %v2286, %v2288
    %v2302 = vsel %vm577, %v2296, %v2286
    %v2303 = vadd.f32 %v2279, %v2302
    %v2304 = vadd.f32 %v2280, %v2301
    %v2305 = vadd.f32 %v2281, %v2300
    %v2306 = vadd.f32 %v2282, %v2299
    %v2307 = vadd.f32 %v2283, %v2298
    %v2308 = vadd.f32 %v2284, %v2297
    %v2309 = vadd.f32 %v2303, %v2031
    %v2310 = vadd.f32 %v2304, %v2033
    %v2311 = vadd.f32 %v2305, %v2112
    %v2312 = vadd.f32 %v2306, %v2114
    %v2313 = vadd.f32 %v2307, %v2193
    %v2314 = vadd.f32 %v2308, %v2195
    %2315 = vrot.lane.b32.xlu0 %v2035, 127
    %v2316 = vpop.permute.xlu0 %2315
    %2317 = vrot.lane.b32.xlu0 %v2037, 127
    %v2318 = vpop.permute.xlu0 %2317
    %2319 = vrot.lane.b32.xlu0 %v2116, 127
    %v2320 = vpop.permute.xlu0 %2319
    %2321 = vrot.lane.b32.xlu0 %v2118, 127
    %v2322 = vpop.permute.xlu0 %2321
    %2323 = vrot.lane.b32.xlu0 %v2197, 127
    %v2324 = vpop.permute.xlu0 %2323
    %2325 = vrot.lane.b32.xlu0 %v2199, 127
    %v2326 = vpop.permute.xlu0 %2325
    %v2327 = vsel %vm608, %v2324, %v2326
    %v2328 = vsel %vm608, %v2322, %v2324
    %v2329 = vsel %vm608, %v2320, %v2322
    %v2330 = vsel %vm608, %v2318, %v2320
    %v2331 = vsel %vm608, %v2316, %v2318
    %v2332 = vsel %vm608, %v2326, %v2316
    %v2333 = vadd.f32 %v2309, %v2331
    %v2334 = vadd.f32 %v2310, %v2330
    %v2335 = vadd.f32 %v2311, %v2329
    %v2336 = vadd.f32 %v2312, %v2328
    %v2337 = vadd.f32 %v2313, %v2327
    %v2338 = vadd.f32 %v2314, %v2332
    %2339 = vrot.lane.b32.xlu0 %v2041, 111
    %v2340 = vpop.permute.xlu0 %2339
    %2341 = vrot.lane.b32.xlu0 %v2043, 111
    %v2342 = vpop.permute.xlu0 %2341
    %2343 = vrot.lane.b32.xlu0 %v2122, 111
    %v2344 = vpop.permute.xlu0 %2343
    %2345 = vrot.lane.b32.xlu0 %v2124, 111
    %v2346 = vpop.permute.xlu0 %2345
    %2347 = vrot.lane.b32.xlu0 %v2203, 111
    %v2348 = vpop.permute.xlu0 %2347
    %2349 = vrot.lane.b32.xlu0 %v2205, 111
    %v2350 = vpop.permute.xlu0 %2349
    %v2351 = vsel %vm633, %v2348, %v2350
    %v2352 = vsel %vm633, %v2346, %v2348
    %v2353 = vsel %vm633, %v2344, %v2346
    %v2354 = vsel %vm633, %v2342, %v2344
    %v2355 = vsel %vm633, %v2340, %v2342
    %v2356 = vsel %vm633, %v2350, %v2340
    %v2357 = vadd.f32 %v2333, %v2355
    %v2358 = vadd.f32 %v2334, %v2354
    %v2359 = vadd.f32 %v2335, %v2353
    %v2360 = vadd.f32 %v2336, %v2352
    %v2361 = vadd.f32 %v2337, %v2351
    %v2362 = vadd.f32 %v2338, %v2356
    %2363 = vrot.lane.b32.xlu0 %v2045, 110
    %v2364 = vpop.permute.xlu0 %2363
    %2365 = vrot.lane.b32.xlu0 %v2047, 110
    %v2366 = vpop.permute.xlu0 %2365
    %2367 = vrot.lane.b32.xlu0 %v2126, 110
    %v2368 = vpop.permute.xlu0 %2367
    %2369 = vrot.lane.b32.xlu0 %v2128, 110
    %v2370 = vpop.permute.xlu0 %2369
    %2371 = vrot.lane.b32.xlu0 %v2207, 110
    %v2372 = vpop.permute.xlu0 %2371
    %2373 = vrot.lane.b32.xlu0 %v2209, 110
    %v2374 = vpop.permute.xlu0 %2373
    %v2375 = vsel %vm658, %v2372, %v2374
    %v2376 = vsel %vm658, %v2370, %v2372
    %v2377 = vsel %vm658, %v2368, %v2370
    %v2378 = vsel %vm658, %v2366, %v2368
    %v2379 = vsel %vm658, %v2364, %v2366
    %v2380 = vsel %vm658, %v2374, %v2364
    %v2381 = vadd.f32 %v2357, %v2379
    %v2382 = vadd.f32 %v2358, %v2378
    %v2383 = vadd.f32 %v2359, %v2377
    %v2384 = vadd.f32 %v2360, %v2376
    %v2385 = vadd.f32 %v2361, %v2375
    %v2386 = vadd.f32 %v2362, %v2380
    %2387 = vrot.lane.b32.xlu0 %v2051, 109
    %v2388 = vpop.permute.xlu0 %2387
    %2389 = vrot.lane.b32.xlu0 %v2053, 109
    %v2390 = vpop.permute.xlu0 %2389
    %2391 = vrot.lane.b32.xlu0 %v2132, 109
    %v2392 = vpop.permute.xlu0 %2391
    %2393 = vrot.lane.b32.xlu0 %v2134, 109
    %v2394 = vpop.permute.xlu0 %2393
    %2395 = vrot.lane.b32.xlu0 %v2213, 109
    %v2396 = vpop.permute.xlu0 %2395
    %2397 = vrot.lane.b32.xlu0 %v2215, 109
    %v2398 = vpop.permute.xlu0 %2397
    %v2399 = vsel %vm683, %v2396, %v2398
    %v2400 = vsel %vm683, %v2394, %v2396
    %v2401 = vsel %vm683, %v2392, %v2394
    %v2402 = vsel %vm683, %v2390, %v2392
    %v2403 = vsel %vm683, %v2388, %v2390
    %v2404 = vsel %vm683, %v2398, %v2388
    %v2405 = vadd.f32 %v2381, %v2403
    %v2406 = vadd.f32 %v2382, %v2402
    %v2407 = vadd.f32 %v2383, %v2401
    %v2408 = vadd.f32 %v2384, %v2400
    %v2409 = vadd.f32 %v2385, %v2399
    %v2410 = vadd.f32 %v2386, %v2404
    %s2411 = scalar_lea.vmem [#allocation2], 144
    %2412 = vst [vmem:[%s2411] sm:$0xff] %v2405
    %2413 = vst [vmem:[%s2411 + $0x8] sm:$0xff] %v2406
    %2414 = vst [vmem:[%s2411 + $0x10] sm:$0xff] %v2407
    %2415 = vst [vmem:[%s2411 + $0x18] sm:$0xff] %v2408
    %2416 = vst [vmem:[%s2411 + $0x20] sm:$0xff] %v2409
    %2417 = vst [vmem:[%s2411 + $0x28] sm:$0xff] %v2410
    %s2418 = scalar_lea.vmem [#allocation3], 24
    %v2419 = vld [vmem:[%s2418] sm:$0x3f]
    %v2420 = vmax.bf16 %v2419, 0
    %v2421 = vmin.bf16 %v2419, 0
    %v2423 = vcombine.high %v2420, %v2420
    %v2425 = vunpack.c.l.s4 1966171168
    %v2426 = vunpack.c.0.s8 %v2425
    %v2427 = vlaneseq
    %v2428 = vshrl.u32 %v2427, 7
    %v2429 = vsub.s32 %v2426, %v2428
    %v2430 = vrot.slane %v2420, %v2429
    %v2432 = vunpack.c.l.s4 1966171168
    %v2433 = vunpack.c.0.s8 %v2432
    %v2434 = vlaneseq
    %v2435 = vshrl.u32 %v2434, 7
    %v2436 = vsub.s32 %v2433, %v2435
    %v2437 = vrot.slane %v2423, %v2436
    %v2438 = vcombine.high %v2430, %v2430
    %v2439 = vcombine.high %v2437, %v2437
    %v2441 = vunpack.c.l.s4 1966171168
    %v2442 = vunpack.c.0.s8 %v2441
    %v2443 = vlaneseq
    %v2444 = vshrl.u32 %v2443, 7
    %v2445 = vsub.s32 %v2442, %v2444
    %v2446 = vrot.slane %v2430, %v2445
    %v2448 = vunpack.c.l.s4 1966171168
    %v2449 = vunpack.c.0.s8 %v2448
    %v2450 = vlaneseq
    %v2451 = vshrl.u32 %v2450, 7
    %v2452 = vsub.s32 %v2449, %v2451
    %v2453 = vrot.slane %v2437, %v2452
    %v2455 = vunpack.c.l.s4 1966171168
    %v2456 = vunpack.c.0.s8 %v2455
    %v2457 = vlaneseq
    %v2458 = vshrl.u32 %v2457, 7
    %v2459 = vsub.s32 %v2456, %v2458
    %v2460 = vrot.slane %v2438, %v2459
    %v2462 = vunpack.c.l.s4 1966171168
    %v2463 = vunpack.c.0.s8 %v2462
    %v2464 = vlaneseq
    %v2465 = vshrl.u32 %v2464, 7
    %v2466 = vsub.s32 %v2463, %v2465
    %v2467 = vrot.slane %v2439, %v2466
    %v2468 = vcombine.high %v2446, %v2446
    %v2469 = vcombine.high %v2460, %v2460
    %v2471 = vcombine.low %v2421, %v2421
    %v2473 = vunpack.c.l.s4 1966171168
    %v2474 = vunpack.c.0.s8 %v2473
    %v2475 = vlaneseq
    %v2476 = vshrl.u32 %v2475, 7
    %v2477 = vsub.s32 %v2474, %v2476
    %v2478 = vrot.slane %v2471, %v2477
    %v2480 = vunpack.c.l.s4 1966171168
    %v2481 = vunpack.c.0.s8 %v2480
    %v2482 = vlaneseq
    %v2483 = vshrl.u32 %v2482, 7
    %v2484 = vsub.s32 %v2481, %v2483
    %v2485 = vrot.slane %v2421, %v2484
    %v2486 = vcombine.high %v2478, %v2478
    %v2487 = vcombine.high %v2485, %v2485
    %v2489 = vunpack.c.l.s4 1966171168
    %v2490 = vunpack.c.0.s8 %v2489
    %v2491 = vlaneseq
    %v2492 = vshrl.u32 %v2491, 7
    %v2493 = vsub.s32 %v2490, %v2492
    %v2494 = vrot.slane %v2478, %v2493
    %v2496 = vunpack.c.l.s4 1966171168
    %v2497 = vunpack.c.0.s8 %v2496
    %v2498 = vlaneseq
    %v2499 = vshrl.u32 %v2498, 7
    %v2500 = vsub.s32 %v2497, %v2499
    %v2501 = vrot.slane %v2485, %v2500
    %v2503 = vunpack.c.l.s4 1966171168
    %v2504 = vunpack.c.0.s8 %v2503
    %v2505 = vlaneseq
    %v2506 = vshrl.u32 %v2505, 7
    %v2507 = vsub.s32 %v2504, %v2506
    %v2508 = vrot.slane %v2486, %v2507
    %v2510 = vunpack.c.l.s4 1966171168
    %v2511 = vunpack.c.0.s8 %v2510
    %v2512 = vlaneseq
    %v2513 = vshrl.u32 %v2512, 7
    %v2514 = vsub.s32 %v2511, %v2513
    %v2515 = vrot.slane %v2487, %v2514
    %v2516 = vcombine.high %v2494, %v2494
    %v2517 = vcombine.high %v2508, %v2508
    %v2520 = vsel %vm180, %v2446, %v2494
    %v2523 = vsel %vm180, %v2460, %v2508
    %v2526 = vsel %vm180, %v2468, %v2516
    %v2529 = vsel %vm180, %v2469, %v2517
    %v2532 = vsel %vm180, %v2453, %v2501
    %v2535 = vsel %vm180, %v2467, %v2515
    %v2536 = vsel %vm238, %v2520, 0
    %v2538 = vsel %vm238, %v2523, 0
    %v2540 = vsel %vm238, %v2526, 0
    %v2542 = vsel %vm238, %v2529, 0
    %v2544 = vsel %vm238, %v2532, 0
    %v2546 = vsel %vm238, %v2535, 0
    %2548 = vmatprep.subr.bf16.mxu0 %v2538
    %2549 = vmatpush1.bf16.msra.mxu0 %v2536
    %2550 = vmatprep.subr.bf16.mxu0 0
    %2551 = vmatpush1.bf16.msra.mxu0 0
    %2552 = vmatprep.subr.bf16.mxu0 0
    %2553 = vmatpush1.bf16.msra.mxu0 0
    %2554 = vmatprep.subr.bf16.mxu0 0
    %2555 = vmatpush1.bf16.msra.mxu0 0
    %2556 = vmatprep.subr.bf16.mxu0 0
    %2557 = vmatpush1.bf16.msra.mxu0 0
    %2558 = vmatprep.subr.bf16.mxu0 0
    %2559 = vmatpush1.bf16.msra.mxu0 0
    %2560 = vmatprep.subr.bf16.mxu0 0
    %2561 = vmatpush1.bf16.msra.mxu0 0
    %2562 = vmatprep.subr.bf16.mxu0 0
    %2563 = vmatpush1.bf16.msra.mxu0 0
    %2564 = vmatprep.subr.bf16.mxu0 0
    %2565 = vmatpush1.bf16.msra.mxu0 0
    %2566 = vmatprep.subr.bf16.mxu0 0
    %2567 = vmatpush1.bf16.msra.mxu0 0
    %2568 = vmatprep.subr.bf16.mxu0 0
    %2569 = vmatpush1.bf16.msra.mxu0 0
    %2570 = vmatprep.subr.bf16.mxu0 0
    %2571 = vmatpush1.bf16.msra.mxu0 0
    %2572 = vmatprep.subr.bf16.mxu0 0
    %2573 = vmatpush1.bf16.msra.mxu0 0
    %2574 = vmatprep.subr.bf16.mxu0 0
    %2575 = vmatpush1.bf16.msra.mxu0 0
    %2576 = vmatprep.subr.bf16.mxu0 0
    %2577 = vmatpush1.bf16.msra.mxu0 0
    %2578 = vmatprep.subr.bf16.mxu0 0
    %2579 = vmatpush1.bf16.msra.mxu0 0
    %2580 = vmatprep.mubr.bf16.mxu0 0
    %2581 = vmatmul.mubr.bf16.gmra.mrb[0].mxu0 %v224
    %v2582 = vpop.f32.mrb[0].mxu0
    %v2583 = vadd.f32 0.0, %v2582
    %v2584 = vpop.f32.mrb[0].mxu0
    %v2585 = vadd.f32 0.0, %v2584
    %v2586 = vpop.f32.mrb[0].mxu0
    %v2587 = vadd.f32 0.0, %v2586
    %v2588 = vpop.f32.mrb[0].mxu0
    %v2589 = vadd.f32 0.0, %v2588
    %2590 = vmatprep.mubr.bf16.mxu0 0
    %2591 = vmatmul.mubr.bf16.gmra.mrb[0].mxu0 %v227
    %v2592 = vpop.f32.mrb[0].mxu0
    %v2593 = vadd.f32 0.0, %v2592
    %v2594 = vpop.f32.mrb[0].mxu0
    %v2595 = vadd.f32 0.0, %v2594
    %v2596 = vpop.f32.mrb[0].mxu0
    %v2597 = vadd.f32 0.0, %v2596
    %v2598 = vpop.f32.mrb[0].mxu0
    %v2599 = vadd.f32 0.0, %v2598
    %2600 = vmatprep.mubr.bf16.mxu0 0
    %2601 = vmatmul.mubr.bf16.gmra.mrb[0].mxu0 %v230
    %v2602 = vpop.f32.mrb[0].mxu0
    %v2603 = vadd.f32 0.0, %v2602
    %v2604 = vpop.f32.mrb[0].mxu0
    %v2605 = vadd.f32 0.0, %v2604
    %v2606 = vpop.f32.mrb[0].mxu0
    %v2607 = vadd.f32 0.0, %v2606
    %v2608 = vpop.f32.mrb[0].mxu0
    %v2609 = vadd.f32 0.0, %v2608
    %2610 = vmatprep.mubr.bf16.mxu0 0
    %2611 = vmatmul.mubr.bf16.gmra.mrb[0].mxu0 %v233
    %v2612 = vpop.f32.mrb[0].mxu0
    %v2613 = vadd.f32 0.0, %v2612
    %v2614 = vpop.f32.mrb[0].mxu0
    %v2615 = vadd.f32 0.0, %v2614
    %v2616 = vpop.f32.mrb[0].mxu0
    %v2617 = vadd.f32 0.0, %v2616
    %v2618 = vpop.f32.mrb[0].mxu0
    %v2619 = vadd.f32 0.0, %v2618
    %2620 = vmatprep.mubr.bf16.mxu0 0
    %2621 = vmatmul.mubr.bf16.gmra.mrb[0].mxu0 %v236
    %v2622 = vpop.f32.mrb[0].mxu0
    %v2623 = vadd.f32 0.0, %v2622
    %v2624 = vpop.f32.mrb[0].mxu0
    %v2625 = vadd.f32 0.0, %v2624
    %v2626 = vpop.f32.mrb[0].mxu0
    %v2627 = vpop.f32.mrb[0].mxu0
    %2628 = vdwg.mxu0
    %2629 = vmatprep.subr.bf16.mxu0 %v2542
    %2630 = vmatpush1.bf16.msra.mxu0 %v2540
    %2631 = vmatprep.subr.bf16.mxu0 0
    %2632 = vmatpush1.bf16.msra.mxu0 0
    %2633 = vmatprep.subr.bf16.mxu0 0
    %2634 = vmatpush1.bf16.msra.mxu0 0
    %2635 = vmatprep.subr.bf16.mxu0 0
    %2636 = vmatpush1.bf16.msra.mxu0 0
    %2637 = vmatprep.subr.bf16.mxu0 0
    %2638 = vmatpush1.bf16.msra.mxu0 0
    %2639 = vmatprep.subr.bf16.mxu0 0
    %2640 = vmatpush1.bf16.msra.mxu0 0
    %2641 = vmatprep.subr.bf16.mxu0 0
    %2642 = vmatpush1.bf16.msra.mxu0 0
    %2643 = vmatprep.subr.bf16.mxu0 0
    %2644 = vmatpush1.bf16.msra.mxu0 0
    %2645 = vmatprep.subr.bf16.mxu0 0
    %2646 = vmatpush1.bf16.msra.mxu0 0
    %2647 = vmatprep.subr.bf16.mxu0 0
    %2648 = vmatpush1.bf16.msra.mxu0 0
    %2649 = vmatprep.subr.bf16.mxu0 0
    %2650 = vmatpush1.bf16.msra.mxu0 0
    %2651 = vmatprep.subr.bf16.mxu0 0
    %2652 = vmatpush1.bf16.msra.mxu0 0
    %2653 = vmatprep.subr.bf16.mxu0 0
    %2654 = vmatpush1.bf16.msra.mxu0 0
    %2655 = vmatprep.subr.bf16.mxu0 0
    %2656 = vmatpush1.bf16.msra.mxu0 0
    %2657 = vmatprep.subr.bf16.mxu0 0
    %2658 = vmatpush1.bf16.msra.mxu0 0
    %2659 = vmatprep.subr.bf16.mxu0 0
    %2660 = vmatpush1.bf16.msra.mxu0 0
    %2661 = vmatprep.mubr.bf16.mxu0 0
    %2662 = vmatmul.mubr.bf16.gmra.mrb[0].mxu0 %v224
    %v2663 = vpop.f32.mrb[0].mxu0
    %v2664 = vadd.f32 0.0, %v2663
    %v2665 = vpop.f32.mrb[0].mxu0
    %v2666 = vadd.f32 0.0, %v2665
    %v2667 = vpop.f32.mrb[0].mxu0
    %v2668 = vadd.f32 0.0, %v2667
    %v2669 = vpop.f32.mrb[0].mxu0
    %v2670 = vadd.f32 0.0, %v2669
    %2671 = vmatprep.mubr.bf16.mxu0 0
    %2672 = vmatmul.mubr.bf16.gmra.mrb[0].mxu0 %v227
    %v2673 = vpop.f32.mrb[0].mxu0
    %v2674 = vadd.f32 0.0, %v2673
    %v2675 = vpop.f32.mrb[0].mxu0
    %v2676 = vadd.f32 0.0, %v2675
    %v2677 = vpop.f32.mrb[0].mxu0
    %v2678 = vadd.f32 0.0, %v2677
    %v2679 = vpop.f32.mrb[0].mxu0
    %v2680 = vadd.f32 0.0, %v2679
    %2681 = vmatprep.mubr.bf16.mxu0 0
    %2682 = vmatmul.mubr.bf16.gmra.mrb[0].mxu0 %v230
    %v2683 = vpop.f32.mrb[0].mxu0
    %v2684 = vadd.f32 0.0, %v2683
    %v2685 = vpop.f32.mrb[0].mxu0
    %v2686 = vadd.f32 0.0, %v2685
    %v2687 = vpop.f32.mrb[0].mxu0
    %v2688 = vadd.f32 0.0, %v2687
    %v2689 = vpop.f32.mrb[0].mxu0
    %v2690 = vadd.f32 0.0, %v2689
    %2691 = vmatprep.mubr.bf16.mxu0 0
    %2692 = vmatmul.mubr.bf16.gmra.mrb[0].mxu0 %v233
    %v2693 = vpop.f32.mrb[0].mxu0
    %v2694 = vadd.f32 0.0, %v2693
    %v2695 = vpop.f32.mrb[0].mxu0
    %v2696 = vadd.f32 0.0, %v2695
    %v2697 = vpop.f32.mrb[0].mxu0
    %v2698 = vadd.f32 0.0, %v2697
    %v2699 = vpop.f32.mrb[0].mxu0
    %v2700 = vadd.f32 0.0, %v2699
    %2701 = vmatprep.mubr.bf16.mxu0 0
    %2702 = vmatmul.mubr.bf16.gmra.mrb[0].mxu0 %v236
    %v2703 = vpop.f32.mrb[0].mxu0
    %v2704 = vadd.f32 0.0, %v2703
    %v2705 = vpop.f32.mrb[0].mxu0
    %v2706 = vadd.f32 0.0, %v2705
    %v2707 = vpop.f32.mrb[0].mxu0
    %v2708 = vpop.f32.mrb[0].mxu0
    %2709 = vdwg.mxu0
    %2710 = vmatprep.subr.bf16.mxu0 %v2546
    %2711 = vmatpush1.bf16.msra.mxu0 %v2544
    %2712 = vmatprep.subr.bf16.mxu0 0
    %2713 = vmatpush1.bf16.msra.mxu0 0
    %2714 = vmatprep.subr.bf16.mxu0 0
    %2715 = vmatpush1.bf16.msra.mxu0 0
    %2716 = vmatprep.subr.bf16.mxu0 0
    %2717 = vmatpush1.bf16.msra.mxu0 0
    %2718 = vmatprep.subr.bf16.mxu0 0
    %2719 = vmatpush1.bf16.msra.mxu0 0
    %2720 = vmatprep.subr.bf16.mxu0 0
    %2721 = vmatpush1.bf16.msra.mxu0 0
    %2722 = vmatprep.subr.bf16.mxu0 0
    %2723 = vmatpush1.bf16.msra.mxu0 0
    %2724 = vmatprep.subr.bf16.mxu0 0
    %2725 = vmatpush1.bf16.msra.mxu0 0
    %2726 = vmatprep.subr.bf16.mxu0 0
    %2727 = vmatpush1.bf16.msra.mxu0 0
    %2728 = vmatprep.subr.bf16.mxu0 0
    %2729 = vmatpush1.bf16.msra.mxu0 0
    %2730 = vmatprep.subr.bf16.mxu0 0
    %2731 = vmatpush1.bf16.msra.mxu0 0
    %2732 = vmatprep.subr.bf16.mxu0 0
    %2733 = vmatpush1.bf16.msra.mxu0 0
    %2734 = vmatprep.subr.bf16.mxu0 0
    %2735 = vmatpush1.bf16.msra.mxu0 0
    %2736 = vmatprep.subr.bf16.mxu0 0
    %2737 = vmatpush1.bf16.msra.mxu0 0
    %2738 = vmatprep.subr.bf16.mxu0 0
    %2739 = vmatpush1.bf16.msra.mxu0 0
    %2740 = vmatprep.subr.bf16.mxu0 0
    %2741 = vmatpush1.bf16.msra.mxu0 0
    %2742 = vmatprep.mubr.bf16.mxu0 0
    %2743 = vmatmul.mubr.bf16.gmra.mrb[0].mxu0 %v224
    %v2744 = vpop.f32.mrb[0].mxu0
    %v2745 = vadd.f32 0.0, %v2744
    %v2746 = vpop.f32.mrb[0].mxu0
    %v2747 = vadd.f32 0.0, %v2746
    %v2748 = vpop.f32.mrb[0].mxu0
    %v2749 = vadd.f32 0.0, %v2748
    %v2750 = vpop.f32.mrb[0].mxu0
    %v2751 = vadd.f32 0.0, %v2750
    %2752 = vmatprep.mubr.bf16.mxu0 0
    %2753 = vmatmul.mubr.bf16.gmra.mrb[0].mxu0 %v227
    %v2754 = vpop.f32.mrb[0].mxu0
    %v2755 = vadd.f32 0.0, %v2754
    %v2756 = vpop.f32.mrb[0].mxu0
    %v2757 = vadd.f32 0.0, %v2756
    %v2758 = vpop.f32.mrb[0].mxu0
    %v2759 = vadd.f32 0.0, %v2758
    %v2760 = vpop.f32.mrb[0].mxu0
    %v2761 = vadd.f32 0.0, %v2760
    %2762 = vmatprep.mubr.bf16.mxu0 0
    %2763 = vmatmul.mubr.bf16.gmra.mrb[0].mxu0 %v230
    %v2764 = vpop.f32.mrb[0].mxu0
    %v2765 = vadd.f32 0.0, %v2764
    %v2766 = vpop.f32.mrb[0].mxu0
    %v2767 = vadd.f32 0.0, %v2766
    %v2768 = vpop.f32.mrb[0].mxu0
    %v2769 = vadd.f32 0.0, %v2768
    %v2770 = vpop.f32.mrb[0].mxu0
    %v2771 = vadd.f32 0.0, %v2770
    %2772 = vmatprep.mubr.bf16.mxu0 0
    %2773 = vmatmul.mubr.bf16.gmra.mrb[0].mxu0 %v233
    %v2774 = vpop.f32.mrb[0].mxu0
    %v2775 = vadd.f32 0.0, %v2774
    %v2776 = vpop.f32.mrb[0].mxu0
    %v2777 = vadd.f32 0.0, %v2776
    %v2778 = vpop.f32.mrb[0].mxu0
    %v2779 = vadd.f32 0.0, %v2778
    %v2780 = vpop.f32.mrb[0].mxu0
    %v2781 = vadd.f32 0.0, %v2780
    %2782 = vmatprep.mubr.bf16.mxu0 0
    %2783 = vmatmul.mubr.bf16.gmra.mrb[0].mxu0 %v236
    %v2784 = vpop.f32.mrb[0].mxu0
    %v2785 = vadd.f32 0.0, %v2784
    %v2786 = vpop.f32.mrb[0].mxu0
    %v2787 = vadd.f32 0.0, %v2786
    %v2788 = vpop.f32.mrb[0].mxu0
    %v2789 = vpop.f32.mrb[0].mxu0
    %2790 = vdwg.mxu0
    %2791 = vrot.lane.b32.xlu0 %v2583, 19
    %v2792 = vpop.permute.xlu0 %2791
    %2793 = vrot.lane.b32.xlu0 %v2585, 19
    %v2794 = vpop.permute.xlu0 %2793
    %2795 = vrot.lane.b32.xlu0 %v2664, 19
    %v2796 = vpop.permute.xlu0 %2795
    %2797 = vrot.lane.b32.xlu0 %v2666, 19
    %v2798 = vpop.permute.xlu0 %2797
    %2799 = vrot.lane.b32.xlu0 %v2745, 19
    %v2800 = vpop.permute.xlu0 %2799
    %2801 = vrot.lane.b32.xlu0 %v2747, 19
    %v2802 = vpop.permute.xlu0 %2801
    %v2803 = vsel %vm508, %v2800, %v2802
    %v2804 = vsel %vm508, %v2798, %v2800
    %v2805 = vsel %vm508, %v2796, %v2798
    %v2806 = vsel %vm508, %v2794, %v2796
    %v2807 = vsel %vm508, %v2792, %v2794
    %v2808 = vsel %vm508, %v2802, %v2792
    %2809 = vrot.lane.b32.xlu0 %v2587, 18
    %v2810 = vpop.permute.xlu0 %2809
    %2811 = vrot.lane.b32.xlu0 %v2589, 18
    %v2812 = vpop.permute.xlu0 %2811
    %2813 = vrot.lane.b32.xlu0 %v2668, 18
    %v2814 = vpop.permute.xlu0 %2813
    %2815 = vrot.lane.b32.xlu0 %v2670, 18
    %v2816 = vpop.permute.xlu0 %2815
    %2817 = vrot.lane.b32.xlu0 %v2749, 18
    %v2818 = vpop.permute.xlu0 %2817
    %2819 = vrot.lane.b32.xlu0 %v2751, 18
    %v2820 = vpop.permute.xlu0 %2819
    %v2821 = vsel %vm527, %v2818, %v2820
    %v2822 = vsel %vm527, %v2816, %v2818
    %v2823 = vsel %vm527, %v2814, %v2816
    %v2824 = vsel %vm527, %v2812, %v2814
    %v2825 = vsel %vm527, %v2810, %v2812
    %v2826 = vsel %vm527, %v2820, %v2810
    %v2827 = vadd.f32 %v2808, %v2826
    %v2828 = vadd.f32 %v2807, %v2825
    %v2829 = vadd.f32 %v2806, %v2824
    %v2830 = vadd.f32 %v2805, %v2823
    %v2831 = vadd.f32 %v2804, %v2822
    %v2832 = vadd.f32 %v2803, %v2821
    %2833 = vrot.lane.b32.xlu0 %v2593, 17
    %v2834 = vpop.permute.xlu0 %2833
    %2835 = vrot.lane.b32.xlu0 %v2595, 17
    %v2836 = vpop.permute.xlu0 %2835
    %2837 = vrot.lane.b32.xlu0 %v2674, 17
    %v2838 = vpop.permute.xlu0 %2837
    %2839 = vrot.lane.b32.xlu0 %v2676, 17
    %v2840 = vpop.permute.xlu0 %2839
    %2841 = vrot.lane.b32.xlu0 %v2755, 17
    %v2842 = vpop.permute.xlu0 %2841
    %2843 = vrot.lane.b32.xlu0 %v2757, 17
    %v2844 = vpop.permute.xlu0 %2843
    %v2845 = vsel %vm552, %v2842, %v2844
    %v2846 = vsel %vm552, %v2840, %v2842
    %v2847 = vsel %vm552, %v2838, %v2840
    %v2848 = vsel %vm552, %v2836, %v2838
    %v2849 = vsel %vm552, %v2834, %v2836
    %v2850 = vsel %vm552, %v2844, %v2834
    %v2851 = vadd.f32 %v2827, %v2850
    %v2852 = vadd.f32 %v2828, %v2849
    %v2853 = vadd.f32 %v2829, %v2848
    %v2854 = vadd.f32 %v2830, %v2847
    %v2855 = vadd.f32 %v2831, %v2846
    %v2856 = vadd.f32 %v2832, %v2845
    %2857 = vrot.lane.b32.xlu0 %v2597, 1
    %v2858 = vpop.permute.xlu0 %2857
    %2859 = vrot.lane.b32.xlu0 %v2599, 1
    %v2860 = vpop.permute.xlu0 %2859
    %2861 = vrot.lane.b32.xlu0 %v2678, 1
    %v2862 = vpop.permute.xlu0 %2861
    %2863 = vrot.lane.b32.xlu0 %v2680, 1
    %v2864 = vpop.permute.xlu0 %2863
    %2865 = vrot.lane.b32.xlu0 %v2759, 1
    %v2866 = vpop.permute.xlu0 %2865
    %2867 = vrot.lane.b32.xlu0 %v2761, 1
    %v2868 = vpop.permute.xlu0 %2867
    %v2869 = vsel %vm577, %v2866, %v2868
    %v2870 = vsel %vm577, %v2864, %v2866
    %v2871 = vsel %vm577, %v2862, %v2864
    %v2872 = vsel %vm577, %v2860, %v2862
    %v2873 = vsel %vm577, %v2858, %v2860
    %v2874 = vsel %vm577, %v2868, %v2858
    %v2875 = vadd.f32 %v2851, %v2874
    %v2876 = vadd.f32 %v2852, %v2873
    %v2877 = vadd.f32 %v2853, %v2872
    %v2878 = vadd.f32 %v2854, %v2871
    %v2879 = vadd.f32 %v2855, %v2870
    %v2880 = vadd.f32 %v2856, %v2869
    %v2881 = vadd.f32 %v2875, %v2603
    %v2882 = vadd.f32 %v2876, %v2605
    %v2883 = vadd.f32 %v2877, %v2684
    %v2884 = vadd.f32 %v2878, %v2686
    %v2885 = vadd.f32 %v2879, %v2765
    %v2886 = vadd.f32 %v2880, %v2767
    %2887 = vrot.lane.b32.xlu0 %v2607, 127
    %v2888 = vpop.permute.xlu0 %2887
    %2889 = vrot.lane.b32.xlu0 %v2609, 127
    %v2890 = vpop.permute.xlu0 %2889
    %2891 = vrot.lane.b32.xlu0 %v2688, 127
    %v2892 = vpop.permute.xlu0 %2891
    %2893 = vrot.lane.b32.xlu0 %v2690, 127
    %v2894 = vpop.permute.xlu0 %2893
    %2895 = vrot.lane.b32.xlu0 %v2769, 127
    %v2896 = vpop.permute.xlu0 %2895
    %2897 = vrot.lane.b32.xlu0 %v2771, 127
    %v2898 = vpop.permute.xlu0 %2897
    %v2899 = vsel %vm608, %v2896, %v2898
    %v2900 = vsel %vm608, %v2894, %v2896
    %v2901 = vsel %vm608, %v2892, %v2894
    %v2902 = vsel %vm608, %v2890, %v2892
    %v2903 = vsel %vm608, %v2888, %v2890
    %v2904 = vsel %vm608, %v2898, %v2888
    %v2905 = vadd.f32 %v2881, %v2903
    %v2906 = vadd.f32 %v2882, %v2902
    %v2907 = vadd.f32 %v2883, %v2901
    %v2908 = vadd.f32 %v2884, %v2900
    %v2909 = vadd.f32 %v2885, %v2899
    %v2910 = vadd.f32 %v2886, %v2904
    %2911 = vrot.lane.b32.xlu0 %v2613, 111
    %v2912 = vpop.permute.xlu0 %2911
    %2913 = vrot.lane.b32.xlu0 %v2615, 111
    %v2914 = vpop.permute.xlu0 %2913
    %2915 = vrot.lane.b32.xlu0 %v2694, 111
    %v2916 = vpop.permute.xlu0 %2915
    %2917 = vrot.lane.b32.xlu0 %v2696, 111
    %v2918 = vpop.permute.xlu0 %2917
    %2919 = vrot.lane.b32.xlu0 %v2775, 111
    %v2920 = vpop.permute.xlu0 %2919
    %2921 = vrot.lane.b32.xlu0 %v2777, 111
    %v2922 = vpop.permute.xlu0 %2921
    %v2923 = vsel %vm633, %v2920, %v2922
    %v2924 = vsel %vm633, %v2918, %v2920
    %v2925 = vsel %vm633, %v2916, %v2918
    %v2926 = vsel %vm633, %v2914, %v2916
    %v2927 = vsel %vm633, %v2912, %v2914
    %v2928 = vsel %vm633, %v2922, %v2912
    %v2929 = vadd.f32 %v2905, %v2927
    %v2930 = vadd.f32 %v2906, %v2926
    %v2931 = vadd.f32 %v2907, %v2925
    %v2932 = vadd.f32 %v2908, %v2924
    %v2933 = vadd.f32 %v2909, %v2923
    %v2934 = vadd.f32 %v2910, %v2928
    %2935 = vrot.lane.b32.xlu0 %v2617, 110
    %v2936 = vpop.permute.xlu0 %2935
    %2937 = vrot.lane.b32.xlu0 %v2619, 110
    %v2938 = vpop.permute.xlu0 %2937
    %2939 = vrot.lane.b32.xlu0 %v2698, 110
    %v2940 = vpop.permute.xlu0 %2939
    %2941 = vrot.lane.b32.xlu0 %v2700, 110
    %v2942 = vpop.permute.xlu0 %2941
    %2943 = vrot.lane.b32.xlu0 %v2779, 110
    %v2944 = vpop.permute.xlu0 %2943
    %2945 = vrot.lane.b32.xlu0 %v2781, 110
    %v2946 = vpop.permute.xlu0 %2945
    %v2947 = vsel %vm658, %v2944, %v2946
    %v2948 = vsel %vm658, %v2942, %v2944
    %v2949 = vsel %vm658, %v2940, %v2942
    %v2950 = vsel %vm658, %v2938, %v2940
    %v2951 = vsel %vm658, %v2936, %v2938
    %v2952 = vsel %vm658, %v2946, %v2936
    %v2953 = vadd.f32 %v2929, %v2951
    %v2954 = vadd.f32 %v2930, %v2950
    %v2955 = vadd.f32 %v2931, %v2949
    %v2956 = vadd.f32 %v2932, %v2948
    %v2957 = vadd.f32 %v2933, %v2947
    %v2958 = vadd.f32 %v2934, %v2952
    %2959 = vrot.lane.b32.xlu0 %v2623, 109
    %v2960 = vpop.permute.xlu0 %2959
    %2961 = vrot.lane.b32.xlu0 %v2625, 109
    %v2962 = vpop.permute.xlu0 %2961
    %2963 = vrot.lane.b32.xlu0 %v2704, 109
    %v2964 = vpop.permute.xlu0 %2963
    %2965 = vrot.lane.b32.xlu0 %v2706, 109
    %v2966 = vpop.permute.xlu0 %2965
    %2967 = vrot.lane.b32.xlu0 %v2785, 109
    %v2968 = vpop.permute.xlu0 %2967
    %2969 = vrot.lane.b32.xlu0 %v2787, 109
    %v2970 = vpop.permute.xlu0 %2969
    %v2971 = vsel %vm683, %v2968, %v2970
    %v2972 = vsel %vm683, %v2966, %v2968
    %v2973 = vsel %vm683, %v2964, %v2966
    %v2974 = vsel %vm683, %v2962, %v2964
    %v2975 = vsel %vm683, %v2960, %v2962
    %v2976 = vsel %vm683, %v2970, %v2960
    %v2977 = vadd.f32 %v2953, %v2975
    %v2978 = vadd.f32 %v2954, %v2974
    %v2979 = vadd.f32 %v2955, %v2973
    %v2980 = vadd.f32 %v2956, %v2972
    %v2981 = vadd.f32 %v2957, %v2971
    %v2982 = vadd.f32 %v2958, %v2976
    %s2983 = scalar_lea.vmem [#allocation2], 192
    %2984 = vst [vmem:[%s2983] sm:$0xff] %v2977
    %2985 = vst [vmem:[%s2983 + $0x8] sm:$0xff] %v2978
    %2986 = vst [vmem:[%s2983 + $0x10] sm:$0xff] %v2979
    %2987 = vst [vmem:[%s2983 + $0x18] sm:$0xff] %v2980
    %2988 = vst [vmem:[%s2983 + $0x20] sm:$0xff] %v2981
    %2989 = vst [vmem:[%s2983 + $0x28] sm:$0xff] %v2982
    %s2990 = scalar_lea.vmem [#allocation3], 30
    %v2991 = vld [vmem:[%s2990] sm:$0x3f]
    %v2992 = vmax.bf16 %v2991, 0
    %v2993 = vmin.bf16 %v2991, 0
    %v2995 = vcombine.high %v2992, %v2992
    %v2997 = vunpack.c.l.s4 1966171168
    %v2998 = vunpack.c.0.s8 %v2997
    %v2999 = vlaneseq
    %v3000 = vshrl.u32 %v2999, 7
    %v3001 = vsub.s32 %v2998, %v3000
    %v3002 = vrot.slane %v2992, %v3001
    %v3004 = vunpack.c.l.s4 1966171168
    %v3005 = vunpack.c.0.s8 %v3004
    %v3006 = vlaneseq
    %v3007 = vshrl.u32 %v3006, 7
    %v3008 = vsub.s32 %v3005, %v3007
    %v3009 = vrot.slane %v2995, %v3008
    %v3010 = vcombine.high %v3002, %v3002
    %v3011 = vcombine.high %v3009, %v3009
    %v3013 = vunpack.c.l.s4 1966171168
    %v3014 = vunpack.c.0.s8 %v3013
    %v3015 = vlaneseq
    %v3016 = vshrl.u32 %v3015, 7
    %v3017 = vsub.s32 %v3014, %v3016
    %v3018 = vrot.slane %v3002, %v3017
    %v3020 = vunpack.c.l.s4 1966171168
    %v3021 = vunpack.c.0.s8 %v3020
    %v3022 = vlaneseq
    %v3023 = vshrl.u32 %v3022, 7
    %v3024 = vsub.s32 %v3021, %v3023
    %v3025 = vrot.slane %v3009, %v3024
    %v3027 = vunpack.c.l.s4 1966171168
    %v3028 = vunpack.c.0.s8 %v3027
    %v3029 = vlaneseq
    %v3030 = vshrl.u32 %v3029, 7
    %v3031 = vsub.s32 %v3028, %v3030
    %v3032 = vrot.slane %v3010, %v3031
    %v3034 = vunpack.c.l.s4 1966171168
    %v3035 = vunpack.c.0.s8 %v3034
    %v3036 = vlaneseq
    %v3037 = vshrl.u32 %v3036, 7
    %v3038 = vsub.s32 %v3035, %v3037
    %v3039 = vrot.slane %v3011, %v3038
    %v3040 = vcombine.high %v3018, %v3018
    %v3041 = vcombine.high %v3032, %v3032
    %v3043 = vcombine.low %v2993, %v2993
    %v3045 = vunpack.c.l.s4 1966171168
    %v3046 = vunpack.c.0.s8 %v3045
    %v3047 = vlaneseq
    %v3048 = vshrl.u32 %v3047, 7
    %v3049 = vsub.s32 %v3046, %v3048
    %v3050 = vrot.slane %v3043, %v3049
    %v3052 = vunpack.c.l.s4 1966171168
    %v3053 = vunpack.c.0.s8 %v3052
    %v3054 = vlaneseq
    %v3055 = vshrl.u32 %v3054, 7
    %v3056 = vsub.s32 %v3053, %v3055
    %v3057 = vrot.slane %v2993, %v3056
    %v3058 = vcombine.high %v3050, %v3050
    %v3059 = vcombine.high %v3057, %v3057
    %v3061 = vunpack.c.l.s4 1966171168
    %v3062 = vunpack.c.0.s8 %v3061
    %v3063 = vlaneseq
    %v3064 = vshrl.u32 %v3063, 7
    %v3065 = vsub.s32 %v3062, %v3064
    %v3066 = vrot.slane %v3050, %v3065
    %v3068 = vunpack.c.l.s4 1966171168
    %v3069 = vunpack.c.0.s8 %v3068
    %v3070 = vlaneseq
    %v3071 = vshrl.u32 %v3070, 7
    %v3072 = vsub.s32 %v3069, %v3071
    %v3073 = vrot.slane %v3057, %v3072
    %v3075 = vunpack.c.l.s4 1966171168
    %v3076 = vunpack.c.0.s8 %v3075
    %v3077 = vlaneseq
    %v3078 = vshrl.u32 %v3077, 7
    %v3079 = vsub.s32 %v3076, %v3078
    %v3080 = vrot.slane %v3058, %v3079
    %v3082 = vunpack.c.l.s4 1966171168
    %v3083 = vunpack.c.0.s8 %v3082
    %v3084 = vlaneseq
    %v3085 = vshrl.u32 %v3084, 7
    %v3086 = vsub.s32 %v3083, %v3085
    %v3087 = vrot.slane %v3059, %v3086
    %v3088 = vcombine.high %v3066, %v3066
    %v3089 = vcombine.high %v3080, %v3080
    %v3092 = vsel %vm180, %v3018, %v3066
    %v3095 = vsel %vm180, %v3032, %v3080
    %v3098 = vsel %vm180, %v3040, %v3088
    %v3101 = vsel %vm180, %v3041, %v3089
    %v3104 = vsel %vm180, %v3025, %v3073
    %v3107 = vsel %vm180, %v3039, %v3087
    %v3108 = vsel %vm238, %v3092, 0
    %v3110 = vsel %vm238, %v3095, 0
    %v3112 = vsel %vm238, %v3098, 0
    %v3114 = vsel %vm238, %v3101, 0
    %v3116 = vsel %vm238, %v3104, 0
    %v3118 = vsel %vm238, %v3107, 0
    %3120 = vmatprep.subr.bf16.mxu0 %v3110
    %3121 = vmatpush1.bf16.msra.mxu0 %v3108
    %3122 = vmatprep.subr.bf16.mxu0 0
    %3123 = vmatpush1.bf16.msra.mxu0 0
    %3124 = vmatprep.subr.bf16.mxu0 0
    %3125 = vmatpush1.bf16.msra.mxu0 0
    %3126 = vmatprep.subr.bf16.mxu0 0
    %3127 = vmatpush1.bf16.msra.mxu0 0
    %3128 = vmatprep.subr.bf16.mxu0 0
    %3129 = vmatpush1.bf16.msra.mxu0 0
    %3130 = vmatprep.subr.bf16.mxu0 0
    %3131 = vmatpush1.bf16.msra.mxu0 0
    %3132 = vmatprep.subr.bf16.mxu0 0
    %3133 = vmatpush1.bf16.msra.mxu0 0
    %3134 = vmatprep.subr.bf16.mxu0 0
    %3135 = vmatpush1.bf16.msra.mxu0 0
    %3136 = vmatprep.subr.bf16.mxu0 0
    %3137 = vmatpush1.bf16.msra.mxu0 0
    %3138 = vmatprep.subr.bf16.mxu0 0
    %3139 = vmatpush1.bf16.msra.mxu0 0
    %3140 = vmatprep.subr.bf16.mxu0 0
    %3141 = vmatpush1.bf16.msra.mxu0 0
    %3142 = vmatprep.subr.bf16.mxu0 0
    %3143 = vmatpush1.bf16.msra.mxu0 0
    %3144 = vmatprep.subr.bf16.mxu0 0
    %3145 = vmatpush1.bf16.msra.mxu0 0
    %3146 = vmatprep.subr.bf16.mxu0 0
    %3147 = vmatpush1.bf16.msra.mxu0 0
    %3148 = vmatprep.subr.bf16.mxu0 0
    %3149 = vmatpush1.bf16.msra.mxu0 0
    %3150 = vmatprep.subr.bf16.mxu0 0
    %3151 = vmatpush1.bf16.msra.mxu0 0
    %3152 = vmatprep.mubr.bf16.mxu0 0
    %3153 = vmatmul.mubr.bf16.gmra.mrb[0].mxu0 %v224
    %v3154 = vpop.f32.mrb[0].mxu0
    %v3155 = vadd.f32 0.0, %v3154
    %v3156 = vpop.f32.mrb[0].mxu0
    %v3157 = vadd.f32 0.0, %v3156
    %v3158 = vpop.f32.mrb[0].mxu0
    %v3159 = vadd.f32 0.0, %v3158
    %v3160 = vpop.f32.mrb[0].mxu0
    %v3161 = vadd.f32 0.0, %v3160
    %3162 = vmatprep.mubr.bf16.mxu0 0
    %3163 = vmatmul.mubr.bf16.gmra.mrb[0].mxu0 %v227
    %v3164 = vpop.f32.mrb[0].mxu0
    %v3165 = vadd.f32 0.0, %v3164
    %v3166 = vpop.f32.mrb[0].mxu0
    %v3167 = vadd.f32 0.0, %v3166
    %v3168 = vpop.f32.mrb[0].mxu0
    %v3169 = vadd.f32 0.0, %v3168
    %v3170 = vpop.f32.mrb[0].mxu0
    %v3171 = vadd.f32 0.0, %v3170
    %3172 = vmatprep.mubr.bf16.mxu0 0
    %3173 = vmatmul.mubr.bf16.gmra.mrb[0].mxu0 %v230
    %v3174 = vpop.f32.mrb[0].mxu0
    %v3175 = vadd.f32 0.0, %v3174
    %v3176 = vpop.f32.mrb[0].mxu0
    %v3177 = vadd.f32 0.0, %v3176
    %v3178 = vpop.f32.mrb[0].mxu0
    %v3179 = vadd.f32 0.0, %v3178
    %v3180 = vpop.f32.mrb[0].mxu0
    %v3181 = vadd.f32 0.0, %v3180
    %3182 = vmatprep.mubr.bf16.mxu0 0
    %3183 = vmatmul.mubr.bf16.gmra.mrb[0].mxu0 %v233
    %v3184 = vpop.f32.mrb[0].mxu0
    %v3185 = vadd.f32 0.0, %v3184
    %v3186 = vpop.f32.mrb[0].mxu0
    %v3187 = vadd.f32 0.0, %v3186
    %v3188 = vpop.f32.mrb[0].mxu0
    %v3189 = vadd.f32 0.0, %v3188
    %v3190 = vpop.f32.mrb[0].mxu0
    %v3191 = vadd.f32 0.0, %v3190
    %3192 = vmatprep.mubr.bf16.mxu0 0
    %3193 = vmatmul.mubr.bf16.gmra.mrb[0].mxu0 %v236
    %v3194 = vpop.f32.mrb[0].mxu0
    %v3195 = vadd.f32 0.0, %v3194
    %v3196 = vpop.f32.mrb[0].mxu0
    %v3197 = vadd.f32 0.0, %v3196
    %v3198 = vpop.f32.mrb[0].mxu0
    %v3199 = vpop.f32.mrb[0].mxu0
    %3200 = vdwg.mxu0
    %3201 = vmatprep.subr.bf16.mxu0 %v3114
    %3202 = vmatpush1.bf16.msra.mxu0 %v3112
    %3203 = vmatprep.subr.bf16.mxu0 0
    %3204 = vmatpush1.bf16.msra.mxu0 0
    %3205 = vmatprep.subr.bf16.mxu0 0
    %3206 = vmatpush1.bf16.msra.mxu0 0
    %3207 = vmatprep.subr.bf16.mxu0 0
    %3208 = vmatpush1.bf16.msra.mxu0 0
    %3209 = vmatprep.subr.bf16.mxu0 0
    %3210 = vmatpush1.bf16.msra.mxu0 0
    %3211 = vmatprep.subr.bf16.mxu0 0
    %3212 = vmatpush1.bf16.msra.mxu0 0
    %3213 = vmatprep.subr.bf16.mxu0 0
    %3214 = vmatpush1.bf16.msra.mxu0 0
    %3215 = vmatprep.subr.bf16.mxu0 0
    %3216 = vmatpush1.bf16.msra.mxu0 0
    %3217 = vmatprep.subr.bf16.mxu0 0
    %3218 = vmatpush1.bf16.msra.mxu0 0
    %3219 = vmatprep.subr.bf16.mxu0 0
    %3220 = vmatpush1.bf16.msra.mxu0 0
    %3221 = vmatprep.subr.bf16.mxu0 0
    %3222 = vmatpush1.bf16.msra.mxu0 0
    %3223 = vmatprep.subr.bf16.mxu0 0
    %3224 = vmatpush1.bf16.msra.mxu0 0
    %3225 = vmatprep.subr.bf16.mxu0 0
    %3226 = vmatpush1.bf16.msra.mxu0 0
    %3227 = vmatprep.subr.bf16.mxu0 0
    %3228 = vmatpush1.bf16.msra.mxu0 0
    %3229 = vmatprep.subr.bf16.mxu0 0
    %3230 = vmatpush1.bf16.msra.mxu0 0
    %3231 = vmatprep.subr.bf16.mxu0 0
    %3232 = vmatpush1.bf16.msra.mxu0 0
    %3233 = vmatprep.mubr.bf16.mxu0 0
    %3234 = vmatmul.mubr.bf16.gmra.mrb[0].mxu0 %v224
    %v3235 = vpop.f32.mrb[0].mxu0
    %v3236 = vadd.f32 0.0, %v3235
    %v3237 = vpop.f32.mrb[0].mxu0
    %v3238 = vadd.f32 0.0, %v3237
    %v3239 = vpop.f32.mrb[0].mxu0
    %v3240 = vadd.f32 0.0, %v3239
    %v3241 = vpop.f32.mrb[0].mxu0
    %v3242 = vadd.f32 0.0, %v3241
    %3243 = vmatprep.mubr.bf16.mxu0 0
    %3244 = vmatmul.mubr.bf16.gmra.mrb[0].mxu0 %v227
    %v3245 = vpop.f32.mrb[0].mxu0
    %v3246 = vadd.f32 0.0, %v3245
    %v3247 = vpop.f32.mrb[0].mxu0
    %v3248 = vadd.f32 0.0, %v3247
    %v3249 = vpop.f32.mrb[0].mxu0
    %v3250 = vadd.f32 0.0, %v3249
    %v3251 = vpop.f32.mrb[0].mxu0
    %v3252 = vadd.f32 0.0, %v3251
    %3253 = vmatprep.mubr.bf16.mxu0 0
    %3254 = vmatmul.mubr.bf16.gmra.mrb[0].mxu0 %v230
    %v3255 = vpop.f32.mrb[0].mxu0
    %v3256 = vadd.f32 0.0, %v3255
    %v3257 = vpop.f32.mrb[0].mxu0
    %v3258 = vadd.f32 0.0, %v3257
    %v3259 = vpop.f32.mrb[0].mxu0
    %v3260 = vadd.f32 0.0, %v3259
    %v3261 = vpop.f32.mrb[0].mxu0
    %v3262 = vadd.f32 0.0, %v3261
    %3263 = vmatprep.mubr.bf16.mxu0 0
    %3264 = vmatmul.mubr.bf16.gmra.mrb[0].mxu0 %v233
    %v3265 = vpop.f32.mrb[0].mxu0
    %v3266 = vadd.f32 0.0, %v3265
    %v3267 = vpop.f32.mrb[0].mxu0
    %v3268 = vadd.f32 0.0, %v3267
    %v3269 = vpop.f32.mrb[0].mxu0
    %v3270 = vadd.f32 0.0, %v3269
    %v3271 = vpop.f32.mrb[0].mxu0
    %v3272 = vadd.f32 0.0, %v3271
    %3273 = vmatprep.mubr.bf16.mxu0 0
    %3274 = vmatmul.mubr.bf16.gmra.mrb[0].mxu0 %v236
    %v3275 = vpop.f32.mrb[0].mxu0
    %v3276 = vadd.f32 0.0, %v3275
    %v3277 = vpop.f32.mrb[0].mxu0
    %v3278 = vadd.f32 0.0, %v3277
    %v3279 = vpop.f32.mrb[0].mxu0
    %v3280 = vpop.f32.mrb[0].mxu0
    %3281 = vdwg.mxu0
    %3282 = vmatprep.subr.bf16.mxu0 %v3118
    %3283 = vmatpush1.bf16.msra.mxu0 %v3116
    %3284 = vmatprep.subr.bf16.mxu0 0
    %3285 = vmatpush1.bf16.msra.mxu0 0
    %3286 = vmatprep.subr.bf16.mxu0 0
    %3287 = vmatpush1.bf16.msra.mxu0 0
    %3288 = vmatprep.subr.bf16.mxu0 0
    %3289 = vmatpush1.bf16.msra.mxu0 0
    %3290 = vmatprep.subr.bf16.mxu0 0
    %3291 = vmatpush1.bf16.msra.mxu0 0
    %3292 = vmatprep.subr.bf16.mxu0 0
    %3293 = vmatpush1.bf16.msra.mxu0 0
    %3294 = vmatprep.subr.bf16.mxu0 0
    %3295 = vmatpush1.bf16.msra.mxu0 0
    %3296 = vmatprep.subr.bf16.mxu0 0
    %3297 = vmatpush1.bf16.msra.mxu0 0
    %3298 = vmatprep.subr.bf16.mxu0 0
    %3299 = vmatpush1.bf16.msra.mxu0 0
    %3300 = vmatprep.subr.bf16.mxu0 0
    %3301 = vmatpush1.bf16.msra.mxu0 0
    %3302 = vmatprep.subr.bf16.mxu0 0
    %3303 = vmatpush1.bf16.msra.mxu0 0
    %3304 = vmatprep.subr.bf16.mxu0 0
    %3305 = vmatpush1.bf16.msra.mxu0 0
    %3306 = vmatprep.subr.bf16.mxu0 0
    %3307 = vmatpush1.bf16.msra.mxu0 0
    %3308 = vmatprep.subr.bf16.mxu0 0
    %3309 = vmatpush1.bf16.msra.mxu0 0
    %3310 = vmatprep.subr.bf16.mxu0 0
    %3311 = vmatpush1.bf16.msra.mxu0 0
    %3312 = vmatprep.subr.bf16.mxu0 0
    %3313 = vmatpush1.bf16.msra.mxu0 0
    %3314 = vmatprep.mubr.bf16.mxu0 0
    %3315 = vmatmul.mubr.bf16.gmra.mrb[0].mxu0 %v224
    %v3316 = vpop.f32.mrb[0].mxu0
    %v3317 = vadd.f32 0.0, %v3316
    %v3318 = vpop.f32.mrb[0].mxu0
    %v3319 = vadd.f32 0.0, %v3318
    %v3320 = vpop.f32.mrb[0].mxu0
    %v3321 = vadd.f32 0.0, %v3320
    %v3322 = vpop.f32.mrb[0].mxu0
    %v3323 = vadd.f32 0.0, %v3322
    %3324 = vmatprep.mubr.bf16.mxu0 0
    %3325 = vmatmul.mubr.bf16.gmra.mrb[0].mxu0 %v227
    %v3326 = vpop.f32.mrb[0].mxu0
    %v3327 = vadd.f32 0.0, %v3326
    %v3328 = vpop.f32.mrb[0].mxu0
    %v3329 = vadd.f32 0.0, %v3328
    %v3330 = vpop.f32.mrb[0].mxu0
    %v3331 = vadd.f32 0.0, %v3330
    %v3332 = vpop.f32.mrb[0].mxu0
    %v3333 = vadd.f32 0.0, %v3332
    %3334 = vmatprep.mubr.bf16.mxu0 0
    %3335 = vmatmul.mubr.bf16.gmra.mrb[0].mxu0 %v230
    %v3336 = vpop.f32.mrb[0].mxu0
    %v3337 = vadd.f32 0.0, %v3336
    %v3338 = vpop.f32.mrb[0].mxu0
    %v3339 = vadd.f32 0.0, %v3338
    %v3340 = vpop.f32.mrb[0].mxu0
    %v3341 = vadd.f32 0.0, %v3340
    %v3342 = vpop.f32.mrb[0].mxu0
    %v3343 = vadd.f32 0.0, %v3342
    %3344 = vmatprep.mubr.bf16.mxu0 0
    %3345 = vmatmul.mubr.bf16.gmra.mrb[0].mxu0 %v233
    %v3346 = vpop.f32.mrb[0].mxu0
    %v3347 = vadd.f32 0.0, %v3346
    %v3348 = vpop.f32.mrb[0].mxu0
    %v3349 = vadd.f32 0.0, %v3348
    %v3350 = vpop.f32.mrb[0].mxu0
    %v3351 = vadd.f32 0.0, %v3350
    %v3352 = vpop.f32.mrb[0].mxu0
    %v3353 = vadd.f32 0.0, %v3352
    %3354 = vmatprep.mubr.bf16.mxu0 0
    %3355 = vmatmul.mubr.bf16.gmra.mrb[0].mxu0 %v236
    %v3356 = vpop.f32.mrb[0].mxu0
    %v3357 = vadd.f32 0.0, %v3356
    %v3358 = vpop.f32.mrb[0].mxu0
    %v3359 = vadd.f32 0.0, %v3358
    %v3360 = vpop.f32.mrb[0].mxu0
    %v3361 = vpop.f32.mrb[0].mxu0
    %3362 = vdwg.mxu0
    %3363 = vrot.lane.b32.xlu0 %v3155, 19
    %v3364 = vpop.permute.xlu0 %3363
    %3365 = vrot.lane.b32.xlu0 %v3157, 19
    %v3366 = vpop.permute.xlu0 %3365
    %3367 = vrot.lane.b32.xlu0 %v3236, 19
    %v3368 = vpop.permute.xlu0 %3367
    %3369 = vrot.lane.b32.xlu0 %v3238, 19
    %v3370 = vpop.permute.xlu0 %3369
    %3371 = vrot.lane.b32.xlu0 %v3317, 19
    %v3372 = vpop.permute.xlu0 %3371
    %3373 = vrot.lane.b32.xlu0 %v3319, 19
    %v3374 = vpop.permute.xlu0 %3373
    %v3375 = vsel %vm508, %v3372, %v3374
    %v3376 = vsel %vm508, %v3370, %v3372
    %v3377 = vsel %vm508, %v3368, %v3370
    %v3378 = vsel %vm508, %v3366, %v3368
    %v3379 = vsel %vm508, %v3364, %v3366
    %v3380 = vsel %vm508, %v3374, %v3364
    %3381 = vrot.lane.b32.xlu0 %v3159, 18
    %v3382 = vpop.permute.xlu0 %3381
    %3383 = vrot.lane.b32.xlu0 %v3161, 18
    %v3384 = vpop.permute.xlu0 %3383
    %3385 = vrot.lane.b32.xlu0 %v3240, 18
    %v3386 = vpop.permute.xlu0 %3385
    %3387 = vrot.lane.b32.xlu0 %v3242, 18
    %v3388 = vpop.permute.xlu0 %3387
    %3389 = vrot.lane.b32.xlu0 %v3321, 18
    %v3390 = vpop.permute.xlu0 %3389
    %3391 = vrot.lane.b32.xlu0 %v3323, 18
    %v3392 = vpop.permute.xlu0 %3391
    %v3393 = vsel %vm527, %v3390, %v3392
    %v3394 = vsel %vm527, %v3388, %v3390
    %v3395 = vsel %vm527, %v3386, %v3388
    %v3396 = vsel %vm527, %v3384, %v3386
    %v3397 = vsel %vm527, %v3382, %v3384
    %v3398 = vsel %vm527, %v3392, %v3382
    %v3399 = vadd.f32 %v3380, %v3398
    %v3400 = vadd.f32 %v3379, %v3397
    %v3401 = vadd.f32 %v3378, %v3396
    %v3402 = vadd.f32 %v3377, %v3395
    %v3403 = vadd.f32 %v3376, %v3394
    %v3404 = vadd.f32 %v3375, %v3393
    %3405 = vrot.lane.b32.xlu0 %v3165, 17
    %v3406 = vpop.permute.xlu0 %3405
    %3407 = vrot.lane.b32.xlu0 %v3167, 17
    %v3408 = vpop.permute.xlu0 %3407
    %3409 = vrot.lane.b32.xlu0 %v3246, 17
    %v3410 = vpop.permute.xlu0 %3409
    %3411 = vrot.lane.b32.xlu0 %v3248, 17
    %v3412 = vpop.permute.xlu0 %3411
    %3413 = vrot.lane.b32.xlu0 %v3327, 17
    %v3414 = vpop.permute.xlu0 %3413
    %3415 = vrot.lane.b32.xlu0 %v3329, 17
    %v3416 = vpop.permute.xlu0 %3415
    %v3417 = vsel %vm552, %v3414, %v3416
    %v3418 = vsel %vm552, %v3412, %v3414
    %v3419 = vsel %vm552, %v3410, %v3412
    %v3420 = vsel %vm552, %v3408, %v3410
    %v3421 = vsel %vm552, %v3406, %v3408
    %v3422 = vsel %vm552, %v3416, %v3406
    %v3423 = vadd.f32 %v3399, %v3422
    %v3424 = vadd.f32 %v3400, %v3421
    %v3425 = vadd.f32 %v3401, %v3420
    %v3426 = vadd.f32 %v3402, %v3419
    %v3427 = vadd.f32 %v3403, %v3418
    %v3428 = vadd.f32 %v3404, %v3417
    %3429 = vrot.lane.b32.xlu0 %v3169, 1
    %v3430 = vpop.permute.xlu0 %3429
    %3431 = vrot.lane.b32.xlu0 %v3171, 1
    %v3432 = vpop.permute.xlu0 %3431
    %3433 = vrot.lane.b32.xlu0 %v3250, 1
    %v3434 = vpop.permute.xlu0 %3433
    %3435 = vrot.lane.b32.xlu0 %v3252, 1
    %v3436 = vpop.permute.xlu0 %3435
    %3437 = vrot.lane.b32.xlu0 %v3331, 1
    %v3438 = vpop.permute.xlu0 %3437
    %3439 = vrot.lane.b32.xlu0 %v3333, 1
    %v3440 = vpop.permute.xlu0 %3439
    %v3441 = vsel %vm577, %v3438, %v3440
    %v3442 = vsel %vm577, %v3436, %v3438
    %v3443 = vsel %vm577, %v3434, %v3436
    %v3444 = vsel %vm577, %v3432, %v3434
    %v3445 = vsel %vm577, %v3430, %v3432
    %v3446 = vsel %vm577, %v3440, %v3430
    %v3447 = vadd.f32 %v3423, %v3446
    %v3448 = vadd.f32 %v3424, %v3445
    %v3449 = vadd.f32 %v3425, %v3444
    %v3450 = vadd.f32 %v3426, %v3443
    %v3451 = vadd.f32 %v3427, %v3442
    %v3452 = vadd.f32 %v3428, %v3441
    %v3453 = vadd.f32 %v3447, %v3175
    %v3454 = vadd.f32 %v3448, %v3177
    %v3455 = vadd.f32 %v3449, %v3256
    %v3456 = vadd.f32 %v3450, %v3258
    %v3457 = vadd.f32 %v3451, %v3337
    %v3458 = vadd.f32 %v3452, %v3339
    %3459 = vrot.lane.b32.xlu0 %v3179, 127
    %v3460 = vpop.permute.xlu0 %3459
    %3461 = vrot.lane.b32.xlu0 %v3181, 127
    %v3462 = vpop.permute.xlu0 %3461
    %3463 = vrot.lane.b32.xlu0 %v3260, 127
    %v3464 = vpop.permute.xlu0 %3463
    %3465 = vrot.lane.b32.xlu0 %v3262, 127
    %v3466 = vpop.permute.xlu0 %3465
    %3467 = vrot.lane.b32.xlu0 %v3341, 127
    %v3468 = vpop.permute.xlu0 %3467
    %3469 = vrot.lane.b32.xlu0 %v3343, 127
    %v3470 = vpop.permute.xlu0 %3469
    %v3471 = vsel %vm608, %v3468, %v3470
    %v3472 = vsel %vm608, %v3466, %v3468
    %v3473 = vsel %vm608, %v3464, %v3466
    %v3474 = vsel %vm608, %v3462, %v3464
    %v3475 = vsel %vm608, %v3460, %v3462
    %v3476 = vsel %vm608, %v3470, %v3460
    %v3477 = vadd.f32 %v3453, %v3475
    %v3478 = vadd.f32 %v3454, %v3474
    %v3479 = vadd.f32 %v3455, %v3473
    %v3480 = vadd.f32 %v3456, %v3472
    %v3481 = vadd.f32 %v3457, %v3471
    %v3482 = vadd.f32 %v3458, %v3476
    %3483 = vrot.lane.b32.xlu0 %v3185, 111
    %v3484 = vpop.permute.xlu0 %3483
    %3485 = vrot.lane.b32.xlu0 %v3187, 111
    %v3486 = vpop.permute.xlu0 %3485
    %3487 = vrot.lane.b32.xlu0 %v3266, 111
    %v3488 = vpop.permute.xlu0 %3487
    %3489 = vrot.lane.b32.xlu0 %v3268, 111
    %v3490 = vpop.permute.xlu0 %3489
    %3491 = vrot.lane.b32.xlu0 %v3347, 111
    %v3492 = vpop.permute.xlu0 %3491
    %3493 = vrot.lane.b32.xlu0 %v3349, 111
    %v3494 = vpop.permute.xlu0 %3493
    %v3495 = vsel %vm633, %v3492, %v3494
    %v3496 = vsel %vm633, %v3490, %v3492
    %v3497 = vsel %vm633, %v3488, %v3490
    %v3498 = vsel %vm633, %v3486, %v3488
    %v3499 = vsel %vm633, %v3484, %v3486
    %v3500 = vsel %vm633, %v3494, %v3484
    %v3501 = vadd.f32 %v3477, %v3499
    %v3502 = vadd.f32 %v3478, %v3498
    %v3503 = vadd.f32 %v3479, %v3497
    %v3504 = vadd.f32 %v3480, %v3496
    %v3505 = vadd.f32 %v3481, %v3495
    %v3506 = vadd.f32 %v3482, %v3500
    %3507 = vrot.lane.b32.xlu0 %v3189, 110
    %v3508 = vpop.permute.xlu0 %3507
    %3509 = vrot.lane.b32.xlu0 %v3191, 110
    %v3510 = vpop.permute.xlu0 %3509
    %3511 = vrot.lane.b32.xlu0 %v3270, 110
    %v3512 = vpop.permute.xlu0 %3511
    %3513 = vrot.lane.b32.xlu0 %v3272, 110
    %v3514 = vpop.permute.xlu0 %3513
    %3515 = vrot.lane.b32.xlu0 %v3351, 110
    %v3516 = vpop.permute.xlu0 %3515
    %3517 = vrot.lane.b32.xlu0 %v3353, 110
    %v3518 = vpop.permute.xlu0 %3517
    %v3519 = vsel %vm658, %v3516, %v3518
    %v3520 = vsel %vm658, %v3514, %v3516
    %v3521 = vsel %vm658, %v3512, %v3514
    %v3522 = vsel %vm658, %v3510, %v3512
    %v3523 = vsel %vm658, %v3508, %v3510
    %v3524 = vsel %vm658, %v3518, %v3508
    %v3525 = vadd.f32 %v3501, %v3523
    %v3526 = vadd.f32 %v3502, %v3522
    %v3527 = vadd.f32 %v3503, %v3521
    %v3528 = vadd.f32 %v3504, %v3520
    %v3529 = vadd.f32 %v3505, %v3519
    %v3530 = vadd.f32 %v3506, %v3524
    %3531 = vrot.lane.b32.xlu0 %v3195, 109
    %v3532 = vpop.permute.xlu0 %3531
    %3533 = vrot.lane.b32.xlu0 %v3197, 109
    %v3534 = vpop.permute.xlu0 %3533
    %3535 = vrot.lane.b32.xlu0 %v3276, 109
    %v3536 = vpop.permute.xlu0 %3535
    %3537 = vrot.lane.b32.xlu0 %v3278, 109
    %v3538 = vpop.permute.xlu0 %3537
    %3539 = vrot.lane.b32.xlu0 %v3357, 109
    %v3540 = vpop.permute.xlu0 %3539
    %3541 = vrot.lane.b32.xlu0 %v3359, 109
    %v3542 = vpop.permute.xlu0 %3541
    %v3543 = vsel %vm683, %v3540, %v3542
    %v3544 = vsel %vm683, %v3538, %v3540
    %v3545 = vsel %vm683, %v3536, %v3538
    %v3546 = vsel %vm683, %v3534, %v3536
    %v3547 = vsel %vm683, %v3532, %v3534
    %v3548 = vsel %vm683, %v3542, %v3532
    %v3549 = vadd.f32 %v3525, %v3547
    %v3550 = vadd.f32 %v3526, %v3546
    %v3551 = vadd.f32 %v3527, %v3545
    %v3552 = vadd.f32 %v3528, %v3544
    %v3553 = vadd.f32 %v3529, %v3543
    %v3554 = vadd.f32 %v3530, %v3548
    %s3555 = scalar_lea.vmem [#allocation2], 240
    %3556 = vst [vmem:[%s3555] sm:$0xff] %v3549
    %3557 = vst [vmem:[%s3555 + $0x8] sm:$0xff] %v3550
    %3558 = vst [vmem:[%s3555 + $0x10] sm:$0xff] %v3551
    %3559 = vst [vmem:[%s3555 + $0x18] sm:$0xff] %v3552
    %3560 = vst [vmem:[%s3555 + $0x20] sm:$0xff] %v3553
    %3561 = vst [vmem:[%s3555 + $0x28] sm:$0xff] %v3554
    %s3562 = scalar_lea.vmem [#allocation3], 36
    %v3563 = vld [vmem:[%s3562] sm:$0x3f]
    %v3564 = vmax.bf16 %v3563, 0
    %v3565 = vmin.bf16 %v3563, 0
    %v3567 = vcombine.high %v3564, %v3564
    %v3569 = vunpack.c.l.s4 1966171168
    %v3570 = vunpack.c.0.s8 %v3569
    %v3571 = vlaneseq
    %v3572 = vshrl.u32 %v3571, 7
    %v3573 = vsub.s32 %v3570, %v3572
    %v3574 = vrot.slane %v3564, %v3573
    %v3576 = vunpack.c.l.s4 1966171168
    %v3577 = vunpack.c.0.s8 %v3576
    %v3578 = vlaneseq
    %v3579 = vshrl.u32 %v3578, 7
    %v3580 = vsub.s32 %v3577, %v3579
    %v3581 = vrot.slane %v3567, %v3580
    %v3582 = vcombine.high %v3574, %v3574
    %v3583 = vcombine.high %v3581, %v3581
    %v3585 = vunpack.c.l.s4 1966171168
    %v3586 = vunpack.c.0.s8 %v3585
    %v3587 = vlaneseq
    %v3588 = vshrl.u32 %v3587, 7
    %v3589 = vsub.s32 %v3586, %v3588
    %v3590 = vrot.slane %v3574, %v3589
    %v3592 = vunpack.c.l.s4 1966171168
    %v3593 = vunpack.c.0.s8 %v3592
    %v3594 = vlaneseq
    %v3595 = vshrl.u32 %v3594, 7
    %v3596 = vsub.s32 %v3593, %v3595
    %v3597 = vrot.slane %v3581, %v3596
    %v3599 = vunpack.c.l.s4 1966171168
    %v3600 = vunpack.c.0.s8 %v3599
    %v3601 = vlaneseq
    %v3602 = vshrl.u32 %v3601, 7
    %v3603 = vsub.s32 %v3600, %v3602
    %v3604 = vrot.slane %v3582, %v3603
    %v3606 = vunpack.c.l.s4 1966171168
    %v3607 = vunpack.c.0.s8 %v3606
    %v3608 = vlaneseq
    %v3609 = vshrl.u32 %v3608, 7
    %v3610 = vsub.s32 %v3607, %v3609
    %v3611 = vrot.slane %v3583, %v3610
    %v3612 = vcombine.high %v3590, %v3590
    %v3613 = vcombine.high %v3604, %v3604
    %v3615 = vcombine.low %v3565, %v3565
    %v3617 = vunpack.c.l.s4 1966171168
    %v3618 = vunpack.c.0.s8 %v3617
    %v3619 = vlaneseq
    %v3620 = vshrl.u32 %v3619, 7
    %v3621 = vsub.s32 %v3618, %v3620
    %v3622 = vrot.slane %v3615, %v3621
    %v3624 = vunpack.c.l.s4 1966171168
    %v3625 = vunpack.c.0.s8 %v3624
    %v3626 = vlaneseq
    %v3627 = vshrl.u32 %v3626, 7
    %v3628 = vsub.s32 %v3625, %v3627
    %v3629 = vrot.slane %v3565, %v3628
    %v3630 = vcombine.high %v3622, %v3622
    %v3631 = vcombine.high %v3629, %v3629
    %v3633 = vunpack.c.l.s4 1966171168
    %v3634 = vunpack.c.0.s8 %v3633
    %v3635 = vlaneseq
    %v3636 = vshrl.u32 %v3635, 7
    %v3637 = vsub.s32 %v3634, %v3636
    %v3638 = vrot.slane %v3622, %v3637
    %v3640 = vunpack.c.l.s4 1966171168
    %v3641 = vunpack.c.0.s8 %v3640
    %v3642 = vlaneseq
    %v3643 = vshrl.u32 %v3642, 7
    %v3644 = vsub.s32 %v3641, %v3643
    %v3645 = vrot.slane %v3629, %v3644
    %v3647 = vunpack.c.l.s4 1966171168
    %v3648 = vunpack.c.0.s8 %v3647
    %v3649 = vlaneseq
    %v3650 = vshrl.u32 %v3649, 7
    %v3651 = vsub.s32 %v3648, %v3650
    %v3652 = vrot.slane %v3630, %v3651
    %v3654 = vunpack.c.l.s4 1966171168
    %v3655 = vunpack.c.0.s8 %v3654
    %v3656 = vlaneseq
    %v3657 = vshrl.u32 %v3656, 7
    %v3658 = vsub.s32 %v3655, %v3657
    %v3659 = vrot.slane %v3631, %v3658
    %v3660 = vcombine.high %v3638, %v3638
    %v3661 = vcombine.high %v3652, %v3652
    %v3664 = vsel %vm180, %v3590, %v3638
    %v3667 = vsel %vm180, %v3604, %v3652
    %v3670 = vsel %vm180, %v3612, %v3660
    %v3673 = vsel %vm180, %v3613, %v3661
    %v3676 = vsel %vm180, %v3597, %v3645
    %v3679 = vsel %vm180, %v3611, %v3659
    %v3680 = vsel %vm238, %v3664, 0
    %v3682 = vsel %vm238, %v3667, 0
    %v3684 = vsel %vm238, %v3670, 0
    %v3686 = vsel %vm238, %v3673, 0
    %v3688 = vsel %vm238, %v3676, 0
    %v3690 = vsel %vm238, %v3679, 0
    %3692 = vmatprep.subr.bf16.mxu0 %v3682
    %3693 = vmatpush1.bf16.msra.mxu0 %v3680
    %3694 = vmatprep.subr.bf16.mxu0 0
    %3695 = vmatpush1.bf16.msra.mxu0 0
    %3696 = vmatprep.subr.bf16.mxu0 0
    %3697 = vmatpush1.bf16.msra.mxu0 0
    %3698 = vmatprep.subr.bf16.mxu0 0
    %3699 = vmatpush1.bf16.msra.mxu0 0
    %3700 = vmatprep.subr.bf16.mxu0 0
    %3701 = vmatpush1.bf16.msra.mxu0 0
    %3702 = vmatprep.subr.bf16.mxu0 0
    %3703 = vmatpush1.bf16.msra.mxu0 0
    %3704 = vmatprep.subr.bf16.mxu0 0
    %3705 = vmatpush1.bf16.msra.mxu0 0
    %3706 = vmatprep.subr.bf16.mxu0 0
    %3707 = vmatpush1.bf16.msra.mxu0 0
    %3708 = vmatprep.subr.bf16.mxu0 0
    %3709 = vmatpush1.bf16.msra.mxu0 0
    %3710 = vmatprep.subr.bf16.mxu0 0
    %3711 = vmatpush1.bf16.msra.mxu0 0
    %3712 = vmatprep.subr.bf16.mxu0 0
    %3713 = vmatpush1.bf16.msra.mxu0 0
    %3714 = vmatprep.subr.bf16.mxu0 0
    %3715 = vmatpush1.bf16.msra.mxu0 0
    %3716 = vmatprep.subr.bf16.mxu0 0
    %3717 = vmatpush1.bf16.msra.mxu0 0
    %3718 = vmatprep.subr.bf16.mxu0 0
    %3719 = vmatpush1.bf16.msra.mxu0 0
    %3720 = vmatprep.subr.bf16.mxu0 0
    %3721 = vmatpush1.bf16.msra.mxu0 0
    %3722 = vmatprep.subr.bf16.mxu0 0
    %3723 = vmatpush1.bf16.msra.mxu0 0
    %3724 = vmatprep.mubr.bf16.mxu0 0
    %3725 = vmatmul.mubr.bf16.gmra.mrb[0].mxu0 %v224
    %v3726 = vpop.f32.mrb[0].mxu0
    %v3727 = vadd.f32 0.0, %v3726
    %v3728 = vpop.f32.mrb[0].mxu0
    %v3729 = vadd.f32 0.0, %v3728
    %v3730 = vpop.f32.mrb[0].mxu0
    %v3731 = vadd.f32 0.0, %v3730
    %v3732 = vpop.f32.mrb[0].mxu0
    %v3733 = vadd.f32 0.0, %v3732
    %3734 = vmatprep.mubr.bf16.mxu0 0
    %3735 = vmatmul.mubr.bf16.gmra.mrb[0].mxu0 %v227
    %v3736 = vpop.f32.mrb[0].mxu0
    %v3737 = vadd.f32 0.0, %v3736
    %v3738 = vpop.f32.mrb[0].mxu0
    %v3739 = vadd.f32 0.0, %v3738
    %v3740 = vpop.f32.mrb[0].mxu0
    %v3741 = vadd.f32 0.0, %v3740
    %v3742 = vpop.f32.mrb[0].mxu0
    %v3743 = vadd.f32 0.0, %v3742
    %3744 = vmatprep.mubr.bf16.mxu0 0
    %3745 = vmatmul.mubr.bf16.gmra.mrb[0].mxu0 %v230
    %v3746 = vpop.f32.mrb[0].mxu0
    %v3747 = vadd.f32 0.0, %v3746
    %v3748 = vpop.f32.mrb[0].mxu0
    %v3749 = vadd.f32 0.0, %v3748
    %v3750 = vpop.f32.mrb[0].mxu0
    %v3751 = vadd.f32 0.0, %v3750
    %v3752 = vpop.f32.mrb[0].mxu0
    %v3753 = vadd.f32 0.0, %v3752
    %3754 = vmatprep.mubr.bf16.mxu0 0
    %3755 = vmatmul.mubr.bf16.gmra.mrb[0].mxu0 %v233
    %v3756 = vpop.f32.mrb[0].mxu0
    %v3757 = vadd.f32 0.0, %v3756
    %v3758 = vpop.f32.mrb[0].mxu0
    %v3759 = vadd.f32 0.0, %v3758
    %v3760 = vpop.f32.mrb[0].mxu0
    %v3761 = vadd.f32 0.0, %v3760
    %v3762 = vpop.f32.mrb[0].mxu0
    %v3763 = vadd.f32 0.0, %v3762
    %3764 = vmatprep.mubr.bf16.mxu0 0
    %3765 = vmatmul.mubr.bf16.gmra.mrb[0].mxu0 %v236
    %v3766 = vpop.f32.mrb[0].mxu0
    %v3767 = vadd.f32 0.0, %v3766
    %v3768 = vpop.f32.mrb[0].mxu0
    %v3769 = vadd.f32 0.0, %v3768
    %v3770 = vpop.f32.mrb[0].mxu0
    %v3771 = vpop.f32.mrb[0].mxu0
    %3772 = vdwg.mxu0
    %3773 = vmatprep.subr.bf16.mxu0 %v3686
    %3774 = vmatpush1.bf16.msra.mxu0 %v3684
    %3775 = vmatprep.subr.bf16.mxu0 0
    %3776 = vmatpush1.bf16.msra.mxu0 0
    %3777 = vmatprep.subr.bf16.mxu0 0
    %3778 = vmatpush1.bf16.msra.mxu0 0
    %3779 = vmatprep.subr.bf16.mxu0 0
    %3780 = vmatpush1.bf16.msra.mxu0 0
    %3781 = vmatprep.subr.bf16.mxu0 0
    %3782 = vmatpush1.bf16.msra.mxu0 0
    %3783 = vmatprep.subr.bf16.mxu0 0
    %3784 = vmatpush1.bf16.msra.mxu0 0
    %3785 = vmatprep.subr.bf16.mxu0 0
    %3786 = vmatpush1.bf16.msra.mxu0 0
    %3787 = vmatprep.subr.bf16.mxu0 0
    %3788 = vmatpush1.bf16.msra.mxu0 0
    %3789 = vmatprep.subr.bf16.mxu0 0
    %3790 = vmatpush1.bf16.msra.mxu0 0
    %3791 = vmatprep.subr.bf16.mxu0 0
    %3792 = vmatpush1.bf16.msra.mxu0 0
    %3793 = vmatprep.subr.bf16.mxu0 0
    %3794 = vmatpush1.bf16.msra.mxu0 0
    %3795 = vmatprep.subr.bf16.mxu0 0
    %3796 = vmatpush1.bf16.msra.mxu0 0
    %3797 = vmatprep.subr.bf16.mxu0 0
    %3798 = vmatpush1.bf16.msra.mxu0 0
    %3799 = vmatprep.subr.bf16.mxu0 0
    %3800 = vmatpush1.bf16.msra.mxu0 0
    %3801 = vmatprep.subr.bf16.mxu0 0
    %3802 = vmatpush1.bf16.msra.mxu0 0
    %3803 = vmatprep.subr.bf16.mxu0 0
    %3804 = vmatpush1.bf16.msra.mxu0 0
    %3805 = vmatprep.mubr.bf16.mxu0 0
    %3806 = vmatmul.mubr.bf16.gmra.mrb[0].mxu0 %v224
    %v3807 = vpop.f32.mrb[0].mxu0
    %v3808 = vadd.f32 0.0, %v3807
    %v3809 = vpop.f32.mrb[0].mxu0
    %v3810 = vadd.f32 0.0, %v3809
    %v3811 = vpop.f32.mrb[0].mxu0
    %v3812 = vadd.f32 0.0, %v3811
    %v3813 = vpop.f32.mrb[0].mxu0
    %v3814 = vadd.f32 0.0, %v3813
    %3815 = vmatprep.mubr.bf16.mxu0 0
    %3816 = vmatmul.mubr.bf16.gmra.mrb[0].mxu0 %v227
    %v3817 = vpop.f32.mrb[0].mxu0
    %v3818 = vadd.f32 0.0, %v3817
    %v3819 = vpop.f32.mrb[0].mxu0
    %v3820 = vadd.f32 0.0, %v3819
    %v3821 = vpop.f32.mrb[0].mxu0
    %v3822 = vadd.f32 0.0, %v3821
    %v3823 = vpop.f32.mrb[0].mxu0
    %v3824 = vadd.f32 0.0, %v3823
    %3825 = vmatprep.mubr.bf16.mxu0 0
    %3826 = vmatmul.mubr.bf16.gmra.mrb[0].mxu0 %v230
    %v3827 = vpop.f32.mrb[0].mxu0
    %v3828 = vadd.f32 0.0, %v3827
    %v3829 = vpop.f32.mrb[0].mxu0
    %v3830 = vadd.f32 0.0, %v3829
    %v3831 = vpop.f32.mrb[0].mxu0
    %v3832 = vadd.f32 0.0, %v3831
    %v3833 = vpop.f32.mrb[0].mxu0
    %v3834 = vadd.f32 0.0, %v3833
    %3835 = vmatprep.mubr.bf16.mxu0 0
    %3836 = vmatmul.mubr.bf16.gmra.mrb[0].mxu0 %v233
    %v3837 = vpop.f32.mrb[0].mxu0
    %v3838 = vadd.f32 0.0, %v3837
    %v3839 = vpop.f32.mrb[0].mxu0
    %v3840 = vadd.f32 0.0, %v3839
    %v3841 = vpop.f32.mrb[0].mxu0
    %v3842 = vadd.f32 0.0, %v3841
    %v3843 = vpop.f32.mrb[0].mxu0
    %v3844 = vadd.f32 0.0, %v3843
    %3845 = vmatprep.mubr.bf16.mxu0 0
    %3846 = vmatmul.mubr.bf16.gmra.mrb[0].mxu0 %v236
    %v3847 = vpop.f32.mrb[0].mxu0
    %v3848 = vadd.f32 0.0, %v3847
    %v3849 = vpop.f32.mrb[0].mxu0
    %v3850 = vadd.f32 0.0, %v3849
    %v3851 = vpop.f32.mrb[0].mxu0
    %v3852 = vpop.f32.mrb[0].mxu0
    %3853 = vdwg.mxu0
    %3854 = vmatprep.subr.bf16.mxu0 %v3690
    %3855 = vmatpush1.bf16.msra.mxu0 %v3688
    %3856 = vmatprep.subr.bf16.mxu0 0
    %3857 = vmatpush1.bf16.msra.mxu0 0
    %3858 = vmatprep.subr.bf16.mxu0 0
    %3859 = vmatpush1.bf16.msra.mxu0 0
    %3860 = vmatprep.subr.bf16.mxu0 0
    %3861 = vmatpush1.bf16.msra.mxu0 0
    %3862 = vmatprep.subr.bf16.mxu0 0
    %3863 = vmatpush1.bf16.msra.mxu0 0
    %3864 = vmatprep.subr.bf16.mxu0 0
    %3865 = vmatpush1.bf16.msra.mxu0 0
    %3866 = vmatprep.subr.bf16.mxu0 0
    %3867 = vmatpush1.bf16.msra.mxu0 0
    %3868 = vmatprep.subr.bf16.mxu0 0
    %3869 = vmatpush1.bf16.msra.mxu0 0
    %3870 = vmatprep.subr.bf16.mxu0 0
    %3871 = vmatpush1.bf16.msra.mxu0 0
    %3872 = vmatprep.subr.bf16.mxu0 0
    %3873 = vmatpush1.bf16.msra.mxu0 0
    %3874 = vmatprep.subr.bf16.mxu0 0
    %3875 = vmatpush1.bf16.msra.mxu0 0
    %3876 = vmatprep.subr.bf16.mxu0 0
    %3877 = vmatpush1.bf16.msra.mxu0 0
    %3878 = vmatprep.subr.bf16.mxu0 0
    %3879 = vmatpush1.bf16.msra.mxu0 0
    %3880 = vmatprep.subr.bf16.mxu0 0
    %3881 = vmatpush1.bf16.msra.mxu0 0
    %3882 = vmatprep.subr.bf16.mxu0 0
    %3883 = vmatpush1.bf16.msra.mxu0 0
    %3884 = vmatprep.subr.bf16.mxu0 0
    %3885 = vmatpush1.bf16.msra.mxu0 0
    %3886 = vmatprep.mubr.bf16.mxu0 0
    %3887 = vmatmul.mubr.bf16.gmra.mrb[0].mxu0 %v224
    %v3888 = vpop.f32.mrb[0].mxu0
    %v3889 = vadd.f32 0.0, %v3888
    %v3890 = vpop.f32.mrb[0].mxu0
    %v3891 = vadd.f32 0.0, %v3890
    %v3892 = vpop.f32.mrb[0].mxu0
    %v3893 = vadd.f32 0.0, %v3892
    %v3894 = vpop.f32.mrb[0].mxu0
    %v3895 = vadd.f32 0.0, %v3894
    %3896 = vmatprep.mubr.bf16.mxu0 0
    %3897 = vmatmul.mubr.bf16.gmra.mrb[0].mxu0 %v227
    %v3898 = vpop.f32.mrb[0].mxu0
    %v3899 = vadd.f32 0.0, %v3898
    %v3900 = vpop.f32.mrb[0].mxu0
    %v3901 = vadd.f32 0.0, %v3900
    %v3902 = vpop.f32.mrb[0].mxu0
    %v3903 = vadd.f32 0.0, %v3902
    %v3904 = vpop.f32.mrb[0].mxu0
    %v3905 = vadd.f32 0.0, %v3904
    %3906 = vmatprep.mubr.bf16.mxu0 0
    %3907 = vmatmul.mubr.bf16.gmra.mrb[0].mxu0 %v230
    %v3908 = vpop.f32.mrb[0].mxu0
    %v3909 = vadd.f32 0.0, %v3908
    %v3910 = vpop.f32.mrb[0].mxu0
    %v3911 = vadd.f32 0.0, %v3910
    %v3912 = vpop.f32.mrb[0].mxu0
    %v3913 = vadd.f32 0.0, %v3912
    %v3914 = vpop.f32.mrb[0].mxu0
    %v3915 = vadd.f32 0.0, %v3914
    %3916 = vmatprep.mubr.bf16.mxu0 0
    %3917 = vmatmul.mubr.bf16.gmra.mrb[0].mxu0 %v233
    %v3918 = vpop.f32.mrb[0].mxu0
    %v3919 = vadd.f32 0.0, %v3918
    %v3920 = vpop.f32.mrb[0].mxu0
    %v3921 = vadd.f32 0.0, %v3920
    %v3922 = vpop.f32.mrb[0].mxu0
    %v3923 = vadd.f32 0.0, %v3922
    %v3924 = vpop.f32.mrb[0].mxu0
    %v3925 = vadd.f32 0.0, %v3924
    %3926 = vmatprep.mubr.bf16.mxu0 0
    %3927 = vmatmul.mubr.bf16.gmra.mrb[0].mxu0 %v236
    %v3928 = vpop.f32.mrb[0].mxu0
    %v3929 = vadd.f32 0.0, %v3928
    %v3930 = vpop.f32.mrb[0].mxu0
    %v3931 = vadd.f32 0.0, %v3930
    %v3932 = vpop.f32.mrb[0].mxu0
    %v3933 = vpop.f32.mrb[0].mxu0
    %3934 = vdwg.mxu0
    %3935 = vrot.lane.b32.xlu0 %v3727, 19
    %v3936 = vpop.permute.xlu0 %3935
    %3937 = vrot.lane.b32.xlu0 %v3729, 19
    %v3938 = vpop.permute.xlu0 %3937
    %3939 = vrot.lane.b32.xlu0 %v3808, 19
    %v3940 = vpop.permute.xlu0 %3939
    %3941 = vrot.lane.b32.xlu0 %v3810, 19
    %v3942 = vpop.permute.xlu0 %3941
    %3943 = vrot.lane.b32.xlu0 %v3889, 19
    %v3944 = vpop.permute.xlu0 %3943
    %3945 = vrot.lane.b32.xlu0 %v3891, 19
    %v3946 = vpop.permute.xlu0 %3945
    %v3947 = vsel %vm508, %v3944, %v3946
    %v3948 = vsel %vm508, %v3942, %v3944
    %v3949 = vsel %vm508, %v3940, %v3942
    %v3950 = vsel %vm508, %v3938, %v3940
    %v3951 = vsel %vm508, %v3936, %v3938
    %v3952 = vsel %vm508, %v3946, %v3936
    %3953 = vrot.lane.b32.xlu0 %v3731, 18
    %v3954 = vpop.permute.xlu0 %3953
    %3955 = vrot.lane.b32.xlu0 %v3733, 18
    %v3956 = vpop.permute.xlu0 %3955
    %3957 = vrot.lane.b32.xlu0 %v3812, 18
    %v3958 = vpop.permute.xlu0 %3957
    %3959 = vrot.lane.b32.xlu0 %v3814, 18
    %v3960 = vpop.permute.xlu0 %3959
    %3961 = vrot.lane.b32.xlu0 %v3893, 18
    %v3962 = vpop.permute.xlu0 %3961
    %3963 = vrot.lane.b32.xlu0 %v3895, 18
    %v3964 = vpop.permute.xlu0 %3963
    %v3965 = vsel %vm527, %v3962, %v3964
    %v3966 = vsel %vm527, %v3960, %v3962
    %v3967 = vsel %vm527, %v3958, %v3960
    %v3968 = vsel %vm527, %v3956, %v3958
    %v3969 = vsel %vm527, %v3954, %v3956
    %v3970 = vsel %vm527, %v3964, %v3954
    %v3971 = vadd.f32 %v3952, %v3970
    %v3972 = vadd.f32 %v3951, %v3969
    %v3973 = vadd.f32 %v3950, %v3968
    %v3974 = vadd.f32 %v3949, %v3967
    %v3975 = vadd.f32 %v3948, %v3966
    %v3976 = vadd.f32 %v3947, %v3965
    %3977 = vrot.lane.b32.xlu0 %v3737, 17
    %v3978 = vpop.permute.xlu0 %3977
    %3979 = vrot.lane.b32.xlu0 %v3739, 17
    %v3980 = vpop.permute.xlu0 %3979
    %3981 = vrot.lane.b32.xlu0 %v3818, 17
    %v3982 = vpop.permute.xlu0 %3981
    %3983 = vrot.lane.b32.xlu0 %v3820, 17
    %v3984 = vpop.permute.xlu0 %3983
    %3985 = vrot.lane.b32.xlu0 %v3899, 17
    %v3986 = vpop.permute.xlu0 %3985
    %3987 = vrot.lane.b32.xlu0 %v3901, 17
    %v3988 = vpop.permute.xlu0 %3987
    %v3989 = vsel %vm552, %v3986, %v3988
    %v3990 = vsel %vm552, %v3984, %v3986
    %v3991 = vsel %vm552, %v3982, %v3984
    %v3992 = vsel %vm552, %v3980, %v3982
    %v3993 = vsel %vm552, %v3978, %v3980
    %v3994 = vsel %vm552, %v3988, %v3978
    %v3995 = vadd.f32 %v3971, %v3994
    %v3996 = vadd.f32 %v3972, %v3993
    %v3997 = vadd.f32 %v3973, %v3992
    %v3998 = vadd.f32 %v3974, %v3991
    %v3999 = vadd.f32 %v3975, %v3990
    %v4000 = vadd.f32 %v3976, %v3989
    %4001 = vrot.lane.b32.xlu0 %v3741, 1
    %v4002 = vpop.permute.xlu0 %4001
    %4003 = vrot.lane.b32.xlu0 %v3743, 1
    %v4004 = vpop.permute.xlu0 %4003
    %4005 = vrot.lane.b32.xlu0 %v3822, 1
    %v4006 = vpop.permute.xlu0 %4005
    %4007 = vrot.lane.b32.xlu0 %v3824, 1
    %v4008 = vpop.permute.xlu0 %4007
    %4009 = vrot.lane.b32.xlu0 %v3903, 1
    %v4010 = vpop.permute.xlu0 %4009
    %4011 = vrot.lane.b32.xlu0 %v3905, 1
    %v4012 = vpop.permute.xlu0 %4011
    %v4013 = vsel %vm577, %v4010, %v4012
    %v4014 = vsel %vm577, %v4008, %v4010
    %v4015 = vsel %vm577, %v4006, %v4008
    %v4016 = vsel %vm577, %v4004, %v4006
    %v4017 = vsel %vm577, %v4002, %v4004
    %v4018 = vsel %vm577, %v4012, %v4002
    %v4019 = vadd.f32 %v3995, %v4018
    %v4020 = vadd.f32 %v3996, %v4017
    %v4021 = vadd.f32 %v3997, %v4016
    %v4022 = vadd.f32 %v3998, %v4015
    %v4023 = vadd.f32 %v3999, %v4014
    %v4024 = vadd.f32 %v4000, %v4013
    %v4025 = vadd.f32 %v4019, %v3747
    %v4026 = vadd.f32 %v4020, %v3749
    %v4027 = vadd.f32 %v4021, %v3828
    %v4028 = vadd.f32 %v4022, %v3830
    %v4029 = vadd.f32 %v4023, %v3909
    %v4030 = vadd.f32 %v4024, %v3911
    %4031 = vrot.lane.b32.xlu0 %v3751, 127
    %v4032 = vpop.permute.xlu0 %4031
    %4033 = vrot.lane.b32.xlu0 %v3753, 127
    %v4034 = vpop.permute.xlu0 %4033
    %4035 = vrot.lane.b32.xlu0 %v3832, 127
    %v4036 = vpop.permute.xlu0 %4035
    %4037 = vrot.lane.b32.xlu0 %v3834, 127
    %v4038 = vpop.permute.xlu0 %4037
    %4039 = vrot.lane.b32.xlu0 %v3913, 127
    %v4040 = vpop.permute.xlu0 %4039
    %4041 = vrot.lane.b32.xlu0 %v3915, 127
    %v4042 = vpop.permute.xlu0 %4041
    %v4043 = vsel %vm608, %v4040, %v4042
    %v4044 = vsel %vm608, %v4038, %v4040
    %v4045 = vsel %vm608, %v4036, %v4038
    %v4046 = vsel %vm608, %v4034, %v4036
    %v4047 = vsel %vm608, %v4032, %v4034
    %v4048 = vsel %vm608, %v4042, %v4032
    %v4049 = vadd.f32 %v4025, %v4047
    %v4050 = vadd.f32 %v4026, %v4046
    %v4051 = vadd.f32 %v4027, %v4045
    %v4052 = vadd.f32 %v4028, %v4044
    %v4053 = vadd.f32 %v4029, %v4043
    %v4054 = vadd.f32 %v4030, %v4048
    %4055 = vrot.lane.b32.xlu0 %v3757, 111
    %v4056 = vpop.permute.xlu0 %4055
    %4057 = vrot.lane.b32.xlu0 %v3759, 111
    %v4058 = vpop.permute.xlu0 %4057
    %4059 = vrot.lane.b32.xlu0 %v3838, 111
    %v4060 = vpop.permute.xlu0 %4059
    %4061 = vrot.lane.b32.xlu0 %v3840, 111
    %v4062 = vpop.permute.xlu0 %4061
    %4063 = vrot.lane.b32.xlu0 %v3919, 111
    %v4064 = vpop.permute.xlu0 %4063
    %4065 = vrot.lane.b32.xlu0 %v3921, 111
    %v4066 = vpop.permute.xlu0 %4065
    %v4067 = vsel %vm633, %v4064, %v4066
    %v4068 = vsel %vm633, %v4062, %v4064
    %v4069 = vsel %vm633, %v4060, %v4062
    %v4070 = vsel %vm633, %v4058, %v4060
    %v4071 = vsel %vm633, %v4056, %v4058
    %v4072 = vsel %vm633, %v4066, %v4056
    %v4073 = vadd.f32 %v4049, %v4071
    %v4074 = vadd.f32 %v4050, %v4070
    %v4075 = vadd.f32 %v4051, %v4069
    %v4076 = vadd.f32 %v4052, %v4068
    %v4077 = vadd.f32 %v4053, %v4067
    %v4078 = vadd.f32 %v4054, %v4072
    %4079 = vrot.lane.b32.xlu0 %v3761, 110
    %v4080 = vpop.permute.xlu0 %4079
    %4081 = vrot.lane.b32.xlu0 %v3763, 110
    %v4082 = vpop.permute.xlu0 %4081
    %4083 = vrot.lane.b32.xlu0 %v3842, 110
    %v4084 = vpop.permute.xlu0 %4083
    %4085 = vrot.lane.b32.xlu0 %v3844, 110
    %v4086 = vpop.permute.xlu0 %4085
    %4087 = vrot.lane.b32.xlu0 %v3923, 110
    %v4088 = vpop.permute.xlu0 %4087
    %4089 = vrot.lane.b32.xlu0 %v3925, 110
    %v4090 = vpop.permute.xlu0 %4089
    %v4091 = vsel %vm658, %v4088, %v4090
    %v4092 = vsel %vm658, %v4086, %v4088
    %v4093 = vsel %vm658, %v4084, %v4086
    %v4094 = vsel %vm658, %v4082, %v4084
    %v4095 = vsel %vm658, %v4080, %v4082
    %v4096 = vsel %vm658, %v4090, %v4080
    %v4097 = vadd.f32 %v4073, %v4095
    %v4098 = vadd.f32 %v4074, %v4094
    %v4099 = vadd.f32 %v4075, %v4093
    %v4100 = vadd.f32 %v4076, %v4092
    %v4101 = vadd.f32 %v4077, %v4091
    %v4102 = vadd.f32 %v4078, %v4096
    %4103 = vrot.lane.b32.xlu0 %v3767, 109
    %v4104 = vpop.permute.xlu0 %4103
    %4105 = vrot.lane.b32.xlu0 %v3769, 109
    %v4106 = vpop.permute.xlu0 %4105
    %4107 = vrot.lane.b32.xlu0 %v3848, 109
    %v4108 = vpop.permute.xlu0 %4107
    %4109 = vrot.lane.b32.xlu0 %v3850, 109
    %v4110 = vpop.permute.xlu0 %4109
    %4111 = vrot.lane.b32.xlu0 %v3929, 109
    %v4112 = vpop.permute.xlu0 %4111
    %4113 = vrot.lane.b32.xlu0 %v3931, 109
    %v4114 = vpop.permute.xlu0 %4113
    %v4115 = vsel %vm683, %v4112, %v4114
    %v4116 = vsel %vm683, %v4110, %v4112
    %v4117 = vsel %vm683, %v4108, %v4110
    %v4118 = vsel %vm683, %v4106, %v4108
    %v4119 = vsel %vm683, %v4104, %v4106
    %v4120 = vsel %vm683, %v4114, %v4104
    %v4121 = vadd.f32 %v4097, %v4119
    %v4122 = vadd.f32 %v4098, %v4118
    %v4123 = vadd.f32 %v4099, %v4117
    %v4124 = vadd.f32 %v4100, %v4116
    %v4125 = vadd.f32 %v4101, %v4115
    %v4126 = vadd.f32 %v4102, %v4120
    %s4127 = scalar_lea.vmem [#allocation2], 288
    %4128 = vst [vmem:[%s4127] sm:$0xff] %v4121
    %4129 = vst [vmem:[%s4127 + $0x8] sm:$0xff] %v4122
    %4130 = vst [vmem:[%s4127 + $0x10] sm:$0xff] %v4123
    %4131 = vst [vmem:[%s4127 + $0x18] sm:$0xff] %v4124
    %4132 = vst [vmem:[%s4127 + $0x20] sm:$0xff] %v4125
    %4133 = vst [vmem:[%s4127 + $0x28] sm:$0xff] %v4126
    %s4134 = scalar_lea.vmem [#allocation3], 42
    %v4135 = vld [vmem:[%s4134] sm:$0x3f]
    %v4136 = vmax.bf16 %v4135, 0
    %v4137 = vmin.bf16 %v4135, 0
    %v4139 = vcombine.high %v4136, %v4136
    %v4141 = vunpack.c.l.s4 1966171168
    %v4142 = vunpack.c.0.s8 %v4141
    %v4143 = vlaneseq
    %v4144 = vshrl.u32 %v4143, 7
    %v4145 = vsub.s32 %v4142, %v4144
    %v4146 = vrot.slane %v4136, %v4145
    %v4148 = vunpack.c.l.s4 1966171168
    %v4149 = vunpack.c.0.s8 %v4148
    %v4150 = vlaneseq
    %v4151 = vshrl.u32 %v4150, 7
    %v4152 = vsub.s32 %v4149, %v4151
    %v4153 = vrot.slane %v4139, %v4152
    %v4154 = vcombine.high %v4146, %v4146
    %v4155 = vcombine.high %v4153, %v4153
    %v4157 = vunpack.c.l.s4 1966171168
    %v4158 = vunpack.c.0.s8 %v4157
    %v4159 = vlaneseq
    %v4160 = vshrl.u32 %v4159, 7
    %v4161 = vsub.s32 %v4158, %v4160
    %v4162 = vrot.slane %v4146, %v4161
    %v4164 = vunpack.c.l.s4 1966171168
    %v4165 = vunpack.c.0.s8 %v4164
    %v4166 = vlaneseq
    %v4167 = vshrl.u32 %v4166, 7
    %v4168 = vsub.s32 %v4165, %v4167
    %v4169 = vrot.slane %v4153, %v4168
    %v4171 = vunpack.c.l.s4 1966171168
    %v4172 = vunpack.c.0.s8 %v4171
    %v4173 = vlaneseq
    %v4174 = vshrl.u32 %v4173, 7
    %v4175 = vsub.s32 %v4172, %v4174
    %v4176 = vrot.slane %v4154, %v4175
    %v4178 = vunpack.c.l.s4 1966171168
    %v4179 = vunpack.c.0.s8 %v4178
    %v4180 = vlaneseq
    %v4181 = vshrl.u32 %v4180, 7
    %v4182 = vsub.s32 %v4179, %v4181
    %v4183 = vrot.slane %v4155, %v4182
    %v4184 = vcombine.high %v4162, %v4162
    %v4185 = vcombine.high %v4176, %v4176
    %v4187 = vcombine.low %v4137, %v4137
    %v4189 = vunpack.c.l.s4 1966171168
    %v4190 = vunpack.c.0.s8 %v4189
    %v4191 = vlaneseq
    %v4192 = vshrl.u32 %v4191, 7
    %v4193 = vsub.s32 %v4190, %v4192
    %v4194 = vrot.slane %v4187, %v4193
    %v4196 = vunpack.c.l.s4 1966171168
    %v4197 = vunpack.c.0.s8 %v4196
    %v4198 = vlaneseq
    %v4199 = vshrl.u32 %v4198, 7
    %v4200 = vsub.s32 %v4197, %v4199
    %v4201 = vrot.slane %v4137, %v4200
    %v4202 = vcombine.high %v4194, %v4194
    %v4203 = vcombine.high %v4201, %v4201
    %v4205 = vunpack.c.l.s4 1966171168
    %v4206 = vunpack.c.0.s8 %v4205
    %v4207 = vlaneseq
    %v4208 = vshrl.u32 %v4207, 7
    %v4209 = vsub.s32 %v4206, %v4208
    %v4210 = vrot.slane %v4194, %v4209
    %v4212 = vunpack.c.l.s4 1966171168
    %v4213 = vunpack.c.0.s8 %v4212
    %v4214 = vlaneseq
    %v4215 = vshrl.u32 %v4214, 7
    %v4216 = vsub.s32 %v4213, %v4215
    %v4217 = vrot.slane %v4201, %v4216
    %v4219 = vunpack.c.l.s4 1966171168
    %v4220 = vunpack.c.0.s8 %v4219
    %v4221 = vlaneseq
    %v4222 = vshrl.u32 %v4221, 7
    %v4223 = vsub.s32 %v4220, %v4222
    %v4224 = vrot.slane %v4202, %v4223
    %v4226 = vunpack.c.l.s4 1966171168
    %v4227 = vunpack.c.0.s8 %v4226
    %v4228 = vlaneseq
    %v4229 = vshrl.u32 %v4228, 7
    %v4230 = vsub.s32 %v4227, %v4229
    %v4231 = vrot.slane %v4203, %v4230
    %v4232 = vcombine.high %v4210, %v4210
    %v4233 = vcombine.high %v4224, %v4224
    %v4236 = vsel %vm180, %v4162, %v4210
    %v4239 = vsel %vm180, %v4176, %v4224
    %v4242 = vsel %vm180, %v4184, %v4232
    %v4245 = vsel %vm180, %v4185, %v4233
    %v4248 = vsel %vm180, %v4169, %v4217
    %v4251 = vsel %vm180, %v4183, %v4231
    %v4252 = vsel %vm238, %v4236, 0
    %v4254 = vsel %vm238, %v4239, 0
    %v4256 = vsel %vm238, %v4242, 0
    %v4258 = vsel %vm238, %v4245, 0
    %v4260 = vsel %vm238, %v4248, 0
    %v4262 = vsel %vm238, %v4251, 0
    %4264 = vmatprep.subr.bf16.mxu0 %v4254
    %4265 = vmatpush1.bf16.msra.mxu0 %v4252
    %4266 = vmatprep.subr.bf16.mxu0 0
    %4267 = vmatpush1.bf16.msra.mxu0 0
    %4268 = vmatprep.subr.bf16.mxu0 0
    %4269 = vmatpush1.bf16.msra.mxu0 0
    %4270 = vmatprep.subr.bf16.mxu0 0
    %4271 = vmatpush1.bf16.msra.mxu0 0
    %4272 = vmatprep.subr.bf16.mxu0 0
    %4273 = vmatpush1.bf16.msra.mxu0 0
    %4274 = vmatprep.subr.bf16.mxu0 0
    %4275 = vmatpush1.bf16.msra.mxu0 0
    %4276 = vmatprep.subr.bf16.mxu0 0
    %4277 = vmatpush1.bf16.msra.mxu0 0
    %4278 = vmatprep.subr.bf16.mxu0 0
    %4279 = vmatpush1.bf16.msra.mxu0 0
    %4280 = vmatprep.subr.bf16.mxu0 0
    %4281 = vmatpush1.bf16.msra.mxu0 0
    %4282 = vmatprep.subr.bf16.mxu0 0
    %4283 = vmatpush1.bf16.msra.mxu0 0
    %4284 = vmatprep.subr.bf16.mxu0 0
    %4285 = vmatpush1.bf16.msra.mxu0 0
    %4286 = vmatprep.subr.bf16.mxu0 0
    %4287 = vmatpush1.bf16.msra.mxu0 0
    %4288 = vmatprep.subr.bf16.mxu0 0
    %4289 = vmatpush1.bf16.msra.mxu0 0
    %4290 = vmatprep.subr.bf16.mxu0 0
    %4291 = vmatpush1.bf16.msra.mxu0 0
    %4292 = vmatprep.subr.bf16.mxu0 0
    %4293 = vmatpush1.bf16.msra.mxu0 0
    %4294 = vmatprep.subr.bf16.mxu0 0
    %4295 = vmatpush1.bf16.msra.mxu0 0
    %4296 = vmatprep.mubr.bf16.mxu0 0
    %4297 = vmatmul.mubr.bf16.gmra.mrb[0].mxu0 %v224
    %v4298 = vpop.f32.mrb[0].mxu0
    %v4299 = vadd.f32 0.0, %v4298
    %v4300 = vpop.f32.mrb[0].mxu0
    %v4301 = vadd.f32 0.0, %v4300
    %v4302 = vpop.f32.mrb[0].mxu0
    %v4303 = vadd.f32 0.0, %v4302
    %v4304 = vpop.f32.mrb[0].mxu0
    %v4305 = vadd.f32 0.0, %v4304
    %4306 = vmatprep.mubr.bf16.mxu0 0
    %4307 = vmatmul.mubr.bf16.gmra.mrb[0].mxu0 %v227
    %v4308 = vpop.f32.mrb[0].mxu0
    %v4309 = vadd.f32 0.0, %v4308
    %v4310 = vpop.f32.mrb[0].mxu0
    %v4311 = vadd.f32 0.0, %v4310
    %v4312 = vpop.f32.mrb[0].mxu0
    %v4313 = vadd.f32 0.0, %v4312
    %v4314 = vpop.f32.mrb[0].mxu0
    %v4315 = vadd.f32 0.0, %v4314
    %4316 = vmatprep.mubr.bf16.mxu0 0
    %4317 = vmatmul.mubr.bf16.gmra.mrb[0].mxu0 %v230
    %v4318 = vpop.f32.mrb[0].mxu0
    %v4319 = vadd.f32 0.0, %v4318
    %v4320 = vpop.f32.mrb[0].mxu0
    %v4321 = vadd.f32 0.0, %v4320
    %v4322 = vpop.f32.mrb[0].mxu0
    %v4323 = vadd.f32 0.0, %v4322
    %v4324 = vpop.f32.mrb[0].mxu0
    %v4325 = vadd.f32 0.0, %v4324
    %4326 = vmatprep.mubr.bf16.mxu0 0
    %4327 = vmatmul.mubr.bf16.gmra.mrb[0].mxu0 %v233
    %v4328 = vpop.f32.mrb[0].mxu0
    %v4329 = vadd.f32 0.0, %v4328
    %v4330 = vpop.f32.mrb[0].mxu0
    %v4331 = vadd.f32 0.0, %v4330
    %v4332 = vpop.f32.mrb[0].mxu0
    %v4333 = vadd.f32 0.0, %v4332
    %v4334 = vpop.f32.mrb[0].mxu0
    %v4335 = vadd.f32 0.0, %v4334
    %4336 = vmatprep.mubr.bf16.mxu0 0
    %4337 = vmatmul.mubr.bf16.gmra.mrb[0].mxu0 %v236
    %v4338 = vpop.f32.mrb[0].mxu0
    %v4339 = vadd.f32 0.0, %v4338
    %v4340 = vpop.f32.mrb[0].mxu0
    %v4341 = vadd.f32 0.0, %v4340
    %v4342 = vpop.f32.mrb[0].mxu0
    %v4343 = vpop.f32.mrb[0].mxu0
    %4344 = vdwg.mxu0
    %4345 = vmatprep.subr.bf16.mxu0 %v4258
    %4346 = vmatpush1.bf16.msra.mxu0 %v4256
    %4347 = vmatprep.subr.bf16.mxu0 0
    %4348 = vmatpush1.bf16.msra.mxu0 0
    %4349 = vmatprep.subr.bf16.mxu0 0
    %4350 = vmatpush1.bf16.msra.mxu0 0
    %4351 = vmatprep.subr.bf16.mxu0 0
    %4352 = vmatpush1.bf16.msra.mxu0 0
    %4353 = vmatprep.subr.bf16.mxu0 0
    %4354 = vmatpush1.bf16.msra.mxu0 0
    %4355 = vmatprep.subr.bf16.mxu0 0
    %4356 = vmatpush1.bf16.msra.mxu0 0
    %4357 = vmatprep.subr.bf16.mxu0 0
    %4358 = vmatpush1.bf16.msra.mxu0 0
    %4359 = vmatprep.subr.bf16.mxu0 0
    %4360 = vmatpush1.bf16.msra.mxu0 0
    %4361 = vmatprep.subr.bf16.mxu0 0
    %4362 = vmatpush1.bf16.msra.mxu0 0
    %4363 = vmatprep.subr.bf16.mxu0 0
    %4364 = vmatpush1.bf16.msra.mxu0 0
    %4365 = vmatprep.subr.bf16.mxu0 0
    %4366 = vmatpush1.bf16.msra.mxu0 0
    %4367 = vmatprep.subr.bf16.mxu0 0
    %4368 = vmatpush1.bf16.msra.mxu0 0
    %4369 = vmatprep.subr.bf16.mxu0 0
    %4370 = vmatpush1.bf16.msra.mxu0 0
    %4371 = vmatprep.subr.bf16.mxu0 0
    %4372 = vmatpush1.bf16.msra.mxu0 0
    %4373 = vmatprep.subr.bf16.mxu0 0
    %4374 = vmatpush1.bf16.msra.mxu0 0
    %4375 = vmatprep.subr.bf16.mxu0 0
    %4376 = vmatpush1.bf16.msra.mxu0 0
    %4377 = vmatprep.mubr.bf16.mxu0 0
    %4378 = vmatmul.mubr.bf16.gmra.mrb[0].mxu0 %v224
    %v4379 = vpop.f32.mrb[0].mxu0
    %v4380 = vadd.f32 0.0, %v4379
    %v4381 = vpop.f32.mrb[0].mxu0
    %v4382 = vadd.f32 0.0, %v4381
    %v4383 = vpop.f32.mrb[0].mxu0
    %v4384 = vadd.f32 0.0, %v4383
    %v4385 = vpop.f32.mrb[0].mxu0
    %v4386 = vadd.f32 0.0, %v4385
    %4387 = vmatprep.mubr.bf16.mxu0 0
    %4388 = vmatmul.mubr.bf16.gmra.mrb[0].mxu0 %v227
    %v4389 = vpop.f32.mrb[0].mxu0
    %v4390 = vadd.f32 0.0, %v4389
    %v4391 = vpop.f32.mrb[0].mxu0
    %v4392 = vadd.f32 0.0, %v4391
    %v4393 = vpop.f32.mrb[0].mxu0
    %v4394 = vadd.f32 0.0, %v4393
    %v4395 = vpop.f32.mrb[0].mxu0
    %v4396 = vadd.f32 0.0, %v4395
    %4397 = vmatprep.mubr.bf16.mxu0 0
    %4398 = vmatmul.mubr.bf16.gmra.mrb[0].mxu0 %v230
    %v4399 = vpop.f32.mrb[0].mxu0
    %v4400 = vadd.f32 0.0, %v4399
    %v4401 = vpop.f32.mrb[0].mxu0
    %v4402 = vadd.f32 0.0, %v4401
    %v4403 = vpop.f32.mrb[0].mxu0
    %v4404 = vadd.f32 0.0, %v4403
    %v4405 = vpop.f32.mrb[0].mxu0
    %v4406 = vadd.f32 0.0, %v4405
    %4407 = vmatprep.mubr.bf16.mxu0 0
    %4408 = vmatmul.mubr.bf16.gmra.mrb[0].mxu0 %v233
    %v4409 = vpop.f32.mrb[0].mxu0
    %v4410 = vadd.f32 0.0, %v4409
    %v4411 = vpop.f32.mrb[0].mxu0
    %v4412 = vadd.f32 0.0, %v4411
    %v4413 = vpop.f32.mrb[0].mxu0
    %v4414 = vadd.f32 0.0, %v4413
    %v4415 = vpop.f32.mrb[0].mxu0
    %v4416 = vadd.f32 0.0, %v4415
    %4417 = vmatprep.mubr.bf16.mxu0 0
    %4418 = vmatmul.mubr.bf16.gmra.mrb[0].mxu0 %v236
    %v4419 = vpop.f32.mrb[0].mxu0
    %v4420 = vadd.f32 0.0, %v4419
    %v4421 = vpop.f32.mrb[0].mxu0
    %v4422 = vadd.f32 0.0, %v4421
    %v4423 = vpop.f32.mrb[0].mxu0
    %v4424 = vpop.f32.mrb[0].mxu0
    %4425 = vdwg.mxu0
    %4426 = vmatprep.subr.bf16.mxu0 %v4262
    %4427 = vmatpush1.bf16.msra.mxu0 %v4260
    %4428 = vmatprep.subr.bf16.mxu0 0
    %4429 = vmatpush1.bf16.msra.mxu0 0
    %4430 = vmatprep.subr.bf16.mxu0 0
    %4431 = vmatpush1.bf16.msra.mxu0 0
    %4432 = vmatprep.subr.bf16.mxu0 0
    %4433 = vmatpush1.bf16.msra.mxu0 0
    %4434 = vmatprep.subr.bf16.mxu0 0
    %4435 = vmatpush1.bf16.msra.mxu0 0
    %4436 = vmatprep.subr.bf16.mxu0 0
    %4437 = vmatpush1.bf16.msra.mxu0 0
    %4438 = vmatprep.subr.bf16.mxu0 0
    %4439 = vmatpush1.bf16.msra.mxu0 0
    %4440 = vmatprep.subr.bf16.mxu0 0
    %4441 = vmatpush1.bf16.msra.mxu0 0
    %4442 = vmatprep.subr.bf16.mxu0 0
    %4443 = vmatpush1.bf16.msra.mxu0 0
    %4444 = vmatprep.subr.bf16.mxu0 0
    %4445 = vmatpush1.bf16.msra.mxu0 0
    %4446 = vmatprep.subr.bf16.mxu0 0
    %4447 = vmatpush1.bf16.msra.mxu0 0
    %4448 = vmatprep.subr.bf16.mxu0 0
    %4449 = vmatpush1.bf16.msra.mxu0 0
    %4450 = vmatprep.subr.bf16.mxu0 0
    %4451 = vmatpush1.bf16.msra.mxu0 0
    %4452 = vmatprep.subr.bf16.mxu0 0
    %4453 = vmatpush1.bf16.msra.mxu0 0
    %4454 = vmatprep.subr.bf16.mxu0 0
    %4455 = vmatpush1.bf16.msra.mxu0 0
    %4456 = vmatprep.subr.bf16.mxu0 0
    %4457 = vmatpush1.bf16.msra.mxu0 0
    %4458 = vmatprep.mubr.bf16.mxu0 0
    %4459 = vmatmul.mubr.bf16.gmra.mrb[0].mxu0 %v224
    %v4460 = vpop.f32.mrb[0].mxu0
    %v4461 = vadd.f32 0.0, %v4460
    %v4462 = vpop.f32.mrb[0].mxu0
    %v4463 = vadd.f32 0.0, %v4462
    %v4464 = vpop.f32.mrb[0].mxu0
    %v4465 = vadd.f32 0.0, %v4464
    %v4466 = vpop.f32.mrb[0].mxu0
    %v4467 = vadd.f32 0.0, %v4466
    %4468 = vmatprep.mubr.bf16.mxu0 0
    %4469 = vmatmul.mubr.bf16.gmra.mrb[0].mxu0 %v227
    %v4470 = vpop.f32.mrb[0].mxu0
    %v4471 = vadd.f32 0.0, %v4470
    %v4472 = vpop.f32.mrb[0].mxu0
    %v4473 = vadd.f32 0.0, %v4472
    %v4474 = vpop.f32.mrb[0].mxu0
    %v4475 = vadd.f32 0.0, %v4474
    %v4476 = vpop.f32.mrb[0].mxu0
    %v4477 = vadd.f32 0.0, %v4476
    %4478 = vmatprep.mubr.bf16.mxu0 0
    %4479 = vmatmul.mubr.bf16.gmra.mrb[0].mxu0 %v230
    %v4480 = vpop.f32.mrb[0].mxu0
    %v4481 = vadd.f32 0.0, %v4480
    %v4482 = vpop.f32.mrb[0].mxu0
    %v4483 = vadd.f32 0.0, %v4482
    %v4484 = vpop.f32.mrb[0].mxu0
    %v4485 = vadd.f32 0.0, %v4484
    %v4486 = vpop.f32.mrb[0].mxu0
    %v4487 = vadd.f32 0.0, %v4486
    %4488 = vmatprep.mubr.bf16.mxu0 0
    %4489 = vmatmul.mubr.bf16.gmra.mrb[0].mxu0 %v233
    %v4490 = vpop.f32.mrb[0].mxu0
    %v4491 = vadd.f32 0.0, %v4490
    %v4492 = vpop.f32.mrb[0].mxu0
    %v4493 = vadd.f32 0.0, %v4492
    %v4494 = vpop.f32.mrb[0].mxu0
    %v4495 = vadd.f32 0.0, %v4494
    %v4496 = vpop.f32.mrb[0].mxu0
    %v4497 = vadd.f32 0.0, %v4496
    %4498 = vmatprep.mubr.bf16.mxu0 0
    %4499 = vmatmul.mubr.bf16.gmra.mrb[0].mxu0 %v236
    %v4500 = vpop.f32.mrb[0].mxu0
    %v4501 = vadd.f32 0.0, %v4500
    %v4502 = vpop.f32.mrb[0].mxu0
    %v4503 = vadd.f32 0.0, %v4502
    %v4504 = vpop.f32.mrb[0].mxu0
    %v4505 = vpop.f32.mrb[0].mxu0
    %4506 = vdwg.mxu0
    %4507 = vrot.lane.b32.xlu0 %v4299, 19
    %v4508 = vpop.permute.xlu0 %4507
    %4509 = vrot.lane.b32.xlu0 %v4301, 19
    %v4510 = vpop.permute.xlu0 %4509
    %4511 = vrot.lane.b32.xlu0 %v4380, 19
    %v4512 = vpop.permute.xlu0 %4511
    %4513 = vrot.lane.b32.xlu0 %v4382, 19
    %v4514 = vpop.permute.xlu0 %4513
    %4515 = vrot.lane.b32.xlu0 %v4461, 19
    %v4516 = vpop.permute.xlu0 %4515
    %4517 = vrot.lane.b32.xlu0 %v4463, 19
    %v4518 = vpop.permute.xlu0 %4517
    %v4519 = vsel %vm508, %v4516, %v4518
    %v4520 = vsel %vm508, %v4514, %v4516
    %v4521 = vsel %vm508, %v4512, %v4514
    %v4522 = vsel %vm508, %v4510, %v4512
    %v4523 = vsel %vm508, %v4508, %v4510
    %v4524 = vsel %vm508, %v4518, %v4508
    %4525 = vrot.lane.b32.xlu0 %v4303, 18
    %v4526 = vpop.permute.xlu0 %4525
    %4527 = vrot.lane.b32.xlu0 %v4305, 18
    %v4528 = vpop.permute.xlu0 %4527
    %4529 = vrot.lane.b32.xlu0 %v4384, 18
    %v4530 = vpop.permute.xlu0 %4529
    %4531 = vrot.lane.b32.xlu0 %v4386, 18
    %v4532 = vpop.permute.xlu0 %4531
    %4533 = vrot.lane.b32.xlu0 %v4465, 18
    %v4534 = vpop.permute.xlu0 %4533
    %4535 = vrot.lane.b32.xlu0 %v4467, 18
    %v4536 = vpop.permute.xlu0 %4535
    %v4537 = vsel %vm527, %v4534, %v4536
    %v4538 = vsel %vm527, %v4532, %v4534
    %v4539 = vsel %vm527, %v4530, %v4532
    %v4540 = vsel %vm527, %v4528, %v4530
    %v4541 = vsel %vm527, %v4526, %v4528
    %v4542 = vsel %vm527, %v4536, %v4526
    %v4543 = vadd.f32 %v4524, %v4542
    %v4544 = vadd.f32 %v4523, %v4541
    %v4545 = vadd.f32 %v4522, %v4540
    %v4546 = vadd.f32 %v4521, %v4539
    %v4547 = vadd.f32 %v4520, %v4538
    %v4548 = vadd.f32 %v4519, %v4537
    %4549 = vrot.lane.b32.xlu0 %v4309, 17
    %v4550 = vpop.permute.xlu0 %4549
    %4551 = vrot.lane.b32.xlu0 %v4311, 17
    %v4552 = vpop.permute.xlu0 %4551
    %4553 = vrot.lane.b32.xlu0 %v4390, 17
    %v4554 = vpop.permute.xlu0 %4553
    %4555 = vrot.lane.b32.xlu0 %v4392, 17
    %v4556 = vpop.permute.xlu0 %4555
    %4557 = vrot.lane.b32.xlu0 %v4471, 17
    %v4558 = vpop.permute.xlu0 %4557
    %4559 = vrot.lane.b32.xlu0 %v4473, 17
    %v4560 = vpop.permute.xlu0 %4559
    %v4561 = vsel %vm552, %v4558, %v4560
    %v4562 = vsel %vm552, %v4556, %v4558
    %v4563 = vsel %vm552, %v4554, %v4556
    %v4564 = vsel %vm552, %v4552, %v4554
    %v4565 = vsel %vm552, %v4550, %v4552
    %v4566 = vsel %vm552, %v4560, %v4550
    %v4567 = vadd.f32 %v4543, %v4566
    %v4568 = vadd.f32 %v4544, %v4565
    %v4569 = vadd.f32 %v4545, %v4564
    %v4570 = vadd.f32 %v4546, %v4563
    %v4571 = vadd.f32 %v4547, %v4562
    %v4572 = vadd.f32 %v4548, %v4561
    %4573 = vrot.lane.b32.xlu0 %v4313, 1
    %v4574 = vpop.permute.xlu0 %4573
    %4575 = vrot.lane.b32.xlu0 %v4315, 1
    %v4576 = vpop.permute.xlu0 %4575
    %4577 = vrot.lane.b32.xlu0 %v4394, 1
    %v4578 = vpop.permute.xlu0 %4577
    %4579 = vrot.lane.b32.xlu0 %v4396, 1
    %v4580 = vpop.permute.xlu0 %4579
    %4581 = vrot.lane.b32.xlu0 %v4475, 1
    %v4582 = vpop.permute.xlu0 %4581
    %4583 = vrot.lane.b32.xlu0 %v4477, 1
    %v4584 = vpop.permute.xlu0 %4583
    %v4585 = vsel %vm577, %v4582, %v4584
    %v4586 = vsel %vm577, %v4580, %v4582
    %v4587 = vsel %vm577, %v4578, %v4580
    %v4588 = vsel %vm577, %v4576, %v4578
    %v4589 = vsel %vm577, %v4574, %v4576
    %v4590 = vsel %vm577, %v4584, %v4574
    %v4591 = vadd.f32 %v4567, %v4590
    %v4592 = vadd.f32 %v4568, %v4589
    %v4593 = vadd.f32 %v4569, %v4588
    %v4594 = vadd.f32 %v4570, %v4587
    %v4595 = vadd.f32 %v4571, %v4586
    %v4596 = vadd.f32 %v4572, %v4585
    %v4597 = vadd.f32 %v4591, %v4319
    %v4598 = vadd.f32 %v4592, %v4321
    %v4599 = vadd.f32 %v4593, %v4400
    %v4600 = vadd.f32 %v4594, %v4402
    %v4601 = vadd.f32 %v4595, %v4481
    %v4602 = vadd.f32 %v4596, %v4483
    %4603 = vrot.lane.b32.xlu0 %v4323, 127
    %v4604 = vpop.permute.xlu0 %4603
    %4605 = vrot.lane.b32.xlu0 %v4325, 127
    %v4606 = vpop.permute.xlu0 %4605
    %4607 = vrot.lane.b32.xlu0 %v4404, 127
    %v4608 = vpop.permute.xlu0 %4607
    %4609 = vrot.lane.b32.xlu0 %v4406, 127
    %v4610 = vpop.permute.xlu0 %4609
    %4611 = vrot.lane.b32.xlu0 %v4485, 127
    %v4612 = vpop.permute.xlu0 %4611
    %4613 = vrot.lane.b32.xlu0 %v4487, 127
    %v4614 = vpop.permute.xlu0 %4613
    %v4615 = vsel %vm608, %v4612, %v4614
    %v4616 = vsel %vm608, %v4610, %v4612
    %v4617 = vsel %vm608, %v4608, %v4610
    %v4618 = vsel %vm608, %v4606, %v4608
    %v4619 = vsel %vm608, %v4604, %v4606
    %v4620 = vsel %vm608, %v4614, %v4604
    %v4621 = vadd.f32 %v4597, %v4619
    %v4622 = vadd.f32 %v4598, %v4618
    %v4623 = vadd.f32 %v4599, %v4617
    %v4624 = vadd.f32 %v4600, %v4616
    %v4625 = vadd.f32 %v4601, %v4615
    %v4626 = vadd.f32 %v4602, %v4620
    %4627 = vrot.lane.b32.xlu0 %v4329, 111
    %v4628 = vpop.permute.xlu0 %4627
    %4629 = vrot.lane.b32.xlu0 %v4331, 111
    %v4630 = vpop.permute.xlu0 %4629
    %4631 = vrot.lane.b32.xlu0 %v4410, 111
    %v4632 = vpop.permute.xlu0 %4631
    %4633 = vrot.lane.b32.xlu0 %v4412, 111
    %v4634 = vpop.permute.xlu0 %4633
    %4635 = vrot.lane.b32.xlu0 %v4491, 111
    %v4636 = vpop.permute.xlu0 %4635
    %4637 = vrot.lane.b32.xlu0 %v4493, 111
    %v4638 = vpop.permute.xlu0 %4637
    %v4639 = vsel %vm633, %v4636, %v4638
    %v4640 = vsel %vm633, %v4634, %v4636
    %v4641 = vsel %vm633, %v4632, %v4634
    %v4642 = vsel %vm633, %v4630, %v4632
    %v4643 = vsel %vm633, %v4628, %v4630
    %v4644 = vsel %vm633, %v4638, %v4628
    %v4645 = vadd.f32 %v4621, %v4643
    %v4646 = vadd.f32 %v4622, %v4642
    %v4647 = vadd.f32 %v4623, %v4641
    %v4648 = vadd.f32 %v4624, %v4640
    %v4649 = vadd.f32 %v4625, %v4639
    %v4650 = vadd.f32 %v4626, %v4644
    %4651 = vrot.lane.b32.xlu0 %v4333, 110
    %v4652 = vpop.permute.xlu0 %4651
    %4653 = vrot.lane.b32.xlu0 %v4335, 110
    %v4654 = vpop.permute.xlu0 %4653
    %4655 = vrot.lane.b32.xlu0 %v4414, 110
    %v4656 = vpop.permute.xlu0 %4655
    %4657 = vrot.lane.b32.xlu0 %v4416, 110
    %v4658 = vpop.permute.xlu0 %4657
    %4659 = vrot.lane.b32.xlu0 %v4495, 110
    %v4660 = vpop.permute.xlu0 %4659
    %4661 = vrot.lane.b32.xlu0 %v4497, 110
    %v4662 = vpop.permute.xlu0 %4661
    %v4663 = vsel %vm658, %v4660, %v4662
    %v4664 = vsel %vm658, %v4658, %v4660
    %v4665 = vsel %vm658, %v4656, %v4658
    %v4666 = vsel %vm658, %v4654, %v4656
    %v4667 = vsel %vm658, %v4652, %v4654
    %v4668 = vsel %vm658, %v4662, %v4652
    %v4669 = vadd.f32 %v4645, %v4667
    %v4670 = vadd.f32 %v4646, %v4666
    %v4671 = vadd.f32 %v4647, %v4665
    %v4672 = vadd.f32 %v4648, %v4664
    %v4673 = vadd.f32 %v4649, %v4663
    %v4674 = vadd.f32 %v4650, %v4668
    %4675 = vrot.lane.b32.xlu0 %v4339, 109
    %v4676 = vpop.permute.xlu0 %4675
    %4677 = vrot.lane.b32.xlu0 %v4341, 109
    %v4678 = vpop.permute.xlu0 %4677
    %4679 = vrot.lane.b32.xlu0 %v4420, 109
    %v4680 = vpop.permute.xlu0 %4679
    %4681 = vrot.lane.b32.xlu0 %v4422, 109
    %v4682 = vpop.permute.xlu0 %4681
    %4683 = vrot.lane.b32.xlu0 %v4501, 109
    %v4684 = vpop.permute.xlu0 %4683
    %4685 = vrot.lane.b32.xlu0 %v4503, 109
    %v4686 = vpop.permute.xlu0 %4685
    %v4687 = vsel %vm683, %v4684, %v4686
    %v4688 = vsel %vm683, %v4682, %v4684
    %v4689 = vsel %vm683, %v4680, %v4682
    %v4690 = vsel %vm683, %v4678, %v4680
    %v4691 = vsel %vm683, %v4676, %v4678
    %v4692 = vsel %vm683, %v4686, %v4676
    %v4693 = vadd.f32 %v4669, %v4691
    %v4694 = vadd.f32 %v4670, %v4690
    %v4695 = vadd.f32 %v4671, %v4689
    %v4696 = vadd.f32 %v4672, %v4688
    %v4697 = vadd.f32 %v4673, %v4687
    %v4698 = vadd.f32 %v4674, %v4692
    %s4699 = scalar_lea.vmem [#allocation2], 336
    %4700 = vst [vmem:[%s4699] sm:$0xff] %v4693
    %4701 = vst [vmem:[%s4699 + $0x8] sm:$0xff] %v4694
    %4702 = vst [vmem:[%s4699 + $0x10] sm:$0xff] %v4695
    %4703 = vst [vmem:[%s4699 + $0x18] sm:$0xff] %v4696
    %4704 = vst [vmem:[%s4699 + $0x20] sm:$0xff] %v4697
    %4705 = vst [vmem:[%s4699 + $0x28] sm:$0xff] %v4698
    %v4706 = vld [vmem:[#allocation8] sm:$0xff]
    %v4707 = vld [vmem:[#allocation9] sm:$0xff]
    %v4708 = vld [vmem:[#allocation9 + $0x8] sm:$0xff]
    %v4709 = vld [vmem:[#allocation9 + $0x10] sm:$0xff]
    %v4710 = vld [vmem:[#allocation9 + $0x18] sm:$0xff]
    %v4711 = vld [vmem:[#allocation9 + $0x20] sm:$0xff]
    %v4712 = vld [vmem:[#allocation9 + $0x28] sm:$0xff]
    %v4713 = vld [vmem:[%s4699] sm:$0xff]
    %v4714 = vld [vmem:[%s4699 + $0x8] sm:$0xff]
    %v4715 = vld [vmem:[%s4699 + $0x10] sm:$0xff]
    %v4716 = vld [vmem:[%s4699 + $0x18] sm:$0xff]
    %v4717 = vld [vmem:[%s4699 + $0x20] sm:$0xff]
    %v4718 = vld [vmem:[%s4699 + $0x28] sm:$0xff]
    %4720 = vset.pattern.permute.xlu0 0
    %4721 = vperm.xlu0 %4720, %v4706
    %v4722 = vpop.permute.xlu0 %4721
    %v4724 = vmul.f32 %v4722, %v4707
    %v4725 = vmul.f32 %v4722, %v4708
    %v4726 = vmul.f32 %v4722, %v4709
    %v4727 = vmul.f32 %v4722, %v4710
    %v4728 = vmul.f32 %v4722, %v4711
    %v4729 = vmul.f32 %v4722, %v4712
    %4730 = vset.pattern.permute.xlu0 3
    %4731 = vperm.xlu0 %4730, %v4706
    %v4732 = vpop.permute.xlu0 %4731
    %v4734 = vmul.f32 %v4713, %v4732
    %v4735 = vmul.f32 %v4714, %v4732
    %v4736 = vmul.f32 %v4715, %v4732
    %v4737 = vmul.f32 %v4716, %v4732
    %v4738 = vmul.f32 %v4717, %v4732
    %v4739 = vmul.f32 %v4718, %v4732
    %4740 = vset.pattern.permute.xlu0 1
    %4741 = vperm.xlu0 %4740, %v4706
    %v4742 = vpop.permute.xlu0 %4741
    %v4744 = vadd.f32 %v4742, %v4734
    %v4745 = vadd.f32 %v4742, %v4735
    %v4746 = vadd.f32 %v4742, %v4736
    %v4747 = vadd.f32 %v4742, %v4737
    %v4748 = vadd.f32 %v4742, %v4738
    %v4749 = vadd.f32 %v4742, %v4739
    %v4750 = vadd.f32 %v4724, %v4744
    %v4751 = vadd.f32 %v4725, %v4745
    %v4752 = vadd.f32 %v4726, %v4746
    %v4753 = vadd.f32 %v4727, %v4747
    %v4754 = vadd.f32 %v4728, %v4748
    %v4755 = vadd.f32 %v4729, %v4749
    %4756 = vset.pattern.permute.xlu0 2
    %4757 = vperm.xlu0 %4756, %v4706
    %v4758 = vpop.permute.xlu0 %4757
    %v4760 = vadd.f32 %v4758, %v4713
    %v4761 = vadd.f32 %v4758, %v4714
    %v4762 = vadd.f32 %v4758, %v4715
    %v4763 = vadd.f32 %v4758, %v4716
    %v4764 = vadd.f32 %v4758, %v4717
    %v4765 = vadd.f32 %v4758, %v4718
    %v4766 = vrcp.pop %v4760
    %v4767 = vrcp.pop %v4761
    %v4768 = vrcp.pop %v4762
    %v4769 = vrcp.pop %v4763
    %v4770 = vrcp.pop %v4764
    %v4771 = vrcp.pop %v4765
    %v4772 = vmul.f32 %v4760, %v4766
    %v4773 = vmul.f32 %v4761, %v4767
    %v4774 = vmul.f32 %v4762, %v4768
    %v4775 = vmul.f32 %v4763, %v4769
    %v4776 = vmul.f32 %v4764, %v4770
    %v4777 = vmul.f32 %v4765, %v4771
    %v4778 = vsub.f32 2.0, %v4772
    %v4779 = vsub.f32 2.0, %v4773
    %v4780 = vsub.f32 2.0, %v4774
    %v4781 = vsub.f32 2.0, %v4775
    %v4782 = vsub.f32 2.0, %v4776
    %v4783 = vsub.f32 2.0, %v4777
    %v4784 = vmul.f32 %v4766, %v4778
    %v4785 = vmul.f32 %v4767, %v4779
    %v4786 = vmul.f32 %v4768, %v4780
    %v4787 = vmul.f32 %v4769, %v4781
    %v4788 = vmul.f32 %v4770, %v4782
    %v4789 = vmul.f32 %v4771, %v4783
    %v4790 = vmul.f32 %v4750, %v4784
    %v4791 = vmul.f32 %v4751, %v4785
    %v4792 = vmul.f32 %v4752, %v4786
    %v4793 = vmul.f32 %v4753, %v4787
    %v4794 = vmul.f32 %v4754, %v4788
    %v4795 = vmul.f32 %v4755, %v4789
    %v4796 = vmul.f32 %v4790, 0.5
    %v4797 = vmul.f32 %v4791, 0.5
    %v4798 = vmul.f32 %v4792, 0.5
    %v4799 = vmul.f32 %v4793, 0.5
    %v4800 = vmul.f32 %v4794, 0.5
    %v4801 = vmul.f32 %v4795, 0.5
    %v4802 = vtanh.pop %v4796
    %v4803 = vtanh.pop %v4797
    %v4804 = vtanh.pop %v4798
    %v4805 = vtanh.pop %v4799
    %v4806 = vtanh.pop %v4800
    %v4807 = vtanh.pop %v4801
    %v4808 = vmul.f32 %v4802, 0.5
    %v4809 = vmul.f32 %v4803, 0.5
    %v4810 = vmul.f32 %v4804, 0.5
    %v4811 = vmul.f32 %v4805, 0.5
    %v4812 = vmul.f32 %v4806, 0.5
    %v4813 = vmul.f32 %v4807, 0.5
    %v4814 = vadd.f32 %v4808, 0.5
    %v4815 = vadd.f32 %v4809, 0.5
    %v4816 = vadd.f32 %v4810, 0.5
    %v4817 = vadd.f32 %v4811, 0.5
    %v4818 = vadd.f32 %v4812, 0.5
    %v4819 = vadd.f32 %v4813, 0.5
    %v4820 = vld [vmem:[%s4127] sm:$0xff]
    %v4821 = vld [vmem:[%s4127 + $0x8] sm:$0xff]
    %v4822 = vld [vmem:[%s4127 + $0x10] sm:$0xff]
    %v4823 = vld [vmem:[%s4127 + $0x18] sm:$0xff]
    %v4824 = vld [vmem:[%s4127 + $0x20] sm:$0xff]
    %v4825 = vld [vmem:[%s4127 + $0x28] sm:$0xff]
    %v4826 = vmul.f32 %v4722, %v4814
    %v4827 = vmul.f32 %v4722, %v4815
    %v4828 = vmul.f32 %v4722, %v4816
    %v4829 = vmul.f32 %v4722, %v4817
    %v4830 = vmul.f32 %v4722, %v4818
    %v4831 = vmul.f32 %v4722, %v4819
    %v4832 = vmul.f32 %v4820, %v4732
    %v4833 = vmul.f32 %v4821, %v4732
    %v4834 = vmul.f32 %v4822, %v4732
    %v4835 = vmul.f32 %v4823, %v4732
    %v4836 = vmul.f32 %v4824, %v4732
    %v4837 = vmul.f32 %v4825, %v4732
    %v4838 = vadd.f32 %v4742, %v4832
    %v4839 = vadd.f32 %v4742, %v4833
    %v4840 = vadd.f32 %v4742, %v4834
    %v4841 = vadd.f32 %v4742, %v4835
    %v4842 = vadd.f32 %v4742, %v4836
    %v4843 = vadd.f32 %v4742, %v4837
    %v4844 = vadd.f32 %v4826, %v4838
    %v4845 = vadd.f32 %v4827, %v4839
    %v4846 = vadd.f32 %v4828, %v4840
    %v4847 = vadd.f32 %v4829, %v4841
    %v4848 = vadd.f32 %v4830, %v4842
    %v4849 = vadd.f32 %v4831, %v4843
    %v4850 = vadd.f32 %v4758, %v4820
    %v4851 = vadd.f32 %v4758, %v4821
    %v4852 = vadd.f32 %v4758, %v4822
    %v4853 = vadd.f32 %v4758, %v4823
    %v4854 = vadd.f32 %v4758, %v4824
    %v4855 = vadd.f32 %v4758, %v4825
    %v4856 = vrcp.pop %v4850
    %v4857 = vrcp.pop %v4851
    %v4858 = vrcp.pop %v4852
    %v4859 = vrcp.pop %v4853
    %v4860 = vrcp.pop %v4854
    %v4861 = vrcp.pop %v4855
    %v4862 = vmul.f32 %v4850, %v4856
    %v4863 = vmul.f32 %v4851, %v4857
    %v4864 = vmul.f32 %v4852, %v4858
    %v4865 = vmul.f32 %v4853, %v4859
    %v4866 = vmul.f32 %v4854, %v4860
    %v4867 = vmul.f32 %v4855, %v4861
    %v4868 = vsub.f32 2.0, %v4862
    %v4869 = vsub.f32 2.0, %v4863
    %v4870 = vsub.f32 2.0, %v4864
    %v4871 = vsub.f32 2.0, %v4865
    %v4872 = vsub.f32 2.0, %v4866
    %v4873 = vsub.f32 2.0, %v4867
    %v4874 = vmul.f32 %v4856, %v4868
    %v4875 = vmul.f32 %v4857, %v4869
    %v4876 = vmul.f32 %v4858, %v4870
    %v4877 = vmul.f32 %v4859, %v4871
    %v4878 = vmul.f32 %v4860, %v4872
    %v4879 = vmul.f32 %v4861, %v4873
    %v4880 = vmul.f32 %v4844, %v4874
    %v4881 = vmul.f32 %v4845, %v4875
    %v4882 = vmul.f32 %v4846, %v4876
    %v4883 = vmul.f32 %v4847, %v4877
    %v4884 = vmul.f32 %v4848, %v4878
    %v4885 = vmul.f32 %v4849, %v4879
    %v4886 = vmul.f32 %v4880, 0.5
    %v4887 = vmul.f32 %v4881, 0.5
    %v4888 = vmul.f32 %v4882, 0.5
    %v4889 = vmul.f32 %v4883, 0.5
    %v4890 = vmul.f32 %v4884, 0.5
    %v4891 = vmul.f32 %v4885, 0.5
    %v4892 = vtanh.pop %v4886
    %v4893 = vtanh.pop %v4887
    %v4894 = vtanh.pop %v4888
    %v4895 = vtanh.pop %v4889
    %v4896 = vtanh.pop %v4890
    %v4897 = vtanh.pop %v4891
    %v4898 = vmul.f32 %v4892, 0.5
    %v4899 = vmul.f32 %v4893, 0.5
    %v4900 = vmul.f32 %v4894, 0.5
    %v4901 = vmul.f32 %v4895, 0.5
    %v4902 = vmul.f32 %v4896, 0.5
    %v4903 = vmul.f32 %v4897, 0.5
    %v4904 = vadd.f32 %v4898, 0.5
    %v4905 = vadd.f32 %v4899, 0.5
    %v4906 = vadd.f32 %v4900, 0.5
    %v4907 = vadd.f32 %v4901, 0.5
    %v4908 = vadd.f32 %v4902, 0.5
    %v4909 = vadd.f32 %v4903, 0.5
    %v4910 = vld [vmem:[%s3555] sm:$0xff]
    %v4911 = vld [vmem:[%s3555 + $0x8] sm:$0xff]
    %v4912 = vld [vmem:[%s3555 + $0x10] sm:$0xff]
    %v4913 = vld [vmem:[%s3555 + $0x18] sm:$0xff]
    %v4914 = vld [vmem:[%s3555 + $0x20] sm:$0xff]
    %v4915 = vld [vmem:[%s3555 + $0x28] sm:$0xff]
    %v4916 = vmul.f32 %v4722, %v4904
    %v4917 = vmul.f32 %v4722, %v4905
    %v4918 = vmul.f32 %v4722, %v4906
    %v4919 = vmul.f32 %v4722, %v4907
    %v4920 = vmul.f32 %v4722, %v4908
    %v4921 = vmul.f32 %v4722, %v4909
    %v4922 = vmul.f32 %v4910, %v4732
    %v4923 = vmul.f32 %v4911, %v4732
    %v4924 = vmul.f32 %v4912, %v4732
    %v4925 = vmul.f32 %v4913, %v4732
    %v4926 = vmul.f32 %v4914, %v4732
    %v4927 = vmul.f32 %v4915, %v4732
    %v4928 = vadd.f32 %v4742, %v4922
    %v4929 = vadd.f32 %v4742, %v4923
    %v4930 = vadd.f32 %v4742, %v4924
    %v4931 = vadd.f32 %v4742, %v4925
    %v4932 = vadd.f32 %v4742, %v4926
    %v4933 = vadd.f32 %v4742, %v4927
    %v4934 = vadd.f32 %v4916, %v4928
    %v4935 = vadd.f32 %v4917, %v4929
    %v4936 = vadd.f32 %v4918, %v4930
    %v4937 = vadd.f32 %v4919, %v4931
    %v4938 = vadd.f32 %v4920, %v4932
    %v4939 = vadd.f32 %v4921, %v4933
    %v4940 = vadd.f32 %v4758, %v4910
    %v4941 = vadd.f32 %v4758, %v4911
    %v4942 = vadd.f32 %v4758, %v4912
    %v4943 = vadd.f32 %v4758, %v4913
    %v4944 = vadd.f32 %v4758, %v4914
    %v4945 = vadd.f32 %v4758, %v4915
    %v4946 = vrcp.pop %v4940
    %v4947 = vrcp.pop %v4941
    %v4948 = vrcp.pop %v4942
    %v4949 = vrcp.pop %v4943
    %v4950 = vrcp.pop %v4944
    %v4951 = vrcp.pop %v4945
    %v4952 = vmul.f32 %v4940, %v4946
    %v4953 = vmul.f32 %v4941, %v4947
    %v4954 = vmul.f32 %v4942, %v4948
    %v4955 = vmul.f32 %v4943, %v4949
    %v4956 = vmul.f32 %v4944, %v4950
    %v4957 = vmul.f32 %v4945, %v4951
    %v4958 = vsub.f32 2.0, %v4952
    %v4959 = vsub.f32 2.0, %v4953
    %v4960 = vsub.f32 2.0, %v4954
    %v4961 = vsub.f32 2.0, %v4955
    %v4962 = vsub.f32 2.0, %v4956
    %v4963 = vsub.f32 2.0, %v4957
    %v4964 = vmul.f32 %v4946, %v4958
    %v4965 = vmul.f32 %v4947, %v4959
    %v4966 = vmul.f32 %v4948, %v4960
    %v4967 = vmul.f32 %v4949, %v4961
    %v4968 = vmul.f32 %v4950, %v4962
    %v4969 = vmul.f32 %v4951, %v4963
    %v4970 = vmul.f32 %v4934, %v4964
    %v4971 = vmul.f32 %v4935, %v4965
    %v4972 = vmul.f32 %v4936, %v4966
    %v4973 = vmul.f32 %v4937, %v4967
    %v4974 = vmul.f32 %v4938, %v4968
    %v4975 = vmul.f32 %v4939, %v4969
    %v4976 = vmul.f32 %v4970, 0.5
    %v4977 = vmul.f32 %v4971, 0.5
    %v4978 = vmul.f32 %v4972, 0.5
    %v4979 = vmul.f32 %v4973, 0.5
    %v4980 = vmul.f32 %v4974, 0.5
    %v4981 = vmul.f32 %v4975, 0.5
    %v4982 = vtanh.pop %v4976
    %v4983 = vtanh.pop %v4977
    %v4984 = vtanh.pop %v4978
    %v4985 = vtanh.pop %v4979
    %v4986 = vtanh.pop %v4980
    %v4987 = vtanh.pop %v4981
    %v4988 = vmul.f32 %v4982, 0.5
    %v4989 = vmul.f32 %v4983, 0.5
    %v4990 = vmul.f32 %v4984, 0.5
    %v4991 = vmul.f32 %v4985, 0.5
    %v4992 = vmul.f32 %v4986, 0.5
    %v4993 = vmul.f32 %v4987, 0.5
    %v4994 = vadd.f32 %v4988, 0.5
    %v4995 = vadd.f32 %v4989, 0.5
    %v4996 = vadd.f32 %v4990, 0.5
    %v4997 = vadd.f32 %v4991, 0.5
    %v4998 = vadd.f32 %v4992, 0.5
    %v4999 = vadd.f32 %v4993, 0.5
    %v5000 = vld [vmem:[%s2983] sm:$0xff]
    %v5001 = vld [vmem:[%s2983 + $0x8] sm:$0xff]
    %v5002 = vld [vmem:[%s2983 + $0x10] sm:$0xff]
    %v5003 = vld [vmem:[%s2983 + $0x18] sm:$0xff]
    %v5004 = vld [vmem:[%s2983 + $0x20] sm:$0xff]
    %v5005 = vld [vmem:[%s2983 + $0x28] sm:$0xff]
    %v5006 = vmul.f32 %v4722, %v4994
    %v5007 = vmul.f32 %v4722, %v4995
    %v5008 = vmul.f32 %v4722, %v4996
    %v5009 = vmul.f32 %v4722, %v4997
    %v5010 = vmul.f32 %v4722, %v4998
    %v5011 = vmul.f32 %v4722, %v4999
    %v5012 = vmul.f32 %v5000, %v4732
    %v5013 = vmul.f32 %v5001, %v4732
    %v5014 = vmul.f32 %v5002, %v4732
    %v5015 = vmul.f32 %v5003, %v4732
    %v5016 = vmul.f32 %v5004, %v4732
    %v5017 = vmul.f32 %v5005, %v4732
    %v5018 = vadd.f32 %v4742, %v5012
    %v5019 = vadd.f32 %v4742, %v5013
    %v5020 = vadd.f32 %v4742, %v5014
    %v5021 = vadd.f32 %v4742, %v5015
    %v5022 = vadd.f32 %v4742, %v5016
    %v5023 = vadd.f32 %v4742, %v5017
    %v5024 = vadd.f32 %v5006, %v5018
    %v5025 = vadd.f32 %v5007, %v5019
    %v5026 = vadd.f32 %v5008, %v5020
    %v5027 = vadd.f32 %v5009, %v5021
    %v5028 = vadd.f32 %v5010, %v5022
    %v5029 = vadd.f32 %v5011, %v5023
    %v5030 = vadd.f32 %v4758, %v5000
    %v5031 = vadd.f32 %v4758, %v5001
    %v5032 = vadd.f32 %v4758, %v5002
    %v5033 = vadd.f32 %v4758, %v5003
    %v5034 = vadd.f32 %v4758, %v5004
    %v5035 = vadd.f32 %v4758, %v5005
    %v5036 = vrcp.pop %v5030
    %v5037 = vrcp.pop %v5031
    %v5038 = vrcp.pop %v5032
    %v5039 = vrcp.pop %v5033
    %v5040 = vrcp.pop %v5034
    %v5041 = vrcp.pop %v5035
    %v5042 = vmul.f32 %v5030, %v5036
    %v5043 = vmul.f32 %v5031, %v5037
    %v5044 = vmul.f32 %v5032, %v5038
    %v5045 = vmul.f32 %v5033, %v5039
    %v5046 = vmul.f32 %v5034, %v5040
    %v5047 = vmul.f32 %v5035, %v5041
    %v5048 = vsub.f32 2.0, %v5042
    %v5049 = vsub.f32 2.0, %v5043
    %v5050 = vsub.f32 2.0, %v5044
    %v5051 = vsub.f32 2.0, %v5045
    %v5052 = vsub.f32 2.0, %v5046
    %v5053 = vsub.f32 2.0, %v5047
    %v5054 = vmul.f32 %v5036, %v5048
    %v5055 = vmul.f32 %v5037, %v5049
    %v5056 = vmul.f32 %v5038, %v5050
    %v5057 = vmul.f32 %v5039, %v5051
    %v5058 = vmul.f32 %v5040, %v5052
    %v5059 = vmul.f32 %v5041, %v5053
    %v5060 = vmul.f32 %v5024, %v5054
    %v5061 = vmul.f32 %v5025, %v5055
    %v5062 = vmul.f32 %v5026, %v5056
    %v5063 = vmul.f32 %v5027, %v5057
    %v5064 = vmul.f32 %v5028, %v5058
    %v5065 = vmul.f32 %v5029, %v5059
    %v5066 = vmul.f32 %v5060, 0.5
    %v5067 = vmul.f32 %v5061, 0.5
    %v5068 = vmul.f32 %v5062, 0.5
    %v5069 = vmul.f32 %v5063, 0.5
    %v5070 = vmul.f32 %v5064, 0.5
    %v5071 = vmul.f32 %v5065, 0.5
    %v5072 = vtanh.pop %v5066
    %v5073 = vtanh.pop %v5067
    %v5074 = vtanh.pop %v5068
    %v5075 = vtanh.pop %v5069
    %v5076 = vtanh.pop %v5070
    %v5077 = vtanh.pop %v5071
    %v5078 = vmul.f32 %v5072, 0.5
    %v5079 = vmul.f32 %v5073, 0.5
    %v5080 = vmul.f32 %v5074, 0.5
    %v5081 = vmul.f32 %v5075, 0.5
    %v5082 = vmul.f32 %v5076, 0.5
    %v5083 = vmul.f32 %v5077, 0.5
    %v5084 = vadd.f32 %v5078, 0.5
    %v5085 = vadd.f32 %v5079, 0.5
    %v5086 = vadd.f32 %v5080, 0.5
    %v5087 = vadd.f32 %v5081, 0.5
    %v5088 = vadd.f32 %v5082, 0.5
    %v5089 = vadd.f32 %v5083, 0.5
    %v5090 = vld [vmem:[%s2411] sm:$0xff]
    %v5091 = vld [vmem:[%s2411 + $0x8] sm:$0xff]
    %v5092 = vld [vmem:[%s2411 + $0x10] sm:$0xff]
    %v5093 = vld [vmem:[%s2411 + $0x18] sm:$0xff]
    %v5094 = vld [vmem:[%s2411 + $0x20] sm:$0xff]
    %v5095 = vld [vmem:[%s2411 + $0x28] sm:$0xff]
    %v5096 = vmul.f32 %v4722, %v5084
    %v5097 = vmul.f32 %v4722, %v5085
    %v5098 = vmul.f32 %v4722, %v5086
    %v5099 = vmul.f32 %v4722, %v5087
    %v5100 = vmul.f32 %v4722, %v5088
    %v5101 = vmul.f32 %v4722, %v5089
    %v5102 = vmul.f32 %v5090, %v4732
    %v5103 = vmul.f32 %v5091, %v4732
    %v5104 = vmul.f32 %v5092, %v4732
    %v5105 = vmul.f32 %v5093, %v4732
    %v5106 = vmul.f32 %v5094, %v4732
    %v5107 = vmul.f32 %v5095, %v4732
    %v5108 = vadd.f32 %v4742, %v5102
    %v5109 = vadd.f32 %v4742, %v5103
    %v5110 = vadd.f32 %v4742, %v5104
    %v5111 = vadd.f32 %v4742, %v5105
    %v5112 = vadd.f32 %v4742, %v5106
    %v5113 = vadd.f32 %v4742, %v5107
    %v5114 = vadd.f32 %v5096, %v5108
    %v5115 = vadd.f32 %v5097, %v5109
    %v5116 = vadd.f32 %v5098, %v5110
    %v5117 = vadd.f32 %v5099, %v5111
    %v5118 = vadd.f32 %v5100, %v5112
    %v5119 = vadd.f32 %v5101, %v5113
    %v5120 = vadd.f32 %v4758, %v5090
    %v5121 = vadd.f32 %v4758, %v5091
    %v5122 = vadd.f32 %v4758, %v5092
    %v5123 = vadd.f32 %v4758, %v5093
    %v5124 = vadd.f32 %v4758, %v5094
    %v5125 = vadd.f32 %v4758, %v5095
    %v5126 = vrcp.pop %v5120
    %v5127 = vrcp.pop %v5121
    %v5128 = vrcp.pop %v5122
    %v5129 = vrcp.pop %v5123
    %v5130 = vrcp.pop %v5124
    %v5131 = vrcp.pop %v5125
    %v5132 = vmul.f32 %v5120, %v5126
    %v5133 = vmul.f32 %v5121, %v5127
    %v5134 = vmul.f32 %v5122, %v5128
    %v5135 = vmul.f32 %v5123, %v5129
    %v5136 = vmul.f32 %v5124, %v5130
    %v5137 = vmul.f32 %v5125, %v5131
    %v5138 = vsub.f32 2.0, %v5132
    %v5139 = vsub.f32 2.0, %v5133
    %v5140 = vsub.f32 2.0, %v5134
    %v5141 = vsub.f32 2.0, %v5135
    %v5142 = vsub.f32 2.0, %v5136
    %v5143 = vsub.f32 2.0, %v5137
    %v5144 = vmul.f32 %v5126, %v5138
    %v5145 = vmul.f32 %v5127, %v5139
    %v5146 = vmul.f32 %v5128, %v5140
    %v5147 = vmul.f32 %v5129, %v5141
    %v5148 = vmul.f32 %v5130, %v5142
    %v5149 = vmul.f32 %v5131, %v5143
    %v5150 = vmul.f32 %v5114, %v5144
    %v5151 = vmul.f32 %v5115, %v5145
    %v5152 = vmul.f32 %v5116, %v5146
    %v5153 = vmul.f32 %v5117, %v5147
    %v5154 = vmul.f32 %v5118, %v5148
    %v5155 = vmul.f32 %v5119, %v5149
    %v5156 = vmul.f32 %v5150, 0.5
    %v5157 = vmul.f32 %v5151, 0.5
    %v5158 = vmul.f32 %v5152, 0.5
    %v5159 = vmul.f32 %v5153, 0.5
    %v5160 = vmul.f32 %v5154, 0.5
    %v5161 = vmul.f32 %v5155, 0.5
    %v5162 = vtanh.pop %v5156
    %v5163 = vtanh.pop %v5157
    %v5164 = vtanh.pop %v5158
    %v5165 = vtanh.pop %v5159
    %v5166 = vtanh.pop %v5160
    %v5167 = vtanh.pop %v5161
    %v5168 = vmul.f32 %v5162, 0.5
    %v5169 = vmul.f32 %v5163, 0.5
    %v5170 = vmul.f32 %v5164, 0.5
    %v5171 = vmul.f32 %v5165, 0.5
    %v5172 = vmul.f32 %v5166, 0.5
    %v5173 = vmul.f32 %v5167, 0.5
    %v5174 = vadd.f32 %v5168, 0.5
    %v5175 = vadd.f32 %v5169, 0.5
    %v5176 = vadd.f32 %v5170, 0.5
    %v5177 = vadd.f32 %v5171, 0.5
    %v5178 = vadd.f32 %v5172, 0.5
    %v5179 = vadd.f32 %v5173, 0.5
    %v5180 = vld [vmem:[%s1839] sm:$0xff]
    %v5181 = vld [vmem:[%s1839 + $0x8] sm:$0xff]
    %v5182 = vld [vmem:[%s1839 + $0x10] sm:$0xff]
    %v5183 = vld [vmem:[%s1839 + $0x18] sm:$0xff]
    %v5184 = vld [vmem:[%s1839 + $0x20] sm:$0xff]
    %v5185 = vld [vmem:[%s1839 + $0x28] sm:$0xff]
    %v5186 = vmul.f32 %v4722, %v5174
    %v5187 = vmul.f32 %v4722, %v5175
    %v5188 = vmul.f32 %v4722, %v5176
    %v5189 = vmul.f32 %v4722, %v5177
    %v5190 = vmul.f32 %v4722, %v5178
    %v5191 = vmul.f32 %v4722, %v5179
    %v5192 = vmul.f32 %v5180, %v4732
    %v5193 = vmul.f32 %v5181, %v4732
    %v5194 = vmul.f32 %v5182, %v4732
    %v5195 = vmul.f32 %v5183, %v4732
    %v5196 = vmul.f32 %v5184, %v4732
    %v5197 = vmul.f32 %v5185, %v4732
    %v5198 = vadd.f32 %v4742, %v5192
    %v5199 = vadd.f32 %v4742, %v5193
    %v5200 = vadd.f32 %v4742, %v5194
    %v5201 = vadd.f32 %v4742, %v5195
    %v5202 = vadd.f32 %v4742, %v5196
    %v5203 = vadd.f32 %v4742, %v5197
    %v5204 = vadd.f32 %v5186, %v5198
    %v5205 = vadd.f32 %v5187, %v5199
    %v5206 = vadd.f32 %v5188, %v5200
    %v5207 = vadd.f32 %v5189, %v5201
    %v5208 = vadd.f32 %v5190, %v5202
    %v5209 = vadd.f32 %v5191, %v5203
    %v5210 = vadd.f32 %v4758, %v5180
    %v5211 = vadd.f32 %v4758, %v5181
    %v5212 = vadd.f32 %v4758, %v5182
    %v5213 = vadd.f32 %v4758, %v5183
    %v5214 = vadd.f32 %v4758, %v5184
    %v5215 = vadd.f32 %v4758, %v5185
    %v5216 = vrcp.pop %v5210
    %v5217 = vrcp.pop %v5211
    %v5218 = vrcp.pop %v5212
    %v5219 = vrcp.pop %v5213
    %v5220 = vrcp.pop %v5214
    %v5221 = vrcp.pop %v5215
    %v5222 = vmul.f32 %v5210, %v5216
    %v5223 = vmul.f32 %v5211, %v5217
    %v5224 = vmul.f32 %v5212, %v5218
    %v5225 = vmul.f32 %v5213, %v5219
    %v5226 = vmul.f32 %v5214, %v5220
    %v5227 = vmul.f32 %v5215, %v5221
    %v5228 = vsub.f32 2.0, %v5222
    %v5229 = vsub.f32 2.0, %v5223
    %v5230 = vsub.f32 2.0, %v5224
    %v5231 = vsub.f32 2.0, %v5225
    %v5232 = vsub.f32 2.0, %v5226
    %v5233 = vsub.f32 2.0, %v5227
    %v5234 = vmul.f32 %v5216, %v5228
    %v5235 = vmul.f32 %v5217, %v5229
    %v5236 = vmul.f32 %v5218, %v5230
    %v5237 = vmul.f32 %v5219, %v5231
    %v5238 = vmul.f32 %v5220, %v5232
    %v5239 = vmul.f32 %v5221, %v5233
    %v5240 = vmul.f32 %v5204, %v5234
    %v5241 = vmul.f32 %v5205, %v5235
    %v5242 = vmul.f32 %v5206, %v5236
    %v5243 = vmul.f32 %v5207, %v5237
    %v5244 = vmul.f32 %v5208, %v5238
    %v5245 = vmul.f32 %v5209, %v5239
    %v5246 = vmul.f32 %v5240, 0.5
    %v5247 = vmul.f32 %v5241, 0.5
    %v5248 = vmul.f32 %v5242, 0.5
    %v5249 = vmul.f32 %v5243, 0.5
    %v5250 = vmul.f32 %v5244, 0.5
    %v5251 = vmul.f32 %v5245, 0.5
    %v5252 = vtanh.pop %v5246
    %v5253 = vtanh.pop %v5247
    %v5254 = vtanh.pop %v5248
    %v5255 = vtanh.pop %v5249
    %v5256 = vtanh.pop %v5250
    %v5257 = vtanh.pop %v5251
    %v5258 = vmul.f32 %v5252, 0.5
    %v5259 = vmul.f32 %v5253, 0.5
    %v5260 = vmul.f32 %v5254, 0.5
    %v5261 = vmul.f32 %v5255, 0.5
    %v5262 = vmul.f32 %v5256, 0.5
    %v5263 = vmul.f32 %v5257, 0.5
    %v5264 = vadd.f32 %v5258, 0.5
    %v5265 = vadd.f32 %v5259, 0.5
    %v5266 = vadd.f32 %v5260, 0.5
    %v5267 = vadd.f32 %v5261, 0.5
    %v5268 = vadd.f32 %v5262, 0.5
    %v5269 = vadd.f32 %v5263, 0.5
    %v5270 = vld [vmem:[%s1267] sm:$0xff]
    %v5271 = vld [vmem:[%s1267 + $0x8] sm:$0xff]
    %v5272 = vld [vmem:[%s1267 + $0x10] sm:$0xff]
    %v5273 = vld [vmem:[%s1267 + $0x18] sm:$0xff]
    %v5274 = vld [vmem:[%s1267 + $0x20] sm:$0xff]
    %v5275 = vld [vmem:[%s1267 + $0x28] sm:$0xff]
    %v5276 = vmul.f32 %v4722, %v5264
    %v5277 = vmul.f32 %v4722, %v5265
    %v5278 = vmul.f32 %v4722, %v5266
    %v5279 = vmul.f32 %v4722, %v5267
    %v5280 = vmul.f32 %v4722, %v5268
    %v5281 = vmul.f32 %v4722, %v5269
    %v5282 = vmul.f32 %v5270, %v4732
    %v5283 = vmul.f32 %v5271, %v4732
    %v5284 = vmul.f32 %v5272, %v4732
    %v5285 = vmul.f32 %v5273, %v4732
    %v5286 = vmul.f32 %v5274, %v4732
    %v5287 = vmul.f32 %v5275, %v4732
    %v5288 = vadd.f32 %v4742, %v5282
    %v5289 = vadd.f32 %v4742, %v5283
    %v5290 = vadd.f32 %v4742, %v5284
    %v5291 = vadd.f32 %v4742, %v5285
    %v5292 = vadd.f32 %v4742, %v5286
    %v5293 = vadd.f32 %v4742, %v5287
    %v5294 = vadd.f32 %v5276, %v5288
    %v5295 = vadd.f32 %v5277, %v5289
    %v5296 = vadd.f32 %v5278, %v5290
    %v5297 = vadd.f32 %v5279, %v5291
    %v5298 = vadd.f32 %v5280, %v5292
    %v5299 = vadd.f32 %v5281, %v5293
    %v5300 = vadd.f32 %v4758, %v5270
    %v5301 = vadd.f32 %v4758, %v5271
    %v5302 = vadd.f32 %v4758, %v5272
    %v5303 = vadd.f32 %v4758, %v5273
    %v5304 = vadd.f32 %v4758, %v5274
    %v5305 = vadd.f32 %v4758, %v5275
    %v5306 = vrcp.pop %v5300
    %v5307 = vrcp.pop %v5301
    %v5308 = vrcp.pop %v5302
    %v5309 = vrcp.pop %v5303
    %v5310 = vrcp.pop %v5304
    %v5311 = vrcp.pop %v5305
    %v5312 = vmul.f32 %v5300, %v5306
    %v5313 = vmul.f32 %v5301, %v5307
    %v5314 = vmul.f32 %v5302, %v5308
    %v5315 = vmul.f32 %v5303, %v5309
    %v5316 = vmul.f32 %v5304, %v5310
    %v5317 = vmul.f32 %v5305, %v5311
    %v5318 = vsub.f32 2.0, %v5312
    %v5319 = vsub.f32 2.0, %v5313
    %v5320 = vsub.f32 2.0, %v5314
    %v5321 = vsub.f32 2.0, %v5315
    %v5322 = vsub.f32 2.0, %v5316
    %v5323 = vsub.f32 2.0, %v5317
    %v5324 = vmul.f32 %v5306, %v5318
    %v5325 = vmul.f32 %v5307, %v5319
    %v5326 = vmul.f32 %v5308, %v5320
    %v5327 = vmul.f32 %v5309, %v5321
    %v5328 = vmul.f32 %v5310, %v5322
    %v5329 = vmul.f32 %v5311, %v5323
    %v5330 = vmul.f32 %v5294, %v5324
    %v5331 = vmul.f32 %v5295, %v5325
    %v5332 = vmul.f32 %v5296, %v5326
    %v5333 = vmul.f32 %v5297, %v5327
    %v5334 = vmul.f32 %v5298, %v5328
    %v5335 = vmul.f32 %v5299, %v5329
    %v5336 = vmul.f32 %v5330, 0.5
    %v5337 = vmul.f32 %v5331, 0.5
    %v5338 = vmul.f32 %v5332, 0.5
    %v5339 = vmul.f32 %v5333, 0.5
    %v5340 = vmul.f32 %v5334, 0.5
    %v5341 = vmul.f32 %v5335, 0.5
    %v5342 = vtanh.pop %v5336
    %v5343 = vtanh.pop %v5337
    %v5344 = vtanh.pop %v5338
    %v5345 = vtanh.pop %v5339
    %v5346 = vtanh.pop %v5340
    %v5347 = vtanh.pop %v5341
    %v5348 = vmul.f32 %v5342, 0.5
    %v5349 = vmul.f32 %v5343, 0.5
    %v5350 = vmul.f32 %v5344, 0.5
    %v5351 = vmul.f32 %v5345, 0.5
    %v5352 = vmul.f32 %v5346, 0.5
    %v5353 = vmul.f32 %v5347, 0.5
    %v5354 = vadd.f32 %v5348, 0.5
    %v5355 = vadd.f32 %v5349, 0.5
    %v5356 = vadd.f32 %v5350, 0.5
    %v5357 = vadd.f32 %v5351, 0.5
    %v5358 = vadd.f32 %v5352, 0.5
    %v5359 = vadd.f32 %v5353, 0.5
    %v5360 = vld [vmem:[#allocation2] sm:$0xff]
    %v5361 = vld [vmem:[#allocation2 + $0x8] sm:$0xff]
    %v5362 = vld [vmem:[#allocation2 + $0x10] sm:$0xff]
    %v5363 = vld [vmem:[#allocation2 + $0x18] sm:$0xff]
    %v5364 = vld [vmem:[#allocation2 + $0x20] sm:$0xff]
    %v5365 = vld [vmem:[#allocation2 + $0x28] sm:$0xff]
    %v5366 = vmul.f32 %v4722, %v5354
    %v5367 = vmul.f32 %v4722, %v5355
    %v5368 = vmul.f32 %v4722, %v5356
    %v5369 = vmul.f32 %v4722, %v5357
    %v5370 = vmul.f32 %v4722, %v5358
    %v5371 = vmul.f32 %v4722, %v5359
    %v5372 = vmul.f32 %v5360, %v4732
    %v5373 = vmul.f32 %v5361, %v4732
    %v5374 = vmul.f32 %v5362, %v4732
    %v5375 = vmul.f32 %v5363, %v4732
    %v5376 = vmul.f32 %v5364, %v4732
    %v5377 = vmul.f32 %v5365, %v4732
    %v5378 = vadd.f32 %v4742, %v5372
    %v5379 = vadd.f32 %v4742, %v5373
    %v5380 = vadd.f32 %v4742, %v5374
    %v5381 = vadd.f32 %v4742, %v5375
    %v5382 = vadd.f32 %v4742, %v5376
    %v5383 = vadd.f32 %v4742, %v5377
    %v5384 = vadd.f32 %v5366, %v5378
    %v5385 = vadd.f32 %v5367, %v5379
    %v5386 = vadd.f32 %v5368, %v5380
    %v5387 = vadd.f32 %v5369, %v5381
    %v5388 = vadd.f32 %v5370, %v5382
    %v5389 = vadd.f32 %v5371, %v5383
    %v5390 = vadd.f32 %v4758, %v5360
    %v5391 = vadd.f32 %v4758, %v5361
    %v5392 = vadd.f32 %v4758, %v5362
    %v5393 = vadd.f32 %v4758, %v5363
    %v5394 = vadd.f32 %v4758, %v5364
    %v5395 = vadd.f32 %v4758, %v5365
    %v5396 = vrcp.pop %v5390
    %v5397 = vrcp.pop %v5391
    %v5398 = vrcp.pop %v5392
    %v5399 = vrcp.pop %v5393
    %v5400 = vrcp.pop %v5394
    %v5401 = vrcp.pop %v5395
    %v5402 = vmul.f32 %v5390, %v5396
    %v5403 = vmul.f32 %v5391, %v5397
    %v5404 = vmul.f32 %v5392, %v5398
    %v5405 = vmul.f32 %v5393, %v5399
    %v5406 = vmul.f32 %v5394, %v5400
    %v5407 = vmul.f32 %v5395, %v5401
    %v5408 = vsub.f32 2.0, %v5402
    %v5409 = vsub.f32 2.0, %v5403
    %v5410 = vsub.f32 2.0, %v5404
    %v5411 = vsub.f32 2.0, %v5405
    %v5412 = vsub.f32 2.0, %v5406
    %v5413 = vsub.f32 2.0, %v5407
    %v5414 = vmul.f32 %v5396, %v5408
    %v5415 = vmul.f32 %v5397, %v5409
    %v5416 = vmul.f32 %v5398, %v5410
    %v5417 = vmul.f32 %v5399, %v5411
    %v5418 = vmul.f32 %v5400, %v5412
    %v5419 = vmul.f32 %v5401, %v5413
    %v5420 = vmul.f32 %v5384, %v5414
    %v5421 = vmul.f32 %v5385, %v5415
    %v5422 = vmul.f32 %v5386, %v5416
    %v5423 = vmul.f32 %v5387, %v5417
    %v5424 = vmul.f32 %v5388, %v5418
    %v5425 = vmul.f32 %v5389, %v5419
    %v5426 = vmul.f32 %v5420, 0.5
    %v5427 = vmul.f32 %v5421, 0.5
    %v5428 = vmul.f32 %v5422, 0.5
    %v5429 = vmul.f32 %v5423, 0.5
    %v5430 = vmul.f32 %v5424, 0.5
    %v5431 = vmul.f32 %v5425, 0.5
    %v5432 = vtanh.pop %v5426
    %v5433 = vtanh.pop %v5427
    %v5434 = vtanh.pop %v5428
    %v5435 = vtanh.pop %v5429
    %v5436 = vtanh.pop %v5430
    %v5437 = vtanh.pop %v5431
    %v5438 = vmul.f32 %v5432, 0.5
    %v5439 = vmul.f32 %v5433, 0.5
    %v5440 = vmul.f32 %v5434, 0.5
    %v5441 = vmul.f32 %v5435, 0.5
    %v5442 = vmul.f32 %v5436, 0.5
    %v5443 = vmul.f32 %v5437, 0.5
    %v5444 = vadd.f32 %v5438, 0.5
    %v5445 = vadd.f32 %v5439, 0.5
    %v5446 = vadd.f32 %v5440, 0.5
    %v5447 = vadd.f32 %v5441, 0.5
    %v5448 = vadd.f32 %v5442, 0.5
    %v5449 = vadd.f32 %v5443, 0.5
    %5450 = vst [vmem:[#allocation9] sm:$0xff] %v5444
    %5451 = vst [vmem:[#allocation9 + $0x8] sm:$0xff] %v5445
    %5452 = vst [vmem:[#allocation9 + $0x10] sm:$0xff] %v5446
    %5453 = vst [vmem:[#allocation9 + $0x18] sm:$0xff] %v5447
    %5454 = vst [vmem:[#allocation9 + $0x20] sm:$0xff] %v5448
    %5455 = vst [vmem:[#allocation9 + $0x28] sm:$0xff] %v5449
    // Predicated region
    $region30: #{continuous_fully_connected_forward.1} parent=1 // pred_check
      _
    $region31: #{continuous_fully_connected_forward.1} parent=1 // pred_check_branch
      %5457 = sbr.rel (0) target = $region33
    $region32: #{continuous_fully_connected_forward.1} parent=1 // pred_region
      %s5459 = ssub.s32 768, 768
      %5460 = vsyncadd [#allocation5], %s5459
      %s5462 = sshll.u32 [#allocation9], 4
      %s5463 = int_to_ptr.vmem [resolvable:$true] %s5462
      %5465 = dma.vmem_to_hbm [thread:$0]  %s5463, 768, %s3, [#allocation5]
    $region33: #{continuous_fully_connected_forward.1} parent=1 // pred_fallthru
      _
    // Predicated region
    $region34: #{continuous_fully_connected_forward.1} parent=1 // pred_check
      _
    $region35: #{continuous_fully_connected_forward.1} parent=1 // pred_check_branch
      %5467 = sbr.rel (0) target = $region37
    $region36: #{continuous_fully_connected_forward.1} parent=1 // pred_region
      %5468 = dma.done [#allocation5], 768
    $region37: #{continuous_fully_connected_forward.1} parent=1 // pred_fallthru
      _
    %5469 = vsyncpa [#allocation4], 1
    %5470 = vsyncpa [#allocation7], 1
    %5471 = vsyncpa [#allocation5], 1

</llo_original>
